<compile_context>
chip_gen: v6e
topology: v6e:2x2x1
jax: 0.10.0
libtpu: 0.0.40
codegen_flags: <defaults>
</compile_context>

<pallas_src>
import functools

import jax
import jax.numpy as jnp
from jax.experimental import pallas as pl
from jax.experimental.pallas import tpu as pltpu


# --------------------------------------------------------------------------- #
# Kernel
# --------------------------------------------------------------------------- #
def _mha_kernel(q_ref, k_ref, v_ref,
                wqkv_ref, bqkv_ref, wo_ref, bo_ref,
                o_ref, *, n_heads):
    Bt, L, E = q_ref.shape
    hd = E // n_heads
    R = Bt * L
    mxu_dtype = wqkv_ref.dtype            # bf16: 2x MXU throughput, f32 accum

    # ---- input projections: (R, E) x (E, E) per stream; scale folded in Wq --
    def project(x_ref, idx):
        x = x_ref[...].reshape(R, E).astype(mxu_dtype)
        y = jnp.dot(x, wqkv_ref[idx],                       # (E, E) bf16 slab
                    preferred_element_type=jnp.float32)
        y = y + bqkv_ref[idx]                                # (1, E) f32 bias
        return y.reshape(Bt, L, E).astype(mxu_dtype)

    qp = project(q_ref, 0)                # query proj, pre-scaled by 1/sqrt(hd)
    kp = project(k_ref, 1)
    vp = project(v_ref, 2)

    wo = wo_ref[...]                      # (E, E) bf16 (pre-transposed)

    # ---- per-head attention folded straight into the output projection ------
    # Lane-dense (R, E) f32 accumulator; each head contributes
    # (R, hd) x (hd, E) -- no concat buffer, no sub-128-lane stores.
    # TODO(synk): flash-style online-softmax K/V tiling to bound live (L, L)
    # scores (needed for v7x at large L; VMEM budget shrinks block_b today).
    acc = jnp.zeros((R, E), jnp.float32)
    for h in range(n_heads):
        lo = h * hd
        qh = qp[:, :, lo:lo + hd]         # (Bt, L, hd) bf16
        kh = kp[:, :, lo:lo + hd]
        vh = vp[:, :, lo:lo + hd]

        s = jnp.einsum("bqd,bkd->bqk", qh, kh,
                       preferred_element_type=jnp.float32)   # (Bt, L, L) f32
        s = s - jnp.max(s, axis=-1, keepdims=True)
        p = jnp.exp(s)                                        # f32 softmax
        p = p * pl.reciprocal(jnp.sum(p, axis=-1, keepdims=True), approx=False)
        oh = jnp.einsum("bqk,bkd->bqd", p.astype(mxu_dtype), vh,
                        preferred_element_type=jnp.float32)   # (Bt, L, hd)

        acc = acc + jnp.dot(oh.reshape(R, hd).astype(mxu_dtype),
                            wo[lo:lo + hd, :],                # sublane row slice
                            preferred_element_type=jnp.float32)

    out = acc + bo_ref[...]                                   # (R, E) + (1, E)
    o_ref[...] = out.reshape(Bt, L, E).astype(o_ref.dtype)


# --------------------------------------------------------------------------- #
# One-time weight prep (off the hot path)
# --------------------------------------------------------------------------- #
def prepare_params(params, *, n_heads, mxu_dtype=jnp.bfloat16):
    """Transpose, stack Q/K/V weights, fold 1/sqrt(head_dim) into Q, cast to bf16."""
    E = params["out_proj_weight"].shape[0]
    hd = E // n_heads
    scale = hd ** -0.5
    wq, wk, wv = jnp.split(params["in_proj_weight"], 3, axis=0)   # each (E, E)
    bq, bk, bv = jnp.split(params["in_proj_bias"], 3, axis=0)     # each (E,)
    # (3, E, E): leading-dim indexed inside the kernel (no lane-axis slicing).
    wqkv_T = jnp.stack([wq.T * scale, wk.T, wv.T], axis=0).astype(mxu_dtype)
    b_qkv = jnp.stack([bq * scale, bk, bv], axis=0).reshape(3, 1, E).astype(jnp.float32)
    wo_T = params["out_proj_weight"].T.astype(mxu_dtype)          # (E, E)
    bo = params["out_proj_bias"].reshape(1, E).astype(jnp.float32)
    return {"wqkv_T": wqkv_T, "b_qkv": b_qkv, "wo_T": wo_T, "bo": bo}


# --------------------------------------------------------------------------- #
# VMEM-budget-driven tiling
# --------------------------------------------------------------------------- #
def _vmem_budget_bytes():
    """~75% of physical VMEM: ~96 MiB on v5e/v6e (128 MiB), ~48 MiB on v7x (64 MiB)."""
    try:
        phys = pltpu.get_tpu_info().vmem_capacity_bytes
    except Exception:
        phys = 64 * 1024 * 1024          # conservative fallback (v7x per-core)
    return max(32 * 1024 * 1024, int(phys) * 3 // 4)


def _weight_bytes(E, single_buf_weights):
    wb = 3 * E * E * 2 + 3 * E * 4 + E * E * 2 + E * 4   # bf16 weights + f32 biases
    return wb if single_buf_weights else 2 * wb


def _block_footprint(block_b, L, E, in_bytes, out_bytes, single_buf_weights):
    R = block_b * L
    io = 2 * 3 * block_b * L * E * in_bytes           # q/k/v, double-buffered
    io += 2 * block_b * L * E * out_bytes             # output, double-buffered
    # live compute values: bf16 qp/kp/vp, one head's f32 scores + bf16 probs,
    # f32 output accumulator (flash tiling would remove the L*L terms).
    live = 3 * R * E * 2 + block_b * L * L * 4 + block_b * L * L * 2 + R * E * 4
    return io + live + _weight_bytes(E, single_buf_weights)


def _pick_block_b(B, L, E, in_bytes, out_bytes, budget, single_buf_weights):
    divisors = [d for d in range(B, 0, -1) if B % d == 0]
    feasible = [d for d in divisors
                if _block_footprint(d, L, E, in_bytes, out_bytes,
                                    single_buf_weights) <= budget]
    if not feasible:
        return 1                                       # best effort (see TODO: flash tiling)
    # Prefer the largest block that still leaves >=2 grid steps (keeps both v7x
    # TensorCores fed and gives the pipeline DMA/compute overlap), unless going
    # single-step is the only way to reach an MXU-filling M dimension (R>=256).
    multi = [d for d in feasible if B // d >= 2]
    if multi:
        best = multi[0]
        if best * L < 256 and feasible[0] * L >= 256:
            best = feasible[0]
        return best
    return feasible[0]


# --------------------------------------------------------------------------- #
# pallas_call wrapper
# --------------------------------------------------------------------------- #
def _build_call(B, L, E, block_b, n_heads, out_dtype, single_buf_weights, vmem_limit):
    seq_spec = pl.BlockSpec((block_b, L, E), lambda i: (i, 0, 0))

    def const_spec(shape):
        index_map = lambda i, _n=len(shape): (0,) * _n
        if single_buf_weights:
            # Grid-invariant operand: one VMEM buffer instead of the default two.
            return pl.BlockSpec(shape, index_map, pipeline_mode=pl.Buffered(1))
        return pl.BlockSpec(shape, index_map)

    kernel = functools.partial(_mha_kernel, n_heads=n_heads)
    return pl.pallas_call(
        kernel,
        out_shape=jax.ShapeDtypeStruct((B, L, E), out_dtype),
        grid_spec=pltpu.PrefetchScalarGridSpec(
            num_scalar_prefetch=0,
            grid=(B // block_b,),
            in_specs=[seq_spec, seq_spec, seq_spec,
                      const_spec((3, E, E)), const_spec((3, 1, E)),
                      const_spec((E, E)), const_spec((1, E))],
            out_specs=seq_spec,
        ),
        compiler_params=pltpu.CompilerParams(
            dimension_semantics=("parallel",),
            vmem_limit_bytes=vmem_limit),
    )


def mha_pallas(k, v, q, prepared, *, n_heads, block_b=None):
    """Multi-head attention. k, v, q: (B, L, E) = (key, value, query). Returns (B, L, E).

    For best performance: E % 128 == 0 (lane-dense output stores), L a multiple
    of 16, and bf16 q/k/v if the upstream producer can emit them.
    """
    B, L, E = q.shape
    assert E % n_heads == 0
    assert k.shape == v.shape == q.shape
    budget = _vmem_budget_bytes()
    in_bytes = jnp.dtype(q.dtype).itemsize
    out_bytes = in_bytes

    last_err = None
    for single_buf_weights in (True, False):
        bb = block_b
        if bb is None:
            bb = _pick_block_b(B, L, E, in_bytes, out_bytes, budget, single_buf_weights)
        assert B % bb == 0
        try:
            fn = _build_call(B, L, E, bb, n_heads, q.dtype, single_buf_weights, budget)
            return fn(q, k, v, prepared["wqkv_T"], prepared["b_qkv"],
                      prepared["wo_T"], prepared["bo"])
        except Exception as e:   # e.g. pl.Buffered(1) unsupported on this jax version
            last_err = e
    raise last_err


# --------------------------------------------------------------------------- #
# Pure-JAX f32 reference (mirrors torch.nn.MultiheadAttention forward)
# --------------------------------------------------------------------------- #
def mha_reference(k, v, q, params, *, n_heads):
    B, L, E = q.shape
    hd = E // n_heads
    wq, wk, wv = jnp.split(params["in_proj_weight"], 3, axis=0)
    bq, bk, bv = jnp.split(params["in_proj_bias"], 3, axis=0)
    wo = params["out_proj_weight"]
    bo = params["out_proj_bias"]

    qp = q @ wq.T + bq
    kp = k @ wk.T + bk
    vp = v @ wv.T + bv

    def split(x):  # (B, L, E) -> (B, H, L, hd)
        return x.reshape(B, L, n_heads, hd).transpose(0, 2, 1, 3)

    qh, kh, vh = split(qp), split(kp), split(vp)
    s = jnp.einsum("bhqd,bhkd->bhqk", qh, kh) / (hd ** 0.5)
    w = jax.nn.softmax(s, axis=-1)
    o = jnp.einsum("bhqk,bhkd->bhqd", w, vh)
    o = o.transpose(0, 2, 1, 3).reshape(B, L, E)
    return o @ wo.T + bo


def init_params(key, hidden_dim):
    k1, k2, k3, k4 = jax.random.split(key, 4)
    std = hidden_dim ** (-0.5)
    return {
        "in_proj_weight": jax.random.normal(k1, (3 * hidden_dim, hidden_dim),
                                            jnp.float32) * std,
        "in_proj_bias": jax.random.normal(k2, (3 * hidden_dim,), jnp.float32) * 0.02,
        "out_proj_weight": jax.random.normal(k3, (hidden_dim, hidden_dim),
                                             jnp.float32) * std,
        "out_proj_bias": jax.random.normal(k4, (hidden_dim,), jnp.float32) * 0.02,
    }


if __name__ == "__main__":
    B, L, E, H = 2, 8, 32, 4   # batch, seq, hidden_dim, n_heads

    key = jax.random.PRNGKey(0)
    kk, kv_in, kq, kp = jax.random.split(key, 4)
    k_in = jax.random.normal(kk, (B, L, E), jnp.float32)
    v_in = jax.random.normal(kv_in, (B, L, E), jnp.float32)
    q_in = jax.random.normal(kq, (B, L, E), jnp.float32)
    params = init_params(kp, E)

    prepared = prepare_params(params, n_heads=H)   # one-time, off the hot path
    out = mha_pallas(k_in, v_in, q_in, prepared, n_heads=H)
    out = jax.block_until_ready(out)

    ref = mha_reference(k_in, v_in, q_in, params, n_heads=H)
    assert out.shape == (B, L, E)
    err = jnp.max(jnp.abs(out - ref))
    # bf16 MXU operands (f32 accumulation) -> relaxed tolerance vs. the pure-f32
    # reference (deliberate accuracy/throughput trade-off, documented above).
    assert jnp.allclose(out, ref, atol=3e-2, rtol=3e-2), f"max abs err {err}"

    print("KERNEL_OK")
</pallas_src>

<mosaic_0001>
module attributes {stable_mosaic.version = 11 : i64} {
  func.func @_mha_kernel(%arg0: i32, %arg1: memref<1x8x32xf32, #tpu.memory_space<vmem>>, %arg2: memref<1x8x32xf32, #tpu.memory_space<vmem>>, %arg3: memref<1x8x32xf32, #tpu.memory_space<vmem>>, %arg4: memref<3x32x32xbf16, #tpu.memory_space<vmem>>, %arg5: memref<3x1x32xf32, #tpu.memory_space<vmem>>, %arg6: memref<32x32xbf16, #tpu.memory_space<vmem>>, %arg7: memref<1x32xf32, #tpu.memory_space<vmem>>, %arg8: memref<1x8x32xf32, #tpu.memory_space<vmem>>) attributes {dimension_semantics = [#tpu.dimension_semantics<parallel>], iteration_bounds = array<i64: 2>, scalar_prefetch = 0 : i64, scratch_operands = 0 : i64, tpu.core_type = #tpu.core_type<tc>, window_params = [{transform_indices = @transform_0, window_bounds = array<i64: 1, 8, 32>}, {transform_indices = @transform_1, window_bounds = array<i64: 1, 8, 32>}, {transform_indices = @transform_2, window_bounds = array<i64: 1, 8, 32>}, {pipeline_mode = #tpu.pipeline_mode<synchronous>, transform_indices = @transform_3, window_bounds = array<i64: 3, 32, 32>}, {pipeline_mode = #tpu.pipeline_mode<synchronous>, transform_indices = @transform_4, window_bounds = array<i64: 3, 1, 32>}, {pipeline_mode = #tpu.pipeline_mode<synchronous>, transform_indices = @transform_5, window_bounds = array<i64: 32, 32>}, {pipeline_mode = #tpu.pipeline_mode<synchronous>, transform_indices = @transform_6, window_bounds = array<i64: 1, 32>}, {transform_indices = @transform_7, window_bounds = array<i64: 1, 8, 32>}]} {
    %c0 = arith.constant 0 : index
    %c0_0 = arith.constant 0 : index
    %c0_1 = arith.constant 0 : index
    %0 = vector.load %arg1[%c0, %c0_0, %c0_1] : memref<1x8x32xf32, #tpu.memory_space<vmem>>, vector<1x8x32xf32>
    %1 = vector.shape_cast %0 : vector<1x8x32xf32> to vector<8x32xf32>
    %2 = arith.truncf %1 : vector<8x32xf32> to vector<8x32xbf16>
    %c0_2 = arith.constant 0 : index
    %c0_3 = arith.constant 0 : index
    %c0_4 = arith.constant 0 : index
    %3 = vector.load %arg4[%c0_2, %c0_3, %c0_4] : memref<3x32x32xbf16, #tpu.memory_space<vmem>>, vector<1x32x32xbf16>
    %4 = vector.shape_cast %3 : vector<1x32x32xbf16> to vector<32x32xbf16>
    %cst = arith.constant dense<0.000000e+00> : vector<8x32xf32>
    %5 = tpu.matmul %2, %4, %cst {dimension_numbers = #tpu.dot_dimension_numbers<[1], [0], [0], [1], [0, 0, 1, 1], [], []>} : vector<8x32xbf16>, vector<32x32xbf16>, vector<8x32xf32> -> vector<8x32xf32>
    %c0_5 = arith.constant 0 : index
    %c0_6 = arith.constant 0 : index
    %c0_7 = arith.constant 0 : index
    %6 = vector.load %arg5[%c0_5, %c0_6, %c0_7] : memref<3x1x32xf32, #tpu.memory_space<vmem>>, vector<1x1x32xf32>
    %7 = vector.shape_cast %6 : vector<1x1x32xf32> to vector<1x32xf32>
    %8 = vector.broadcast %7 : vector<1x32xf32> to vector<8x32xf32>
    %9 = arith.addf %5, %8 : vector<8x32xf32>
    %10 = vector.shape_cast %9 : vector<8x32xf32> to vector<1x8x32xf32>
    %11 = arith.truncf %10 : vector<1x8x32xf32> to vector<1x8x32xbf16>
    %c0_8 = arith.constant 0 : index
    %c0_9 = arith.constant 0 : index
    %c0_10 = arith.constant 0 : index
    %12 = vector.load %arg2[%c0_8, %c0_9, %c0_10] : memref<1x8x32xf32, #tpu.memory_space<vmem>>, vector<1x8x32xf32>
    %13 = vector.shape_cast %12 : vector<1x8x32xf32> to vector<8x32xf32>
    %14 = arith.truncf %13 : vector<8x32xf32> to vector<8x32xbf16>
    %c1 = arith.constant 1 : index
    %c0_11 = arith.constant 0 : index
    %c0_12 = arith.constant 0 : index
    %15 = vector.load %arg4[%c1, %c0_11, %c0_12] : memref<3x32x32xbf16, #tpu.memory_space<vmem>>, vector<1x32x32xbf16>
    %16 = vector.shape_cast %15 : vector<1x32x32xbf16> to vector<32x32xbf16>
    %cst_13 = arith.constant dense<0.000000e+00> : vector<8x32xf32>
    %17 = tpu.matmul %14, %16, %cst_13 {dimension_numbers = #tpu.dot_dimension_numbers<[1], [0], [0], [1], [0, 0, 1, 1], [], []>} : vector<8x32xbf16>, vector<32x32xbf16>, vector<8x32xf32> -> vector<8x32xf32>
    %c1_14 = arith.constant 1 : index
    %c0_15 = arith.constant 0 : index
    %c0_16 = arith.constant 0 : index
    %18 = vector.load %arg5[%c1_14, %c0_15, %c0_16] : memref<3x1x32xf32, #tpu.memory_space<vmem>>, vector<1x1x32xf32>
    %19 = vector.shape_cast %18 : vector<1x1x32xf32> to vector<1x32xf32>
    %20 = vector.broadcast %19 : vector<1x32xf32> to vector<8x32xf32>
    %21 = arith.addf %17, %20 : vector<8x32xf32>
    %22 = vector.shape_cast %21 : vector<8x32xf32> to vector<1x8x32xf32>
    %23 = arith.truncf %22 : vector<1x8x32xf32> to vector<1x8x32xbf16>
    %c0_17 = arith.constant 0 : index
    %c0_18 = arith.constant 0 : index
    %c0_19 = arith.constant 0 : index
    %24 = vector.load %arg3[%c0_17, %c0_18, %c0_19] : memref<1x8x32xf32, #tpu.memory_space<vmem>>, vector<1x8x32xf32>
    %25 = vector.shape_cast %24 : vector<1x8x32xf32> to vector<8x32xf32>
    %26 = arith.truncf %25 : vector<8x32xf32> to vector<8x32xbf16>
    %c2 = arith.constant 2 : index
    %c0_20 = arith.constant 0 : index
    %c0_21 = arith.constant 0 : index
    %27 = vector.load %arg4[%c2, %c0_20, %c0_21] : memref<3x32x32xbf16, #tpu.memory_space<vmem>>, vector<1x32x32xbf16>
    %28 = vector.shape_cast %27 : vector<1x32x32xbf16> to vector<32x32xbf16>
    %cst_22 = arith.constant dense<0.000000e+00> : vector<8x32xf32>
    %29 = tpu.matmul %26, %28, %cst_22 {dimension_numbers = #tpu.dot_dimension_numbers<[1], [0], [0], [1], [0, 0, 1, 1], [], []>} : vector<8x32xbf16>, vector<32x32xbf16>, vector<8x32xf32> -> vector<8x32xf32>
    %c2_23 = arith.constant 2 : index
    %c0_24 = arith.constant 0 : index
    %c0_25 = arith.constant 0 : index
    %30 = vector.load %arg5[%c2_23, %c0_24, %c0_25] : memref<3x1x32xf32, #tpu.memory_space<vmem>>, vector<1x1x32xf32>
    %31 = vector.shape_cast %30 : vector<1x1x32xf32> to vector<1x32xf32>
    %32 = vector.broadcast %31 : vector<1x32xf32> to vector<8x32xf32>
    %33 = arith.addf %29, %32 : vector<8x32xf32>
    %34 = vector.shape_cast %33 : vector<8x32xf32> to vector<1x8x32xf32>
    %35 = arith.truncf %34 : vector<1x8x32xf32> to vector<1x8x32xbf16>
    %c0_26 = arith.constant 0 : index
    %c0_27 = arith.constant 0 : index
    %36 = vector.load %arg6[%c0_26, %c0_27] : memref<32x32xbf16, #tpu.memory_space<vmem>>, vector<32x32xbf16>
    %cst_28 = arith.constant 0.000000e+00 : f32
    %37 = vector.broadcast %cst_28 : f32 to vector<8x32xf32>
    %38 = vector.extract_strided_slice %11 {offsets = [0, 0, 0], sizes = [1, 8, 8], strides = [1, 1, 1]} : vector<1x8x32xbf16> to vector<1x8x8xbf16>
    %39 = vector.extract_strided_slice %23 {offsets = [0, 0, 0], sizes = [1, 8, 8], strides = [1, 1, 1]} : vector<1x8x32xbf16> to vector<1x8x8xbf16>
    %40 = vector.extract_strided_slice %35 {offsets = [0, 0, 0], sizes = [1, 8, 8], strides = [1, 1, 1]} : vector<1x8x32xbf16> to vector<1x8x8xbf16>
    "tpu.trace_start"() <{level = 10 : i32, message = "bqd,bkd->bqk"}> : () -> ()
    %cst_29 = arith.constant dense<0.000000e+00> : vector<1x8x8xf32>
    %41 = tpu.matmul %38, %39, %cst_29 {dimension_numbers = #tpu.dot_dimension_numbers<[2], [2], [1], [1], [0, 0, 0, 1, 1, 1], [0], [0]>} : vector<1x8x8xbf16>, vector<1x8x8xbf16>, vector<1x8x8xf32> -> vector<1x8x8xf32>
    "tpu.trace_stop"() : () -> ()
    %cst_30 = arith.constant dense<0xFF800000> : vector<1x8xf32>
    %42 = vector.multi_reduction <maximumf>, %41, %cst_30 [2] : vector<1x8x8xf32> to vector<1x8xf32>
    %43 = vector.shape_cast %42 : vector<1x8xf32> to vector<1x8x1xf32>
    %44 = vector.broadcast %43 : vector<1x8x1xf32> to vector<1x8x8xf32>
    %45 = arith.subf %41, %44 : vector<1x8x8xf32>
    %46 = math.exp %45 : vector<1x8x8xf32>
    %cst_31 = arith.constant dense<0.000000e+00> : vector<1x8xf32>
    %47 = vector.multi_reduction <add>, %46, %cst_31 [2] : vector<1x8x8xf32> to vector<1x8xf32>
    %48 = vector.shape_cast %47 : vector<1x8xf32> to vector<1x8x1xf32>
    %49 = tpu.reciprocal %48 : vector<1x8x1xf32> -> vector<1x8x1xf32>
    %50 = vector.broadcast %49 : vector<1x8x1xf32> to vector<1x8x8xf32>
    %51 = arith.mulf %46, %50 : vector<1x8x8xf32>
    %52 = arith.truncf %51 : vector<1x8x8xf32> to vector<1x8x8xbf16>
    "tpu.trace_start"() <{level = 10 : i32, message = "bqk,bkd->bqd"}> : () -> ()
    %cst_32 = arith.constant dense<0.000000e+00> : vector<1x8x8xf32>
    %53 = tpu.matmul %52, %40, %cst_32 {dimension_numbers = #tpu.dot_dimension_numbers<[2], [1], [1], [2], [0, 0, 0, 1, 1, 2], [0], [0]>} : vector<1x8x8xbf16>, vector<1x8x8xbf16>, vector<1x8x8xf32> -> vector<1x8x8xf32>
    "tpu.trace_stop"() : () -> ()
    %54 = vector.shape_cast %53 : vector<1x8x8xf32> to vector<8x8xf32>
    %55 = arith.truncf %54 : vector<8x8xf32> to vector<8x8xbf16>
    %56 = vector.extract_strided_slice %36 {offsets = [0, 0], sizes = [8, 32], strides = [1, 1]} : vector<32x32xbf16> to vector<8x32xbf16>
    %cst_33 = arith.constant dense<0.000000e+00> : vector<8x32xf32>
    %57 = tpu.matmul %55, %56, %cst_33 {dimension_numbers = #tpu.dot_dimension_numbers<[1], [0], [0], [1], [0, 0, 1, 1], [], []>} : vector<8x8xbf16>, vector<8x32xbf16>, vector<8x32xf32> -> vector<8x32xf32>
    %58 = arith.addf %37, %57 : vector<8x32xf32>
    %59 = vector.extract_strided_slice %11 {offsets = [0, 0, 8], sizes = [1, 8, 8], strides = [1, 1, 1]} : vector<1x8x32xbf16> to vector<1x8x8xbf16>
    %60 = vector.extract_strided_slice %23 {offsets = [0, 0, 8], sizes = [1, 8, 8], strides = [1, 1, 1]} : vector<1x8x32xbf16> to vector<1x8x8xbf16>
    %61 = vector.extract_strided_slice %35 {offsets = [0, 0, 8], sizes = [1, 8, 8], strides = [1, 1, 1]} : vector<1x8x32xbf16> to vector<1x8x8xbf16>
    "tpu.trace_start"() <{level = 10 : i32, message = "bqd,bkd->bqk"}> : () -> ()
    %cst_34 = arith.constant dense<0.000000e+00> : vector<1x8x8xf32>
    %62 = tpu.matmul %59, %60, %cst_34 {dimension_numbers = #tpu.dot_dimension_numbers<[2], [2], [1], [1], [0, 0, 0, 1, 1, 1], [0], [0]>} : vector<1x8x8xbf16>, vector<1x8x8xbf16>, vector<1x8x8xf32> -> vector<1x8x8xf32>
    "tpu.trace_stop"() : () -> ()
    %cst_35 = arith.constant dense<0xFF800000> : vector<1x8xf32>
    %63 = vector.multi_reduction <maximumf>, %62, %cst_35 [2] : vector<1x8x8xf32> to vector<1x8xf32>
    %64 = vector.shape_cast %63 : vector<1x8xf32> to vector<1x8x1xf32>
    %65 = vector.broadcast %64 : vector<1x8x1xf32> to vector<1x8x8xf32>
    %66 = arith.subf %62, %65 : vector<1x8x8xf32>
    %67 = math.exp %66 : vector<1x8x8xf32>
    %cst_36 = arith.constant dense<0.000000e+00> : vector<1x8xf32>
    %68 = vector.multi_reduction <add>, %67, %cst_36 [2] : vector<1x8x8xf32> to vector<1x8xf32>
    %69 = vector.shape_cast %68 : vector<1x8xf32> to vector<1x8x1xf32>
    %70 = tpu.reciprocal %69 : vector<1x8x1xf32> -> vector<1x8x1xf32>
    %71 = vector.broadcast %70 : vector<1x8x1xf32> to vector<1x8x8xf32>
    %72 = arith.mulf %67, %71 : vector<1x8x8xf32>
    %73 = arith.truncf %72 : vector<1x8x8xf32> to vector<1x8x8xbf16>
    "tpu.trace_start"() <{level = 10 : i32, message = "bqk,bkd->bqd"}> : () -> ()
    %cst_37 = arith.constant dense<0.000000e+00> : vector<1x8x8xf32>
    %74 = tpu.matmul %73, %61, %cst_37 {dimension_numbers = #tpu.dot_dimension_numbers<[2], [1], [1], [2], [0, 0, 0, 1, 1, 2], [0], [0]>} : vector<1x8x8xbf16>, vector<1x8x8xbf16>, vector<1x8x8xf32> -> vector<1x8x8xf32>
    "tpu.trace_stop"() : () -> ()
    %75 = vector.shape_cast %74 : vector<1x8x8xf32> to vector<8x8xf32>
    %76 = arith.truncf %75 : vector<8x8xf32> to vector<8x8xbf16>
    %77 = vector.extract_strided_slice %36 {offsets = [8, 0], sizes = [8, 32], strides = [1, 1]} : vector<32x32xbf16> to vector<8x32xbf16>
    %cst_38 = arith.constant dense<0.000000e+00> : vector<8x32xf32>
    %78 = tpu.matmul %76, %77, %cst_38 {dimension_numbers = #tpu.dot_dimension_numbers<[1], [0], [0], [1], [0, 0, 1, 1], [], []>} : vector<8x8xbf16>, vector<8x32xbf16>, vector<8x32xf32> -> vector<8x32xf32>
    %79 = arith.addf %58, %78 : vector<8x32xf32>
    %80 = vector.extract_strided_slice %11 {offsets = [0, 0, 16], sizes = [1, 8, 8], strides = [1, 1, 1]} : vector<1x8x32xbf16> to vector<1x8x8xbf16>
    %81 = vector.extract_strided_slice %23 {offsets = [0, 0, 16], sizes = [1, 8, 8], strides = [1, 1, 1]} : vector<1x8x32xbf16> to vector<1x8x8xbf16>
    %82 = vector.extract_strided_slice %35 {offsets = [0, 0, 16], sizes = [1, 8, 8], strides = [1, 1, 1]} : vector<1x8x32xbf16> to vector<1x8x8xbf16>
    "tpu.trace_start"() <{level = 10 : i32, message = "bqd,bkd->bqk"}> : () -> ()
    %cst_39 = arith.constant dense<0.000000e+00> : vector<1x8x8xf32>
    %83 = tpu.matmul %80, %81, %cst_39 {dimension_numbers = #tpu.dot_dimension_numbers<[2], [2], [1], [1], [0, 0, 0, 1, 1, 1], [0], [0]>} : vector<1x8x8xbf16>, vector<1x8x8xbf16>, vector<1x8x8xf32> -> vector<1x8x8xf32>
    "tpu.trace_stop"() : () -> ()
    %cst_40 = arith.constant dense<0xFF800000> : vector<1x8xf32>
    %84 = vector.multi_reduction <maximumf>, %83, %cst_40 [2] : vector<1x8x8xf32> to vector<1x8xf32>
    %85 = vector.shape_cast %84 : vector<1x8xf32> to vector<1x8x1xf32>
    %86 = vector.broadcast %85 : vector<1x8x1xf32> to vector<1x8x8xf32>
    %87 = arith.subf %83, %86 : vector<1x8x8xf32>
    %88 = math.exp %87 : vector<1x8x8xf32>
    %cst_41 = arith.constant dense<0.000000e+00> : vector<1x8xf32>
    %89 = vector.multi_reduction <add>, %88, %cst_41 [2] : vector<1x8x8xf32> to vector<1x8xf32>
    %90 = vector.shape_cast %89 : vector<1x8xf32> to vector<1x8x1xf32>
    %91 = tpu.reciprocal %90 : vector<1x8x1xf32> -> vector<1x8x1xf32>
    %92 = vector.broadcast %91 : vector<1x8x1xf32> to vector<1x8x8xf32>
    %93 = arith.mulf %88, %92 : vector<1x8x8xf32>
    %94 = arith.truncf %93 : vector<1x8x8xf32> to vector<1x8x8xbf16>
    "tpu.trace_start"() <{level = 10 : i32, message = "bqk,bkd->bqd"}> : () -> ()
    %cst_42 = arith.constant dense<0.000000e+00> : vector<1x8x8xf32>
    %95 = tpu.matmul %94, %82, %cst_42 {dimension_numbers = #tpu.dot_dimension_numbers<[2], [1], [1], [2], [0, 0, 0, 1, 1, 2], [0], [0]>} : vector<1x8x8xbf16>, vector<1x8x8xbf16>, vector<1x8x8xf32> -> vector<1x8x8xf32>
    "tpu.trace_stop"() : () -> ()
    %96 = vector.shape_cast %95 : vector<1x8x8xf32> to vector<8x8xf32>
    %97 = arith.truncf %96 : vector<8x8xf32> to vector<8x8xbf16>
    %98 = vector.extract_strided_slice %36 {offsets = [16, 0], sizes = [8, 32], strides = [1, 1]} : vector<32x32xbf16> to vector<8x32xbf16>
    %cst_43 = arith.constant dense<0.000000e+00> : vector<8x32xf32>
    %99 = tpu.matmul %97, %98, %cst_43 {dimension_numbers = #tpu.dot_dimension_numbers<[1], [0], [0], [1], [0, 0, 1, 1], [], []>} : vector<8x8xbf16>, vector<8x32xbf16>, vector<8x32xf32> -> vector<8x32xf32>
    %100 = arith.addf %79, %99 : vector<8x32xf32>
    %101 = vector.extract_strided_slice %11 {offsets = [0, 0, 24], sizes = [1, 8, 8], strides = [1, 1, 1]} : vector<1x8x32xbf16> to vector<1x8x8xbf16>
    %102 = vector.extract_strided_slice %23 {offsets = [0, 0, 24], sizes = [1, 8, 8], strides = [1, 1, 1]} : vector<1x8x32xbf16> to vector<1x8x8xbf16>
    %103 = vector.extract_strided_slice %35 {offsets = [0, 0, 24], sizes = [1, 8, 8], strides = [1, 1, 1]} : vector<1x8x32xbf16> to vector<1x8x8xbf16>
    "tpu.trace_start"() <{level = 10 : i32, message = "bqd,bkd->bqk"}> : () -> ()
    %cst_44 = arith.constant dense<0.000000e+00> : vector<1x8x8xf32>
    %104 = tpu.matmul %101, %102, %cst_44 {dimension_numbers = #tpu.dot_dimension_numbers<[2], [2], [1], [1], [0, 0, 0, 1, 1, 1], [0], [0]>} : vector<1x8x8xbf16>, vector<1x8x8xbf16>, vector<1x8x8xf32> -> vector<1x8x8xf32>
    "tpu.trace_stop"() : () -> ()
    %cst_45 = arith.constant dense<0xFF800000> : vector<1x8xf32>
    %105 = vector.multi_reduction <maximumf>, %104, %cst_45 [2] : vector<1x8x8xf32> to vector<1x8xf32>
    %106 = vector.shape_cast %105 : vector<1x8xf32> to vector<1x8x1xf32>
    %107 = vector.broadcast %106 : vector<1x8x1xf32> to vector<1x8x8xf32>
    %108 = arith.subf %104, %107 : vector<1x8x8xf32>
    %109 = math.exp %108 : vector<1x8x8xf32>
    %cst_46 = arith.constant dense<0.000000e+00> : vector<1x8xf32>
    %110 = vector.multi_reduction <add>, %109, %cst_46 [2] : vector<1x8x8xf32> to vector<1x8xf32>
    %111 = vector.shape_cast %110 : vector<1x8xf32> to vector<1x8x1xf32>
    %112 = tpu.reciprocal %111 : vector<1x8x1xf32> -> vector<1x8x1xf32>
    %113 = vector.broadcast %112 : vector<1x8x1xf32> to vector<1x8x8xf32>
    %114 = arith.mulf %109, %113 : vector<1x8x8xf32>
    %115 = arith.truncf %114 : vector<1x8x8xf32> to vector<1x8x8xbf16>
    "tpu.trace_start"() <{level = 10 : i32, message = "bqk,bkd->bqd"}> : () -> ()
    %cst_47 = arith.constant dense<0.000000e+00> : vector<1x8x8xf32>
    %116 = tpu.matmul %115, %103, %cst_47 {dimension_numbers = #tpu.dot_dimension_numbers<[2], [1], [1], [2], [0, 0, 0, 1, 1, 2], [0], [0]>} : vector<1x8x8xbf16>, vector<1x8x8xbf16>, vector<1x8x8xf32> -> vector<1x8x8xf32>
    "tpu.trace_stop"() : () -> ()
    %117 = vector.shape_cast %116 : vector<1x8x8xf32> to vector<8x8xf32>
    %118 = arith.truncf %117 : vector<8x8xf32> to vector<8x8xbf16>
    %119 = vector.extract_strided_slice %36 {offsets = [24, 0], sizes = [8, 32], strides = [1, 1]} : vector<32x32xbf16> to vector<8x32xbf16>
    %cst_48 = arith.constant dense<0.000000e+00> : vector<8x32xf32>
    %120 = tpu.matmul %118, %119, %cst_48 {dimension_numbers = #tpu.dot_dimension_numbers<[1], [0], [0], [1], [0, 0, 1, 1], [], []>} : vector<8x8xbf16>, vector<8x32xbf16>, vector<8x32xf32> -> vector<8x32xf32>
    %121 = arith.addf %100, %120 : vector<8x32xf32>
    %c0_49 = arith.constant 0 : index
    %c0_50 = arith.constant 0 : index
    %122 = vector.load %arg7[%c0_49, %c0_50] : memref<1x32xf32, #tpu.memory_space<vmem>>, vector<1x32xf32>
    %123 = vector.broadcast %122 : vector<1x32xf32> to vector<8x32xf32>
    %124 = arith.addf %121, %123 : vector<8x32xf32>
    %125 = vector.shape_cast %124 : vector<8x32xf32> to vector<1x8x32xf32>
    %c0_51 = arith.constant 0 : index
    %c0_52 = arith.constant 0 : index
    %c0_53 = arith.constant 0 : index
    %126 = vector.load %arg8[%c0_51, %c0_52, %c0_53] : memref<1x8x32xf32, #tpu.memory_space<vmem>>, vector<1x8x32xf32>
    tpu.vector_store %arg8[%c0_51, %c0_52, %c0_53], %125 {strides = array<i32>} : memref<1x8x32xf32, #tpu.memory_space<vmem>>, vector<1x8x32xf32>,
    return
  }
  func.func @transform_0(%arg0: i32) -> (i32, i32, i32) {
    %c0_i32 = arith.constant 0 : i32
    %c0_i32_0 = arith.constant 0 : i32
    %c0_i32_1 = arith.constant 0 : i32
    return %arg0, %c0_i32, %c0_i32_0 : i32, i32, i32
  }
  func.func @transform_1(%arg0: i32) -> (i32, i32, i32) {
    %c0_i32 = arith.constant 0 : i32
    %c0_i32_0 = arith.constant 0 : i32
    %c0_i32_1 = arith.constant 0 : i32
    return %arg0, %c0_i32, %c0_i32_0 : i32, i32, i32
  }
  func.func @transform_2(%arg0: i32) -> (i32, i32, i32) {
    %c0_i32 = arith.constant 0 : i32
    %c0_i32_0 = arith.constant 0 : i32
    %c0_i32_1 = arith.constant 0 : i32
    return %arg0, %c0_i32, %c0_i32_0 : i32, i32, i32
  }
  func.func @transform_3(%arg0: i32) -> (i32, i32, i32) {
    %c0_i32 = arith.constant 0 : i32
    %c0_i32_0 = arith.constant 0 : i32
    %c0_i32_1 = arith.constant 0 : i32
    %c0_i32_2 = arith.constant 0 : i32
    return %c0_i32, %c0_i32_0, %c0_i32_1 : i32, i32, i32
  }
  func.func @transform_4(%arg0: i32) -> (i32, i32, i32) {
    %c0_i32 = arith.constant 0 : i32
    %c0_i32_0 = arith.constant 0 : i32
    %c0_i32_1 = arith.constant 0 : i32
    %c0_i32_2 = arith.constant 0 : i32
    return %c0_i32, %c0_i32_0, %c0_i32_1 : i32, i32, i32
  }
  func.func @transform_5(%arg0: i32) -> (i32, i32) {
    %c0_i32 = arith.constant 0 : i32
    %c0_i32_0 = arith.constant 0 : i32
    %c0_i32_1 = arith.constant 0 : i32
    return %c0_i32, %c0_i32_0 : i32, i32
  }
  func.func @transform_6(%arg0: i32) -> (i32, i32) {
    %c0_i32 = arith.constant 0 : i32
    %c0_i32_0 = arith.constant 0 : i32
    %c0_i32_1 = arith.constant 0 : i32
    return %c0_i32, %c0_i32_0 : i32, i32
  }
  func.func @transform_7(%arg0: i32) -> (i32, i32, i32) {
    %c0_i32 = arith.constant 0 : i32
    %c0_i32_0 = arith.constant 0 : i32
    %c0_i32_1 = arith.constant 0 : i32
    return %arg0, %c0_i32, %c0_i32_0 : i32, i32, i32
  }
}

module attributes {stable_mosaic.version = 11 : i64} {
  func.func @_mha_kernel(%arg0: i32, %arg1: memref<1x8x32xf32, #tpu.memory_space<vmem>>, %arg2: memref<1x8x32xf32, #tpu.memory_space<vmem>>, %arg3: memref<1x8x32xf32, #tpu.memory_space<vmem>>, %arg4: memref<3x32x32xbf16, #tpu.memory_space<vmem>>, %arg5: memref<3x1x32xf32, #tpu.memory_space<vmem>>, %arg6: memref<32x32xbf16, #tpu.memory_space<vmem>>, %arg7: memref<1x32xf32, #tpu.memory_space<vmem>>, %arg8: memref<1x8x32xf32, #tpu.memory_space<vmem>>) attributes {dimension_semantics = [#tpu.dimension_semantics<parallel>], iteration_bounds = array<i64: 2>, scalar_prefetch = 0 : i64, scratch_operands = 0 : i64, tpu.core_type = #tpu.core_type<tc>, window_params = [{transform_indices = @transform_0, window_bounds = array<i64: 1, 8, 32>}, {transform_indices = @transform_1, window_bounds = array<i64: 1, 8, 32>}, {transform_indices = @transform_2, window_bounds = array<i64: 1, 8, 32>}, {pipeline_mode = #tpu.pipeline_mode<synchronous>, transform_indices = @transform_3, window_bounds = array<i64: 3, 32, 32>}, {pipeline_mode = #tpu.pipeline_mode<synchronous>, transform_indices = @transform_4, window_bounds = array<i64: 3, 1, 32>}, {pipeline_mode = #tpu.pipeline_mode<synchronous>, transform_indices = @transform_5, window_bounds = array<i64: 32, 32>}, {pipeline_mode = #tpu.pipeline_mode<synchronous>, transform_indices = @transform_6, window_bounds = array<i64: 1, 32>}, {transform_indices = @transform_7, window_bounds = array<i64: 1, 8, 32>}]} {
    %c0 = arith.constant 0 : index
    %c0_0 = arith.constant 0 : index
    %c0_1 = arith.constant 0 : index
    %0 = vector.load %arg1[%c0, %c0_0, %c0_1] : memref<1x8x32xf32, #tpu.memory_space<vmem>>, vector<1x8x32xf32>
    %1 = vector.shape_cast %0 : vector<1x8x32xf32> to vector<8x32xf32>
    %2 = arith.truncf %1 : vector<8x32xf32> to vector<8x32xbf16>
    %c0_2 = arith.constant 0 : index
    %c0_3 = arith.constant 0 : index
    %c0_4 = arith.constant 0 : index
    %3 = vector.load %arg4[%c0_2, %c0_3, %c0_4] : memref<3x32x32xbf16, #tpu.memory_space<vmem>>, vector<1x32x32xbf16>
    %4 = vector.shape_cast %3 : vector<1x32x32xbf16> to vector<32x32xbf16>
    %cst = arith.constant dense<0.000000e+00> : vector<8x32xf32>
    %5 = tpu.matmul %2, %4, %cst {dimension_numbers = #tpu.dot_dimension_numbers<[1], [0], [0], [1], [0, 0, 1, 1], [], []>} : vector<8x32xbf16>, vector<32x32xbf16>, vector<8x32xf32> -> vector<8x32xf32>
    %c0_5 = arith.constant 0 : index
    %c0_6 = arith.constant 0 : index
    %c0_7 = arith.constant 0 : index
    %6 = vector.load %arg5[%c0_5, %c0_6, %c0_7] : memref<3x1x32xf32, #tpu.memory_space<vmem>>, vector<1x1x32xf32>
    %7 = vector.shape_cast %6 : vector<1x1x32xf32> to vector<1x32xf32>
    %8 = vector.broadcast %7 : vector<1x32xf32> to vector<8x32xf32>
    %9 = arith.addf %5, %8 : vector<8x32xf32>
    %10 = vector.shape_cast %9 : vector<8x32xf32> to vector<1x8x32xf32>
    %11 = arith.truncf %10 : vector<1x8x32xf32> to vector<1x8x32xbf16>
    %c0_8 = arith.constant 0 : index
    %c0_9 = arith.constant 0 : index
    %c0_10 = arith.constant 0 : index
    %12 = vector.load %arg2[%c0_8, %c0_9, %c0_10] : memref<1x8x32xf32, #tpu.memory_space<vmem>>, vector<1x8x32xf32>
    %13 = vector.shape_cast %12 : vector<1x8x32xf32> to vector<8x32xf32>
    %14 = arith.truncf %13 : vector<8x32xf32> to vector<8x32xbf16>
    %c1 = arith.constant 1 : index
    %c0_11 = arith.constant 0 : index
    %c0_12 = arith.constant 0 : index
    %15 = vector.load %arg4[%c1, %c0_11, %c0_12] : memref<3x32x32xbf16, #tpu.memory_space<vmem>>, vector<1x32x32xbf16>
    %16 = vector.shape_cast %15 : vector<1x32x32xbf16> to vector<32x32xbf16>
    %cst_13 = arith.constant dense<0.000000e+00> : vector<8x32xf32>
    %17 = tpu.matmul %14, %16, %cst_13 {dimension_numbers = #tpu.dot_dimension_numbers<[1], [0], [0], [1], [0, 0, 1, 1], [], []>} : vector<8x32xbf16>, vector<32x32xbf16>, vector<8x32xf32> -> vector<8x32xf32>
    %c1_14 = arith.constant 1 : index
    %c0_15 = arith.constant 0 : index
    %c0_16 = arith.constant 0 : index
    %18 = vector.load %arg5[%c1_14, %c0_15, %c0_16] : memref<3x1x32xf32, #tpu.memory_space<vmem>>, vector<1x1x32xf32>
    %19 = vector.shape_cast %18 : vector<1x1x32xf32> to vector<1x32xf32>
    %20 = vector.broadcast %19 : vector<1x32xf32> to vector<8x32xf32>
    %21 = arith.addf %17, %20 : vector<8x32xf32>
    %22 = vector.shape_cast %21 : vector<8x32xf32> to vector<1x8x32xf32>
    %23 = arith.truncf %22 : vector<1x8x32xf32> to vector<1x8x32xbf16>
    %c0_17 = arith.constant 0 : index
    %c0_18 = arith.constant 0 : index
    %c0_19 = arith.constant 0 : index
    %24 = vector.load %arg3[%c0_17, %c0_18, %c0_19] : memref<1x8x32xf32, #tpu.memory_space<vmem>>, vector<1x8x32xf32>
    %25 = vector.shape_cast %24 : vector<1x8x32xf32> to vector<8x32xf32>
    %26 = arith.truncf %25 : vector<8x32xf32> to vector<8x32xbf16>
    %c2 = arith.constant 2 : index
    %c0_20 = arith.constant 0 : index
    %c0_21 = arith.constant 0 : index
    %27 = vector.load %arg4[%c2, %c0_20, %c0_21] : memref<3x32x32xbf16, #tpu.memory_space<vmem>>, vector<1x32x32xbf16>
    %28 = vector.shape_cast %27 : vector<1x32x32xbf16> to vector<32x32xbf16>
    %cst_22 = arith.constant dense<0.000000e+00> : vector<8x32xf32>
    %29 = tpu.matmul %26, %28, %cst_22 {dimension_numbers = #tpu.dot_dimension_numbers<[1], [0], [0], [1], [0, 0, 1, 1], [], []>} : vector<8x32xbf16>, vector<32x32xbf16>, vector<8x32xf32> -> vector<8x32xf32>
    %c2_23 = arith.constant 2 : index
    %c0_24 = arith.constant 0 : index
    %c0_25 = arith.constant 0 : index
    %30 = vector.load %arg5[%c2_23, %c0_24, %c0_25] : memref<3x1x32xf32, #tpu.memory_space<vmem>>, vector<1x1x32xf32>
    %31 = vector.shape_cast %30 : vector<1x1x32xf32> to vector<1x32xf32>
    %32 = vector.broadcast %31 : vector<1x32xf32> to vector<8x32xf32>
    %33 = arith.addf %29, %32 : vector<8x32xf32>
    %34 = vector.shape_cast %33 : vector<8x32xf32> to vector<1x8x32xf32>
    %35 = arith.truncf %34 : vector<1x8x32xf32> to vector<1x8x32xbf16>
    %c0_26 = arith.constant 0 : index
    %c0_27 = arith.constant 0 : index
    %36 = vector.load %arg6[%c0_26, %c0_27] : memref<32x32xbf16, #tpu.memory_space<vmem>>, vector<32x32xbf16>
    %cst_28 = arith.constant 0.000000e+00 : f32
    %37 = vector.broadcast %cst_28 : f32 to vector<8x32xf32>
    %38 = vector.extract_strided_slice %11 {offsets = [0, 0, 0], sizes = [1, 8, 8], strides = [1, 1, 1]} : vector<1x8x32xbf16> to vector<1x8x8xbf16>
    %39 = vector.extract_strided_slice %23 {offsets = [0, 0, 0], sizes = [1, 8, 8], strides = [1, 1, 1]} : vector<1x8x32xbf16> to vector<1x8x8xbf16>
    %40 = vector.extract_strided_slice %35 {offsets = [0, 0, 0], sizes = [1, 8, 8], strides = [1, 1, 1]} : vector<1x8x32xbf16> to vector<1x8x8xbf16>
    "tpu.trace_start"() <{level = 10 : i32, message = "bqd,bkd->bqk"}> : () -> ()
    %cst_29 = arith.constant dense<0.000000e+00> : vector<1x8x8xf32>
    %41 = tpu.matmul %38, %39, %cst_29 {dimension_numbers = #tpu.dot_dimension_numbers<[2], [2], [1], [1], [0, 0, 0, 1, 1, 1], [0], [0]>} : vector<1x8x8xbf16>, vector<1x8x8xbf16>, vector<1x8x8xf32> -> vector<1x8x8xf32>
    "tpu.trace_stop"() : () -> ()
    %cst_30 = arith.constant dense<0xFF800000> : vector<1x8xf32>
    %42 = vector.multi_reduction <maximumf>, %41, %cst_30 [2] : vector<1x8x8xf32> to vector<1x8xf32>
    %43 = vector.shape_cast %42 : vector<1x8xf32> to vector<1x8x1xf32>
    %44 = vector.broadcast %43 : vector<1x8x1xf32> to vector<1x8x8xf32>
    %45 = arith.subf %41, %44 : vector<1x8x8xf32>
    %46 = math.exp %45 : vector<1x8x8xf32>
    %cst_31 = arith.constant dense<0.000000e+00> : vector<1x8xf32>
    %47 = vector.multi_reduction <add>, %46, %cst_31 [2] : vector<1x8x8xf32> to vector<1x8xf32>
    %48 = vector.shape_cast %47 : vector<1x8xf32> to vector<1x8x1xf32>
    %49 = tpu.reciprocal %48 : vector<1x8x1xf32> -> vector<1x8x1xf32>
    %50 = vector.broadcast %49 : vector<1x8x1xf32> to vector<1x8x8xf32>
    %51 = arith.mulf %46, %50 : vector<1x8x8xf32>
    %52 = arith.truncf %51 : vector<1x8x8xf32> to vector<1x8x8xbf16>
    "tpu.trace_start"() <{level = 10 : i32, message = "bqk,bkd->bqd"}> : () -> ()
    %cst_32 = arith.constant dense<0.000000e+00> : vector<1x8x8xf32>
    %53 = tpu.matmul %52, %40, %cst_32 {dimension_numbers = #tpu.dot_dimension_numbers<[2], [1], [1], [2], [0, 0, 0, 1, 1, 2], [0], [0]>} : vector<1x8x8xbf16>, vector<1x8x8xbf16>, vector<1x8x8xf32> -> vector<1x8x8xf32>
    "tpu.trace_stop"() : () -> ()
    %54 = vector.shape_cast %53 : vector<1x8x8xf32> to vector<8x8xf32>
    %55 = arith.truncf %54 : vector<8x8xf32> to vector<8x8xbf16>
    %56 = vector.extract_strided_slice %36 {offsets = [0, 0], sizes = [8, 32], strides = [1, 1]} : vector<32x32xbf16> to vector<8x32xbf16>
    %cst_33 = arith.constant dense<0.000000e+00> : vector<8x32xf32>
    %57 = tpu.matmul %55, %56, %cst_33 {dimension_numbers = #tpu.dot_dimension_numbers<[1], [0], [0], [1], [0, 0, 1, 1], [], []>} : vector<8x8xbf16>, vector<8x32xbf16>, vector<8x32xf32> -> vector<8x32xf32>
    %58 = arith.addf %37, %57 : vector<8x32xf32>
    %59 = vector.extract_strided_slice %11 {offsets = [0, 0, 8], sizes = [1, 8, 8], strides = [1, 1, 1]} : vector<1x8x32xbf16> to vector<1x8x8xbf16>
    %60 = vector.extract_strided_slice %23 {offsets = [0, 0, 8], sizes = [1, 8, 8], strides = [1, 1, 1]} : vector<1x8x32xbf16> to vector<1x8x8xbf16>
    %61 = vector.extract_strided_slice %35 {offsets = [0, 0, 8], sizes = [1, 8, 8], strides = [1, 1, 1]} : vector<1x8x32xbf16> to vector<1x8x8xbf16>
    "tpu.trace_start"() <{level = 10 : i32, message = "bqd,bkd->bqk"}> : () -> ()
    %cst_34 = arith.constant dense<0.000000e+00> : vector<1x8x8xf32>
    %62 = tpu.matmul %59, %60, %cst_34 {dimension_numbers = #tpu.dot_dimension_numbers<[2], [2], [1], [1], [0, 0, 0, 1, 1, 1], [0], [0]>} : vector<1x8x8xbf16>, vector<1x8x8xbf16>, vector<1x8x8xf32> -> vector<1x8x8xf32>
    "tpu.trace_stop"() : () -> ()
    %cst_35 = arith.constant dense<0xFF800000> : vector<1x8xf32>
    %63 = vector.multi_reduction <maximumf>, %62, %cst_35 [2] : vector<1x8x8xf32> to vector<1x8xf32>
    %64 = vector.shape_cast %63 : vector<1x8xf32> to vector<1x8x1xf32>
    %65 = vector.broadcast %64 : vector<1x8x1xf32> to vector<1x8x8xf32>
    %66 = arith.subf %62, %65 : vector<1x8x8xf32>
    %67 = math.exp %66 : vector<1x8x8xf32>
    %cst_36 = arith.constant dense<0.000000e+00> : vector<1x8xf32>
    %68 = vector.multi_reduction <add>, %67, %cst_36 [2] : vector<1x8x8xf32> to vector<1x8xf32>
    %69 = vector.shape_cast %68 : vector<1x8xf32> to vector<1x8x1xf32>
    %70 = tpu.reciprocal %69 : vector<1x8x1xf32> -> vector<1x8x1xf32>
    %71 = vector.broadcast %70 : vector<1x8x1xf32> to vector<1x8x8xf32>
    %72 = arith.mulf %67, %71 : vector<1x8x8xf32>
    %73 = arith.truncf %72 : vector<1x8x8xf32> to vector<1x8x8xbf16>
    "tpu.trace_start"() <{level = 10 : i32, message = "bqk,bkd->bqd"}> : () -> ()
    %cst_37 = arith.constant dense<0.000000e+00> : vector<1x8x8xf32>
    %74 = tpu.matmul %73, %61, %cst_37 {dimension_numbers = #tpu.dot_dimension_numbers<[2], [1], [1], [2], [0, 0, 0, 1, 1, 2], [0], [0]>} : vector<1x8x8xbf16>, vector<1x8x8xbf16>, vector<1x8x8xf32> -> vector<1x8x8xf32>
    "tpu.trace_stop"() : () -> ()
    %75 = vector.shape_cast %74 : vector<1x8x8xf32> to vector<8x8xf32>
    %76 = arith.truncf %75 : vector<8x8xf32> to vector<8x8xbf16>
    %77 = vector.extract_strided_slice %36 {offsets = [8, 0], sizes = [8, 32], strides = [1, 1]} : vector<32x32xbf16> to vector<8x32xbf16>
    %cst_38 = arith.constant dense<0.000000e+00> : vector<8x32xf32>
    %78 = tpu.matmul %76, %77, %cst_38 {dimension_numbers = #tpu.dot_dimension_numbers<[1], [0], [0], [1], [0, 0, 1, 1], [], []>} : vector<8x8xbf16>, vector<8x32xbf16>, vector<8x32xf32> -> vector<8x32xf32>
    %79 = arith.addf %58, %78 : vector<8x32xf32>
    %80 = vector.extract_strided_slice %11 {offsets = [0, 0, 16], sizes = [1, 8, 8], strides = [1, 1, 1]} : vector<1x8x32xbf16> to vector<1x8x8xbf16>
    %81 = vector.extract_strided_slice %23 {offsets = [0, 0, 16], sizes = [1, 8, 8], strides = [1, 1, 1]} : vector<1x8x32xbf16> to vector<1x8x8xbf16>
    %82 = vector.extract_strided_slice %35 {offsets = [0, 0, 16], sizes = [1, 8, 8], strides = [1, 1, 1]} : vector<1x8x32xbf16> to vector<1x8x8xbf16>
    "tpu.trace_start"() <{level = 10 : i32, message = "bqd,bkd->bqk"}> : () -> ()
    %cst_39 = arith.constant dense<0.000000e+00> : vector<1x8x8xf32>
    %83 = tpu.matmul %80, %81, %cst_39 {dimension_numbers = #tpu.dot_dimension_numbers<[2], [2], [1], [1], [0, 0, 0, 1, 1, 1], [0], [0]>} : vector<1x8x8xbf16>, vector<1x8x8xbf16>, vector<1x8x8xf32> -> vector<1x8x8xf32>
    "tpu.trace_stop"() : () -> ()
    %cst_40 = arith.constant dense<0xFF800000> : vector<1x8xf32>
    %84 = vector.multi_reduction <maximumf>, %83, %cst_40 [2] : vector<1x8x8xf32> to vector<1x8xf32>
    %85 = vector.shape_cast %84 : vector<1x8xf32> to vector<1x8x1xf32>
    %86 = vector.broadcast %85 : vector<1x8x1xf32> to vector<1x8x8xf32>
    %87 = arith.subf %83, %86 : vector<1x8x8xf32>
    %88 = math.exp %87 : vector<1x8x8xf32>
    %cst_41 = arith.constant dense<0.000000e+00> : vector<1x8xf32>
    %89 = vector.multi_reduction <add>, %88, %cst_41 [2] : vector<1x8x8xf32> to vector<1x8xf32>
    %90 = vector.shape_cast %89 : vector<1x8xf32> to vector<1x8x1xf32>
    %91 = tpu.reciprocal %90 : vector<1x8x1xf32> -> vector<1x8x1xf32>
    %92 = vector.broadcast %91 : vector<1x8x1xf32> to vector<1x8x8xf32>
    %93 = arith.mulf %88, %92 : vector<1x8x8xf32>
    %94 = arith.truncf %93 : vector<1x8x8xf32> to vector<1x8x8xbf16>
    "tpu.trace_start"() <{level = 10 : i32, message = "bqk,bkd->bqd"}> : () -> ()
    %cst_42 = arith.constant dense<0.000000e+00> : vector<1x8x8xf32>
    %95 = tpu.matmul %94, %82, %cst_42 {dimension_numbers = #tpu.dot_dimension_numbers<[2], [1], [1], [2], [0, 0, 0, 1, 1, 2], [0], [0]>} : vector<1x8x8xbf16>, vector<1x8x8xbf16>, vector<1x8x8xf32> -> vector<1x8x8xf32>
    "tpu.trace_stop"() : () -> ()
    %96 = vector.shape_cast %95 : vector<1x8x8xf32> to vector<8x8xf32>
    %97 = arith.truncf %96 : vector<8x8xf32> to vector<8x8xbf16>
    %98 = vector.extract_strided_slice %36 {offsets = [16, 0], sizes = [8, 32], strides = [1, 1]} : vector<32x32xbf16> to vector<8x32xbf16>
    %cst_43 = arith.constant dense<0.000000e+00> : vector<8x32xf32>
    %99 = tpu.matmul %97, %98, %cst_43 {dimension_numbers = #tpu.dot_dimension_numbers<[1], [0], [0], [1], [0, 0, 1, 1], [], []>} : vector<8x8xbf16>, vector<8x32xbf16>, vector<8x32xf32> -> vector<8x32xf32>
    %100 = arith.addf %79, %99 : vector<8x32xf32>
    %101 = vector.extract_strided_slice %11 {offsets = [0, 0, 24], sizes = [1, 8, 8], strides = [1, 1, 1]} : vector<1x8x32xbf16> to vector<1x8x8xbf16>
    %102 = vector.extract_strided_slice %23 {offsets = [0, 0, 24], sizes = [1, 8, 8], strides = [1, 1, 1]} : vector<1x8x32xbf16> to vector<1x8x8xbf16>
    %103 = vector.extract_strided_slice %35 {offsets = [0, 0, 24], sizes = [1, 8, 8], strides = [1, 1, 1]} : vector<1x8x32xbf16> to vector<1x8x8xbf16>
    "tpu.trace_start"() <{level = 10 : i32, message = "bqd,bkd->bqk"}> : () -> ()
    %cst_44 = arith.constant dense<0.000000e+00> : vector<1x8x8xf32>
    %104 = tpu.matmul %101, %102, %cst_44 {dimension_numbers = #tpu.dot_dimension_numbers<[2], [2], [1], [1], [0, 0, 0, 1, 1, 1], [0], [0]>} : vector<1x8x8xbf16>, vector<1x8x8xbf16>, vector<1x8x8xf32> -> vector<1x8x8xf32>
    "tpu.trace_stop"() : () -> ()
    %cst_45 = arith.constant dense<0xFF800000> : vector<1x8xf32>
    %105 = vector.multi_reduction <maximumf>, %104, %cst_45 [2] : vector<1x8x8xf32> to vector<1x8xf32>
    %106 = vector.shape_cast %105 : vector<1x8xf32> to vector<1x8x1xf32>
    %107 = vector.broadcast %106 : vector<1x8x1xf32> to vector<1x8x8xf32>
    %108 = arith.subf %104, %107 : vector<1x8x8xf32>
    %109 = math.exp %108 : vector<1x8x8xf32>
    %cst_46 = arith.constant dense<0.000000e+00> : vector<1x8xf32>
    %110 = vector.multi_reduction <add>, %109, %cst_46 [2] : vector<1x8x8xf32> to vector<1x8xf32>
    %111 = vector.shape_cast %110 : vector<1x8xf32> to vector<1x8x1xf32>
    %112 = tpu.reciprocal %111 : vector<1x8x1xf32> -> vector<1x8x1xf32>
    %113 = vector.broadcast %112 : vector<1x8x1xf32> to vector<1x8x8xf32>
    %114 = arith.mulf %109, %113 : vector<1x8x8xf32>
    %115 = arith.truncf %114 : vector<1x8x8xf32> to vector<1x8x8xbf16>
    "tpu.trace_start"() <{level = 10 : i32, message = "bqk,bkd->bqd"}> : () -> ()
    %cst_47 = arith.constant dense<0.000000e+00> : vector<1x8x8xf32>
    %116 = tpu.matmul %115, %103, %cst_47 {dimension_numbers = #tpu.dot_dimension_numbers<[2], [1], [1], [2], [0, 0, 0, 1, 1, 2], [0], [0]>} : vector<1x8x8xbf16>, vector<1x8x8xbf16>, vector<1x8x8xf32> -> vector<1x8x8xf32>
    "tpu.trace_stop"() : () -> ()
    %117 = vector.shape_cast %116 : vector<1x8x8xf32> to vector<8x8xf32>
    %118 = arith.truncf %117 : vector<8x8xf32> to vector<8x8xbf16>
    %119 = vector.extract_strided_slice %36 {offsets = [24, 0], sizes = [8, 32], strides = [1, 1]} : vector<32x32xbf16> to vector<8x32xbf16>
    %cst_48 = arith.constant dense<0.000000e+00> : vector<8x32xf32>
    %120 = tpu.matmul %118, %119, %cst_48 {dimension_numbers = #tpu.dot_dimension_numbers<[1], [0], [0], [1], [0, 0, 1, 1], [], []>} : vector<8x8xbf16>, vector<8x32xbf16>, vector<8x32xf32> -> vector<8x32xf32>
    %121 = arith.addf %100, %120 : vector<8x32xf32>
    %c0_49 = arith.constant 0 : index
    %c0_50 = arith.constant 0 : index
    %122 = vector.load %arg7[%c0_49, %c0_50] : memref<1x32xf32, #tpu.memory_space<vmem>>, vector<1x32xf32>
    %123 = vector.broadcast %122 : vector<1x32xf32> to vector<8x32xf32>
    %124 = arith.addf %121, %123 : vector<8x32xf32>
    %125 = vector.shape_cast %124 : vector<8x32xf32> to vector<1x8x32xf32>
    %c0_51 = arith.constant 0 : index
    %c0_52 = arith.constant 0 : index
    %c0_53 = arith.constant 0 : index
    %126 = vector.load %arg8[%c0_51, %c0_52, %c0_53] : memref<1x8x32xf32, #tpu.memory_space<vmem>>, vector<1x8x32xf32>
    tpu.vector_store %arg8[%c0_51, %c0_52, %c0_53], %125 {strides = array<i32>} : memref<1x8x32xf32, #tpu.memory_space<vmem>>, vector<1x8x32xf32>,
    return
  }
  func.func @transform_0(%arg0: i32) -> (i32, i32, i32) {
    %c0_i32 = arith.constant 0 : i32
    %c0_i32_0 = arith.constant 0 : i32
    %c0_i32_1 = arith.constant 0 : i32
    return %arg0, %c0_i32, %c0_i32_0 : i32, i32, i32
  }
  func.func @transform_1(%arg0: i32) -> (i32, i32, i32) {
    %c0_i32 = arith.constant 0 : i32
    %c0_i32_0 = arith.constant 0 : i32
    %c0_i32_1 = arith.constant 0 : i32
    return %arg0, %c0_i32, %c0_i32_0 : i32, i32, i32
  }
  func.func @transform_2(%arg0: i32) -> (i32, i32, i32) {
    %c0_i32 = arith.constant 0 : i32
    %c0_i32_0 = arith.constant 0 : i32
    %c0_i32_1 = arith.constant 0 : i32
    return %arg0, %c0_i32, %c0_i32_0 : i32, i32, i32
  }
  func.func @transform_3(%arg0: i32) -> (i32, i32, i32) {
    %c0_i32 = arith.constant 0 : i32
    %c0_i32_0 = arith.constant 0 : i32
    %c0_i32_1 = arith.constant 0 : i32
    %c0_i32_2 = arith.constant 0 : i32
    return %c0_i32, %c0_i32_0, %c0_i32_1 : i32, i32, i32
  }
  func.func @transform_4(%arg0: i32) -> (i32, i32, i32) {
    %c0_i32 = arith.constant 0 : i32
    %c0_i32_0 = arith.constant 0 : i32
    %c0_i32_1 = arith.constant 0 : i32
    %c0_i32_2 = arith.constant 0 : i32
    return %c0_i32, %c0_i32_0, %c0_i32_1 : i32, i32, i32
  }
  func.func @transform_5(%arg0: i32) -> (i32, i32) {
    %c0_i32 = arith.constant 0 : i32
    %c0_i32_0 = arith.constant 0 : i32
    %c0_i32_1 = arith.constant 0 : i32
    return %c0_i32, %c0_i32_0 : i32, i32
  }
  func.func @transform_6(%arg0: i32) -> (i32, i32) {
    %c0_i32 = arith.constant 0 : i32
    %c0_i32_0 = arith.constant 0 : i32
    %c0_i32_1 = arith.constant 0 : i32
    return %c0_i32, %c0_i32_0 : i32, i32
  }
  func.func @transform_7(%arg0: i32) -> (i32, i32, i32) {
    %c0_i32 = arith.constant 0 : i32
    %c0_i32_0 = arith.constant 0 : i32
    %c0_i32_1 = arith.constant 0 : i32
    return %arg0, %c0_i32, %c0_i32_0 : i32, i32, i32
  }
}

</mosaic_0001>

<llo_original>
// kernel: tpu_custom_call.1
$region0: #{tpu_custom_call.1}
  #allocation0 [shape = 'u32[]', space=smem, size = 0x4, offset = 0x4, fixed_abs, tag = 'smem constant byte address 0x4 - core index']
  #allocation1 [shape = 'u32[144,128]{1,0:T(1,128)}', space=vmem, size = 0x12000, scoped, tag = 'internal scratch']
  %s0 = inlined_call_operand.hbm [shape: f32[2,8,32], index: 0, kind: input, shape index: {}]
  %s1 = inlined_call_operand.hbm [shape: f32[2,8,32], index: 1, kind: input, shape index: {}]
  %s2 = inlined_call_operand.hbm [shape: f32[2,8,32], index: 2, kind: input, shape index: {}]
  %s3 = inlined_call_operand.hbm [shape: bf16[3,32,32], index: 3, kind: input, shape index: {}]
  %s4 = inlined_call_operand.vmem [shape: f32[3,1,32], index: 4, kind: input, shape index: {}]
  %s5 = inlined_call_operand.hbm [shape: bf16[32,32], index: 5, kind: input, shape index: {}]
  %s6 = inlined_call_operand.vmem [shape: f32[1,32], index: 6, kind: input, shape index: {}]
  %s7 = inlined_call_operand.hbm [shape: f32[2,8,32], index: 7, kind: output, shape index: {}]
  %s8 = sld [smem:[#allocation0]]
  $region81: #{tpu_custom_call.1} parent=0
    _
  %s10 = ssub.s32 1, %s8
  %s11 = scalar_select 0, %s10, %s8
  $region1: #{tpu_custom_call.1} parent=0
    #allocation2 [shape = 'u8[8192]{0}', space=vmem, size = 0x2000, scoped, tag = 'input window, operand 0']
    #allocation3 [shape = 's32[2]{0}', space=sflag, size = 0x8, scoped, tag = 'scoped memory for tpu_custom_call.1']
    #allocation4 [shape = 's32[2]{0}', space=sflag, size = 0x8, scoped, tag = 'scoped memory for tpu_custom_call.1']
    #allocation5 [shape = 'u8[8192]{0}', space=vmem, size = 0x2000, scoped, tag = 'input window, operand 1']
    #allocation6 [shape = 's32[2]{0}', space=sflag, size = 0x8, scoped, tag = 'scoped memory for tpu_custom_call.1']
    #allocation7 [shape = 'u8[8192]{0}', space=vmem, size = 0x2000, scoped, tag = 'input window, operand 2']
    #allocation8 [shape = 'u8[24576]{0}', space=vmem, size = 0x6000, scoped, tag = 'input window, operand 3, single buffered']
    #allocation9 [shape = 's32[1]{0}', space=sflag, size = 0x4, scoped, tag = 'scoped memory for tpu_custom_call.1']
    #allocation10 [shape = 'u8[8192]{0}', space=vmem, size = 0x2000, scoped, tag = 'input window, operand 5, single buffered']
    #allocation11 [shape = 'u8[8192]{0}', space=vmem, size = 0x2000, scoped, tag = 'output window, operand 0']
    %12 = vsyncpa [#allocation3], 0
    %s13 = scalar_lea.sflag [#allocation3], 1
    %14 = vsyncpa %s13, 0
    %15 = vsyncpa [#allocation6], 0
    %s16 = scalar_lea.sflag [#allocation6], 1
    %17 = vsyncpa %s16, 0
    %18 = vsyncpa [#allocation9], 0
    %19 = vsyncpa [#allocation4], 0
    %s20 = scalar_lea.sflag [#allocation4], 1
    %21 = vsyncpa %s20, 0
    loop: start=0, step=1, limit=4
    $region2: #{tpu_custom_call.1} parent=1 // loop_pre_header
      _
    $region3: #{tpu_custom_call.1} parent=1 // loop_header
      %s23 = sphi 0, %s27
      %p24 = scmp.ge.s32.totalorder %s23, 4
      %s33 = sphi 0, %s35
      %s36 = sphi 0, %s33
      %s37 = sphi 0, %s36
      %s53 = sphi 0, %s37
      %s59 = sphi 0, %s61
      %s62 = sphi 0, %s59
      %s63 = sphi 0, %s62
      %s79 = sphi 0, %s63
      %s85 = sphi 0, %s87
      %s88 = sphi 0, %s85
      %s89 = sphi 0, %s88
      %s105 = sphi 0, %s89
      %s109 = sphi 0, %s109
      %s111 = sphi 0, %s109
      %s112 = sphi 0, %s111
      %s126 = sphi 0, %s112
      %s130 = sphi 0, %s130
      %s132 = sphi 0, %s130
      %s133 = sphi 0, %s132
      %s147 = sphi 0, %s133
      %s151 = sphi 0, %s151
      %s153 = sphi 0, %s151
      %s154 = sphi 0, %s153
      %s168 = sphi 0, %s154
      %s172 = sphi 0, %s172
      %s174 = sphi 0, %s172
      %s175 = sphi 0, %s174
      %s189 = sphi 0, %s175
      %s195 = sphi 0, %s197
      %s198 = sphi 0, %s195
      %s199 = sphi 0, %s198
      %s215 = sphi 0, %s199
    $region4: #{tpu_custom_call.1} parent=1 // loop_header_branch
      %26 = sbr.rel (%p24) target = $region8
    $region5: #{tpu_custom_call.1} parent=1 // loop_body
      %s28 = ssub.s32 %s23, 1
      %s29 = ssub.s32 %s23, 2
      %s30 = sadd.s32 %s23, 1
      %s31 = ssub.s32 %s23, %s30
      %p32 = scmp.eq.s32.totalorder %s31, 0
      %s34 = sadd.s32 %s33, 1
      %s35 = scalar_select %p32, %s33, %s34
      %p38 = pneg %p32
      %p39 = scmp.eq.s32.totalorder %s23, 1
      %p40 = por %p38, %p39
      %p41 = scmp.ne.s32.totalorder %s33, %s36
      %p42 = scmp.eq.s32.totalorder %s23, 0
      %p43 = por %p41, %p42
      %p44 = scmp.ne.s32.totalorder %s33, %s36
      %p45 = scmp.eq.s32.totalorder %s28, 1
      %p46 = por %p44, %p45
      %p47 = scmp.ne.s32.totalorder %s36, %s37
      %p48 = scmp.eq.s32.totalorder %s28, 0
      %p49 = por %p47, %p48
      %p50 = scmp.ne.s32.totalorder %s36, %s37
      %p51 = scmp.eq.s32.totalorder %s29, 1
      %p52 = por %p50, %p51
      %p54 = scmp.ne.s32.totalorder %s37, %s53
      %p55 = scmp.eq.s32.totalorder %s29, 0
      %p56 = por %p54, %p55
      %s57 = ssub.s32 %s23, %s30
      %p58 = scmp.eq.s32.totalorder %s57, 0
      %s60 = sadd.s32 %s59, 1
      %s61 = scalar_select %p58, %s59, %s60
      %p64 = pneg %p58
      %p65 = scmp.eq.s32.totalorder %s23, 1
      %p66 = por %p64, %p65
      %p67 = scmp.ne.s32.totalorder %s59, %s62
      %p68 = scmp.eq.s32.totalorder %s23, 0
      %p69 = por %p67, %p68
      %p70 = scmp.ne.s32.totalorder %s59, %s62
      %p71 = scmp.eq.s32.totalorder %s28, 1
      %p72 = por %p70, %p71
      %p73 = scmp.ne.s32.totalorder %s62, %s63
      %p74 = scmp.eq.s32.totalorder %s28, 0
      %p75 = por %p73, %p74
      %p76 = scmp.ne.s32.totalorder %s62, %s63
      %p77 = scmp.eq.s32.totalorder %s29, 1
      %p78 = por %p76, %p77
      %p80 = scmp.ne.s32.totalorder %s63, %s79
      %p81 = scmp.eq.s32.totalorder %s29, 0
      %p82 = por %p80, %p81
      %s83 = ssub.s32 %s23, %s30
      %p84 = scmp.eq.s32.totalorder %s83, 0
      %s86 = sadd.s32 %s85, 1
      %s87 = scalar_select %p84, %s85, %s86
      %p90 = pneg %p84
      %p91 = scmp.eq.s32.totalorder %s23, 1
      %p92 = por %p90, %p91
      %p93 = scmp.ne.s32.totalorder %s85, %s88
      %p94 = scmp.eq.s32.totalorder %s23, 0
      %p95 = por %p93, %p94
      %p96 = scmp.ne.s32.totalorder %s85, %s88
      %p97 = scmp.eq.s32.totalorder %s28, 1
      %p98 = por %p96, %p97
      %p99 = scmp.ne.s32.totalorder %s88, %s89
      %p100 = scmp.eq.s32.totalorder %s28, 0
      %p101 = por %p99, %p100
      %p102 = scmp.ne.s32.totalorder %s88, %s89
      %p103 = scmp.eq.s32.totalorder %s29, 1
      %p104 = por %p102, %p103
      %p106 = scmp.ne.s32.totalorder %s89, %s105
      %p107 = scmp.eq.s32.totalorder %s29, 0
      %p108 = por %p106, %p107
      %s110 = sadd.s32 %s109, 1
      %p113 = scmp.eq.s32.totalorder %s23, 1
      %p114 = scmp.ne.s32.totalorder %s109, %s111
      %p115 = scmp.eq.s32.totalorder %s23, 0
      %p116 = por %p114, %p115
      %p117 = scmp.ne.s32.totalorder %s109, %s111
      %p118 = scmp.eq.s32.totalorder %s28, 1
      %p119 = por %p117, %p118
      %p120 = scmp.ne.s32.totalorder %s111, %s112
      %p121 = scmp.eq.s32.totalorder %s28, 0
      %p122 = por %p120, %p121
      %p123 = scmp.ne.s32.totalorder %s111, %s112
      %p124 = scmp.eq.s32.totalorder %s29, 1
      %p125 = por %p123, %p124
      %p127 = scmp.ne.s32.totalorder %s112, %s126
      %p128 = scmp.eq.s32.totalorder %s29, 0
      %p129 = por %p127, %p128
      %s131 = sadd.s32 %s130, 1
      %p134 = scmp.eq.s32.totalorder %s23, 1
      %p135 = scmp.ne.s32.totalorder %s130, %s132
      %p136 = scmp.eq.s32.totalorder %s23, 0
      %p137 = por %p135, %p136
      %p138 = scmp.ne.s32.totalorder %s130, %s132
      %p139 = scmp.eq.s32.totalorder %s28, 1
      %p140 = por %p138, %p139
      %p141 = scmp.ne.s32.totalorder %s132, %s133
      %p142 = scmp.eq.s32.totalorder %s28, 0
      %p143 = por %p141, %p142
      %p144 = scmp.ne.s32.totalorder %s132, %s133
      %p145 = scmp.eq.s32.totalorder %s29, 1
      %p146 = por %p144, %p145
      %p148 = scmp.ne.s32.totalorder %s133, %s147
      %p149 = scmp.eq.s32.totalorder %s29, 0
      %p150 = por %p148, %p149
      %s152 = sadd.s32 %s151, 1
      %p155 = scmp.eq.s32.totalorder %s23, 1
      %p156 = scmp.ne.s32.totalorder %s151, %s153
      %p157 = scmp.eq.s32.totalorder %s23, 0
      %p158 = por %p156, %p157
      %p159 = scmp.ne.s32.totalorder %s151, %s153
      %p160 = scmp.eq.s32.totalorder %s28, 1
      %p161 = por %p159, %p160
      %p162 = scmp.ne.s32.totalorder %s153, %s154
      %p163 = scmp.eq.s32.totalorder %s28, 0
      %p164 = por %p162, %p163
      %p165 = scmp.ne.s32.totalorder %s153, %s154
      %p166 = scmp.eq.s32.totalorder %s29, 1
      %p167 = por %p165, %p166
      %p169 = scmp.ne.s32.totalorder %s154, %s168
      %p170 = scmp.eq.s32.totalorder %s29, 0
      %p171 = por %p169, %p170
      %s173 = sadd.s32 %s172, 1
      %p176 = scmp.eq.s32.totalorder %s23, 1
      %p177 = scmp.ne.s32.totalorder %s172, %s174
      %p178 = scmp.eq.s32.totalorder %s23, 0
      %p179 = por %p177, %p178
      %p180 = scmp.ne.s32.totalorder %s172, %s174
      %p181 = scmp.eq.s32.totalorder %s28, 1
      %p182 = por %p180, %p181
      %p183 = scmp.ne.s32.totalorder %s174, %s175
      %p184 = scmp.eq.s32.totalorder %s28, 0
      %p185 = por %p183, %p184
      %p186 = scmp.ne.s32.totalorder %s174, %s175
      %p187 = scmp.eq.s32.totalorder %s29, 1
      %p188 = por %p186, %p187
      %p190 = scmp.ne.s32.totalorder %s175, %s189
      %p191 = scmp.eq.s32.totalorder %s29, 0
      %p192 = por %p190, %p191
      %s193 = ssub.s32 %s23, %s30
      %p194 = scmp.eq.s32.totalorder %s193, 0
      %s196 = sadd.s32 %s195, 1
      %s197 = scalar_select %p194, %s195, %s196
      %p200 = pneg %p194
      %p201 = scmp.eq.s32.totalorder %s23, 1
      %p202 = por %p200, %p201
      %p203 = scmp.ne.s32.totalorder %s195, %s198
      %p204 = scmp.eq.s32.totalorder %s23, 0
      %p205 = por %p203, %p204
      %p206 = scmp.ne.s32.totalorder %s195, %s198
      %p207 = scmp.eq.s32.totalorder %s28, 1
      %p208 = por %p206, %p207
      %p209 = scmp.ne.s32.totalorder %s198, %s199
      %p210 = scmp.eq.s32.totalorder %s28, 0
      %p211 = por %p209, %p210
      %p212 = scmp.ne.s32.totalorder %s198, %s199
      %p213 = scmp.eq.s32.totalorder %s29, 1
      %p214 = por %p212, %p213
      %p216 = scmp.ne.s32.totalorder %s199, %s215
      %p217 = scmp.eq.s32.totalorder %s29, 0
      %p218 = por %p216, %p217
      %p219 = scmp.le.s32.totalorder 1, %s23
      %p220 = scmp.lt.s32.totalorder %s23, 3
      %p221 = pnand %p219, %p220
      %p222 = pneg %p221
      // Predicated region
      $region9: #{tpu_custom_call.1} parent=5 // pred_check
        _
      $region10: #{tpu_custom_call.1} parent=5 // pred_check_branch
        %224 = sbr.rel (%p221) target = $region12
      $region11: #{tpu_custom_call.1} parent=5 // pred_region
        %s225 = ssub.s32 %s23, 1
        // Predicated region
        $region13: #{tpu_custom_call.1} parent=11 // pred_check
          %p226 = pneg %p122
        $region14: #{tpu_custom_call.1} parent=11 // pred_check_branch
          %228 = sbr.rel (%p226) target = $region16
        $region15: #{tpu_custom_call.1} parent=11 // pred_region
          %s230 = ssub.s32 768, 768
          %231 = vsyncadd [#allocation9], %s230
          %s232 = sshll.u32 [#allocation8], 4
          %s233 = int_to_ptr.vmem [resolvable:$true] %s232
          %238 = dma.hbm_to_vmem [thread:$0]  %s3, 768, %s233, [#allocation9], 64, 64, 4
        $region16: #{tpu_custom_call.1} parent=11 // pred_fallthru
          _
        // Predicated region
        $region17: #{tpu_custom_call.1} parent=11 // pred_check
          %p239 = pneg %p143
        $region18: #{tpu_custom_call.1} parent=11 // pred_check_branch
          %241 = sbr.rel (%p239) target = $region20
        $region19: #{tpu_custom_call.1} parent=11 // pred_region
          _
        $region20: #{tpu_custom_call.1} parent=11 // pred_fallthru
          _
        // Predicated region
        $region21: #{tpu_custom_call.1} parent=11 // pred_check
          %p242 = pneg %p164
        $region22: #{tpu_custom_call.1} parent=11 // pred_check_branch
          %244 = sbr.rel (%p242) target = $region24
        $region23: #{tpu_custom_call.1} parent=11 // pred_region
          %s246 = ssub.s32 256, 256
          %247 = vsyncadd [#allocation9], %s246
          %s248 = sshll.u32 [#allocation10], 4
          %s249 = int_to_ptr.vmem [resolvable:$true] %s248
          %254 = dma.hbm_to_vmem [thread:$0]  %s5, 256, %s249, [#allocation9], 64, 64, 4
        $region24: #{tpu_custom_call.1} parent=11 // pred_fallthru
          _
        // Predicated region
        $region25: #{tpu_custom_call.1} parent=11 // pred_check
          %p255 = pneg %p185
        $region26: #{tpu_custom_call.1} parent=11 // pred_check_branch
          %257 = sbr.rel (%p255) target = $region28
        $region27: #{tpu_custom_call.1} parent=11 // pred_region
          _
        $region28: #{tpu_custom_call.1} parent=11 // pred_fallthru
          _
      $region12: #{tpu_custom_call.1} parent=5 // pred_fallthru
        _
      %p258 = scmp.lt.s32.totalorder %s23, 2
      // Predicated region
      $region29: #{tpu_custom_call.1} parent=5 // pred_check
        %p259 = pneg %p258
      $region30: #{tpu_custom_call.1} parent=5 // pred_check_branch
        %261 = sbr.rel (%p259) target = $region32
      $region31: #{tpu_custom_call.1} parent=5 // pred_region
        // Predicated region
        $region33: #{tpu_custom_call.1} parent=31 // pred_check
          %p262 = pneg %p43
        $region34: #{tpu_custom_call.1} parent=31 // pred_check_branch
          %264 = sbr.rel (%p262) target = $region36
        $region35: #{tpu_custom_call.1} parent=31 // pred_region
          %s265 = sand.u32 %s33, 1
          %s266 = scalar_lea.sflag [#allocation3], %s265
          %s267 = sand.u32 %s33, 1
          %s268 = smul.addr %s267, 8
          %s269 = scalar_lea.vmem [#allocation2], %s268
          %s271 = ssub.s32 128, 128
          %272 = vsyncadd %s266, %s271
          %s273 = smul.addr %s23, 128
          %s274 = scalar_lea.hbm %s0, %s273
          %s276 = sshll.u32 %s269, 4
          %s277 = int_to_ptr.vmem [resolvable:$true] %s276
          %279 = dma.hbm_to_vmem [thread:$0]  %s274, 128, %s277, %s266
        $region36: #{tpu_custom_call.1} parent=31 // pred_fallthru
          _
        // Predicated region
        $region37: #{tpu_custom_call.1} parent=31 // pred_check
          %p280 = pneg %p69
        $region38: #{tpu_custom_call.1} parent=31 // pred_check_branch
          %282 = sbr.rel (%p280) target = $region40
        $region39: #{tpu_custom_call.1} parent=31 // pred_region
          %s283 = sand.u32 %s23, 1
          %s284 = scalar_lea.sflag [#allocation6], %s283
          %s285 = sand.u32 %s59, 1
          %s286 = smul.addr %s285, 8
          %s287 = scalar_lea.vmem [#allocation5], %s286
          %s289 = ssub.s32 128, 128
          %290 = vsyncadd %s284, %s289
          %s291 = smul.addr %s23, 128
          %s292 = scalar_lea.hbm %s1, %s291
          %s294 = sshll.u32 %s287, 4
          %s295 = int_to_ptr.vmem [resolvable:$true] %s294
          %297 = dma.hbm_to_vmem [thread:$0]  %s292, 128, %s295, %s284
        $region40: #{tpu_custom_call.1} parent=31 // pred_fallthru
          _
        // Predicated region
        $region41: #{tpu_custom_call.1} parent=31 // pred_check
          %p298 = pneg %p95
        $region42: #{tpu_custom_call.1} parent=31 // pred_check_branch
          %300 = sbr.rel (%p298) target = $region44
        $region43: #{tpu_custom_call.1} parent=31 // pred_region
          %s301 = sand.u32 %s23, 1
          %s302 = scalar_lea.sflag [#allocation6], %s301
          %s303 = sand.u32 %s85, 1
          %s304 = smul.addr %s303, 8
          %s305 = scalar_lea.vmem [#allocation7], %s304
          %s307 = ssub.s32 128, 128
          %308 = vsyncadd %s302, %s307
          %s309 = smul.addr %s23, 128
          %s310 = scalar_lea.hbm %s2, %s309
          %s312 = sshll.u32 %s305, 4
          %s313 = int_to_ptr.vmem [resolvable:$true] %s312
          %315 = dma.hbm_to_vmem [thread:$0]  %s310, 128, %s313, %s302
        $region44: #{tpu_custom_call.1} parent=31 // pred_fallthru
          _
      $region32: #{tpu_custom_call.1} parent=5 // pred_fallthru
        _
      %p316 = scmp.le.s32.totalorder 1, %s23
      %p317 = scmp.lt.s32.totalorder %s23, 3
      %p318 = pnand %p316, %p317
      %p319 = pneg %p318
      // Predicated region
      $region45: #{tpu_custom_call.1} parent=5 // pred_check
        _
      $region46: #{tpu_custom_call.1} parent=5 // pred_check_branch
        %321 = sbr.rel (%p318) target = $region48
      $region47: #{tpu_custom_call.1} parent=5 // pred_region
        %s322 = ssub.s32 %s23, 1
        %s323 = sand.u32 %s36, 1
        %s324 = scalar_lea.sflag [#allocation3], %s323
        %s325 = sand.u32 %s36, 1
        %s326 = smul.addr %s325, 8
        %s327 = scalar_lea.vmem [#allocation2], %s326
        // Predicated region
        $region49: #{tpu_custom_call.1} parent=47 // pred_check
          %p328 = pneg %p49
        $region50: #{tpu_custom_call.1} parent=47 // pred_check_branch
          %330 = sbr.rel (%p328) target = $region52
        $region51: #{tpu_custom_call.1} parent=47 // pred_region
          %331 = dma.done %s324, 128
        $region52: #{tpu_custom_call.1} parent=47 // pred_fallthru
          _
        %s332 = sand.u32 %s28, 1
        %s333 = scalar_lea.sflag [#allocation6], %s332
        %s334 = sand.u32 %s62, 1
        %s335 = smul.addr %s334, 8
        %s336 = scalar_lea.vmem [#allocation5], %s335
        // Predicated region
        $region53: #{tpu_custom_call.1} parent=47 // pred_check
          %p337 = pneg %p75
        $region54: #{tpu_custom_call.1} parent=47 // pred_check_branch
          %339 = sbr.rel (%p337) target = $region56
        $region55: #{tpu_custom_call.1} parent=47 // pred_region
          %340 = dma.done %s333, 128
        $region56: #{tpu_custom_call.1} parent=47 // pred_fallthru
          _
        %s341 = sand.u32 %s28, 1
        %s342 = scalar_lea.sflag [#allocation6], %s341
        %s343 = sand.u32 %s88, 1
        %s344 = smul.addr %s343, 8
        %s345 = scalar_lea.vmem [#allocation7], %s344
        // Predicated region
        $region57: #{tpu_custom_call.1} parent=47 // pred_check
          %p346 = pneg %p101
        $region58: #{tpu_custom_call.1} parent=47 // pred_check_branch
          %348 = sbr.rel (%p346) target = $region60
        $region59: #{tpu_custom_call.1} parent=47 // pred_region
          %349 = dma.done %s342, 128
        $region60: #{tpu_custom_call.1} parent=47 // pred_fallthru
          _
        // Predicated region
        $region61: #{tpu_custom_call.1} parent=47 // pred_check
          %p350 = pneg %p122
        $region62: #{tpu_custom_call.1} parent=47 // pred_check_branch
          %352 = sbr.rel (%p350) target = $region64
        $region63: #{tpu_custom_call.1} parent=47 // pred_region
          %353 = dma.done [#allocation9], 768
        $region64: #{tpu_custom_call.1} parent=47 // pred_fallthru
          _
        // Predicated region
        $region65: #{tpu_custom_call.1} parent=47 // pred_check
          %p354 = pneg %p164
        $region66: #{tpu_custom_call.1} parent=47 // pred_check_branch
          %356 = sbr.rel (%p354) target = $region68
        $region67: #{tpu_custom_call.1} parent=47 // pred_region
          %357 = dma.done [#allocation9], 256
        $region68: #{tpu_custom_call.1} parent=47 // pred_fallthru
          _
        %s358 = sand.u32 %s36, 1
        %s359 = scalar_lea.sflag [#allocation3], %s358
        %s360 = sand.u32 %s36, 1
        %s361 = smul.addr %s360, 8
        %s362 = scalar_lea.vmem [#allocation2], %s361
        %p363 = pneg %p49
        %p364 = pneg %p46
        %s365 = sand.u32 %s28, 1
        %s366 = scalar_lea.sflag [#allocation6], %s365
        %s367 = sand.u32 %s62, 1
        %s368 = smul.addr %s367, 8
        %s369 = scalar_lea.vmem [#allocation5], %s368
        %p370 = pneg %p75
        %p371 = pneg %p72
        %s372 = sand.u32 %s28, 1
        %s373 = scalar_lea.sflag [#allocation6], %s372
        %s374 = sand.u32 %s88, 1
        %s375 = smul.addr %s374, 8
        %s376 = scalar_lea.vmem [#allocation7], %s375
        %p377 = pneg %p101
        %p378 = pneg %p98
        %p379 = pneg %p122
        %p380 = pneg %p119
        %p381 = pneg %p143
        %p382 = pneg %p140
        %p383 = pneg %p164
        %p384 = pneg %p161
        %p385 = pneg %p185
        %p386 = pneg %p182
        %p387 = pneg %p211
        %p388 = pneg %p208
        %s389 = sand.u32 %s198, 1
        %s390 = scalar_lea.sflag [#allocation4], %s389
        %s391 = sand.u32 %s198, 1
        %s392 = smul.addr %s391, 8
        %s393 = scalar_lea.vmem [#allocation11], %s392
        %v395 = vld [vmem:[%s327] sm:$0xff]
        %v396 = vpack.c.bf16 %v395, %v395
        %v397 = vld [vmem:[#allocation8] sm:$0xf]
        %v398 = vld [vmem:[#allocation8 + $0x4] sm:$0xf]
        %v399 = vld [vmem:[#allocation8 + $0x8] sm:$0xf]
        %v400 = vld [vmem:[#allocation8 + $0xc] sm:$0xf]
        %v401 = vld [vmem:[%s4] sm:$0x1]
        %v403 = vlaneseq
        %v404 = vshrl.u32 %v403, 7
        %v405 = vsub.s32 0, %v404
        %v406 = vrot.slane %v401, %v405
        %v412 = vunpack.c.l.b16 %v397
        %v413 = vunpack.c.l.b16 %v398
        %v414 = vunpack.c.l.b16 %v399
        %v415 = vunpack.c.l.b16 %v400
        %v416 = vpack.c.b16 %v413, %v412
        %v417 = vpack.c.b16 %v415, %v414
        %vm420 = vcmask 261120
        %v422 = vsel %vm420, %v396, 0
        %424 = vmatprep.subr.bf16.mxu0 0
        %425 = vmatpush1.bf16.msra.mxu0 0
        %426 = vmatprep.subr.bf16.mxu0 0
        %427 = vmatpush1.bf16.msra.mxu0 0
        %428 = vmatprep.subr.bf16.mxu0 0
        %429 = vmatpush1.bf16.msra.mxu0 0
        %430 = vmatprep.subr.bf16.mxu0 0
        %431 = vmatpush1.bf16.msra.mxu0 0
        %432 = vmatprep.subr.bf16.mxu0 0
        %433 = vmatpush1.bf16.msra.mxu0 0
        %434 = vmatprep.subr.bf16.mxu0 0
        %435 = vmatpush1.bf16.msra.mxu0 0
        %436 = vmatprep.subr.bf16.mxu0 0
        %437 = vmatpush1.bf16.msra.mxu0 %v417
        %438 = vmatprep.subr.bf16.mxu0 0
        %439 = vmatpush1.bf16.msra.mxu0 %v416
        %440 = vmatprep.subr.bf16.mxu0 0
        %441 = vmatpush2.bf16.msra.mxu0 0
        %442 = vmatprep.subr.bf16.mxu0 0
        %443 = vmatpush2.bf16.msra.mxu0 0
        %444 = vmatprep.subr.bf16.mxu0 0
        %445 = vmatpush2.bf16.msra.mxu0 0
        %446 = vmatprep.subr.bf16.mxu0 0
        %447 = vmatpush2.bf16.msra.mxu0 0
        %448 = vmatprep.subr.bf16.mxu0 0
        %449 = vmatpush2.bf16.msra.mxu0 0
        %450 = vmatprep.subr.bf16.mxu0 0
        %451 = vmatpush2.bf16.msra.mxu0 0
        %452 = vmatprep.subr.bf16.mxu0 0
        %453 = vmatpush2.bf16.msra.mxu0 0
        %454 = vmatprep.subr.bf16.mxu0 0
        %455 = vmatpush2.bf16.msra.mxu0 0
        %456 = vmatprep.mubr.bf16.mxu0 0
        %457 = vmatmul.mubr.bf16.gmra.mxu0 %v422
        %v458 = vpop.f32.mrf.mxu0
        %v459 = vadd.f32 %v406, %v458
        %v460 = vpop.f32.mrf.mxu0
        %v461 = vpop.f32.mrf.mxu0
        %v462 = vpop.f32.mrf.mxu0
        %463 = vdwg.mxu0
        %v464 = vpack.c.bf16 %v459, %v459
        %v465 = vld [vmem:[%s336] sm:$0xff]
        %v466 = vpack.c.bf16 %v465, %v465
        %s467 = scalar_lea.vmem [#allocation8], 16
        %v468 = vld [vmem:[%s467] sm:$0xf]
        %v469 = vld [vmem:[%s467 + $0x4] sm:$0xf]
        %v470 = vld [vmem:[%s467 + $0x8] sm:$0xf]
        %v471 = vld [vmem:[%s467 + $0xc] sm:$0xf]
        %s472 = scalar_lea.vmem %s4, 1
        %v473 = vld [vmem:[%s472] sm:$0x1]
        %v475 = vlaneseq
        %v476 = vshrl.u32 %v475, 7
        %v477 = vsub.s32 0, %v476
        %v478 = vrot.slane %v473, %v477
        %v484 = vunpack.c.l.b16 %v468
        %v485 = vunpack.c.l.b16 %v469
        %v486 = vunpack.c.l.b16 %v470
        %v487 = vunpack.c.l.b16 %v471
        %v488 = vpack.c.b16 %v485, %v484
        %v489 = vpack.c.b16 %v487, %v486
        %v493 = vsel %vm420, %v466, 0
        %495 = vmatprep.subr.bf16.mxu0 0
        %496 = vmatpush1.bf16.msra.mxu0 0
        %497 = vmatprep.subr.bf16.mxu0 0
        %498 = vmatpush1.bf16.msra.mxu0 0
        %499 = vmatprep.subr.bf16.mxu0 0
        %500 = vmatpush1.bf16.msra.mxu0 0
        %501 = vmatprep.subr.bf16.mxu0 0
        %502 = vmatpush1.bf16.msra.mxu0 0
        %503 = vmatprep.subr.bf16.mxu0 0
        %504 = vmatpush1.bf16.msra.mxu0 0
        %505 = vmatprep.subr.bf16.mxu0 0
        %506 = vmatpush1.bf16.msra.mxu0 0
        %507 = vmatprep.subr.bf16.mxu0 0
        %508 = vmatpush1.bf16.msra.mxu0 %v489
        %509 = vmatprep.subr.bf16.mxu0 0
        %510 = vmatpush1.bf16.msra.mxu0 %v488
        %511 = vmatprep.subr.bf16.mxu0 0
        %512 = vmatpush2.bf16.msra.mxu0 0
        %513 = vmatprep.subr.bf16.mxu0 0
        %514 = vmatpush2.bf16.msra.mxu0 0
        %515 = vmatprep.subr.bf16.mxu0 0
        %516 = vmatpush2.bf16.msra.mxu0 0
        %517 = vmatprep.subr.bf16.mxu0 0
        %518 = vmatpush2.bf16.msra.mxu0 0
        %519 = vmatprep.subr.bf16.mxu0 0
        %520 = vmatpush2.bf16.msra.mxu0 0
        %521 = vmatprep.subr.bf16.mxu0 0
        %522 = vmatpush2.bf16.msra.mxu0 0
        %523 = vmatprep.subr.bf16.mxu0 0
        %524 = vmatpush2.bf16.msra.mxu0 0
        %525 = vmatprep.subr.bf16.mxu0 0
        %526 = vmatpush2.bf16.msra.mxu0 0
        %527 = vmatprep.mubr.bf16.mxu0 0
        %528 = vmatmul.mubr.bf16.gmra.mxu0 %v493
        %v529 = vpop.f32.mrf.mxu0
        %v530 = vadd.f32 %v478, %v529
        %v531 = vpop.f32.mrf.mxu0
        %v532 = vpop.f32.mrf.mxu0
        %v533 = vpop.f32.mrf.mxu0
        %534 = vdwg.mxu0
        %v535 = vpack.c.bf16 %v530, %v530
        %v536 = vld [vmem:[%s345] sm:$0xff]
        %v537 = vpack.c.bf16 %v536, %v536
        %s538 = scalar_lea.vmem [#allocation8], 32
        %v539 = vld [vmem:[%s538] sm:$0xf]
        %v540 = vld [vmem:[%s538 + $0x4] sm:$0xf]
        %v541 = vld [vmem:[%s538 + $0x8] sm:$0xf]
        %v542 = vld [vmem:[%s538 + $0xc] sm:$0xf]
        %s543 = scalar_lea.vmem %s4, 2
        %v544 = vld [vmem:[%s543] sm:$0x1]
        %v546 = vlaneseq
        %v547 = vshrl.u32 %v546, 7
        %v548 = vsub.s32 0, %v547
        %v549 = vrot.slane %v544, %v548
        %v555 = vunpack.c.l.b16 %v539
        %v556 = vunpack.c.l.b16 %v540
        %v557 = vunpack.c.l.b16 %v541
        %v558 = vunpack.c.l.b16 %v542
        %v559 = vpack.c.b16 %v556, %v555
        %v560 = vpack.c.b16 %v558, %v557
        %v564 = vsel %vm420, %v537, 0
        %566 = vmatprep.subr.bf16.mxu0 0
        %567 = vmatpush1.bf16.msra.mxu0 0
        %568 = vmatprep.subr.bf16.mxu0 0
        %569 = vmatpush1.bf16.msra.mxu0 0
        %570 = vmatprep.subr.bf16.mxu0 0
        %571 = vmatpush1.bf16.msra.mxu0 0
        %572 = vmatprep.subr.bf16.mxu0 0
        %573 = vmatpush1.bf16.msra.mxu0 0
        %574 = vmatprep.subr.bf16.mxu0 0
        %575 = vmatpush1.bf16.msra.mxu0 0
        %576 = vmatprep.subr.bf16.mxu0 0
        %577 = vmatpush1.bf16.msra.mxu0 0
        %578 = vmatprep.subr.bf16.mxu0 0
        %579 = vmatpush1.bf16.msra.mxu0 %v560
        %580 = vmatprep.subr.bf16.mxu0 0
        %581 = vmatpush1.bf16.msra.mxu0 %v559
        %582 = vmatprep.subr.bf16.mxu0 0
        %583 = vmatpush2.bf16.msra.mxu0 0
        %584 = vmatprep.subr.bf16.mxu0 0
        %585 = vmatpush2.bf16.msra.mxu0 0
        %586 = vmatprep.subr.bf16.mxu0 0
        %587 = vmatpush2.bf16.msra.mxu0 0
        %588 = vmatprep.subr.bf16.mxu0 0
        %589 = vmatpush2.bf16.msra.mxu0 0
        %590 = vmatprep.subr.bf16.mxu0 0
        %591 = vmatpush2.bf16.msra.mxu0 0
        %592 = vmatprep.subr.bf16.mxu0 0
        %593 = vmatpush2.bf16.msra.mxu0 0
        %594 = vmatprep.subr.bf16.mxu0 0
        %595 = vmatpush2.bf16.msra.mxu0 0
        %596 = vmatprep.subr.bf16.mxu0 0
        %597 = vmatpush2.bf16.msra.mxu0 0
        %598 = vmatprep.mubr.bf16.mxu0 0
        %599 = vmatmul.mubr.bf16.gmra.mxu0 %v564
        %v600 = vpop.f32.mrf.mxu0
        %v601 = vadd.f32 %v549, %v600
        %v602 = vpop.f32.mrf.mxu0
        %v603 = vpop.f32.mrf.mxu0
        %v604 = vpop.f32.mrf.mxu0
        %605 = vdwg.mxu0
        %v606 = vpack.c.bf16 %v601, %v601
        %v607 = vld [vmem:[#allocation10] sm:$0xf]
        %v608 = vld [vmem:[#allocation10 + $0x4] sm:$0xf]
        %v609 = vld [vmem:[#allocation10 + $0x8] sm:$0xf]
        %v610 = vld [vmem:[#allocation10 + $0xc] sm:$0xf]
        %vm611 = vcmask 64512
        %v613 = vsel %vm611, %v464, 0
        %v616 = vsel %vm611, %v535, 0
        %618 = vmatprep.subr.bf16.mxu0 0
        %619 = vmatpush1.bf16.xpose.msra.mxu0 0
        %620 = vmatprep.subr.bf16.mxu0 0
        %621 = vmatpush1.bf16.xpose.msra.mxu0 0
        %622 = vmatprep.subr.bf16.mxu0 0
        %623 = vmatpush1.bf16.xpose.msra.mxu0 0
        %624 = vmatprep.subr.bf16.mxu0 0
        %625 = vmatpush1.bf16.xpose.msra.mxu0 0
        %626 = vmatprep.subr.bf16.mxu0 0
        %627 = vmatpush1.bf16.xpose.msra.mxu0 0
        %628 = vmatprep.subr.bf16.mxu0 0
        %629 = vmatpush1.bf16.xpose.msra.mxu0 0
        %630 = vmatprep.subr.bf16.mxu0 0
        %631 = vmatpush1.bf16.xpose.msra.mxu0 0
        %632 = vmatprep.subr.bf16.mxu0 0
        %633 = vmatpush1.bf16.xpose.msra.mxu0 %v616
        %634 = vmatprep.subr.bf16.mxu0 0
        %635 = vmatpush2.bf16.xpose.msra.mxu0 0
        %636 = vmatprep.subr.bf16.mxu0 0
        %637 = vmatpush2.bf16.xpose.msra.mxu0 0
        %638 = vmatprep.subr.bf16.mxu0 0
        %639 = vmatpush2.bf16.xpose.msra.mxu0 0
        %640 = vmatprep.subr.bf16.mxu0 0
        %641 = vmatpush2.bf16.xpose.msra.mxu0 0
        %642 = vmatprep.subr.bf16.mxu0 0
        %643 = vmatpush2.bf16.xpose.msra.mxu0 0
        %644 = vmatprep.subr.bf16.mxu0 0
        %645 = vmatpush2.bf16.xpose.msra.mxu0 0
        %646 = vmatprep.subr.bf16.mxu0 0
        %647 = vmatpush2.bf16.xpose.msra.mxu0 0
        %648 = vmatprep.subr.bf16.mxu0 0
        %649 = vmatpush2.bf16.xpose.msra.mxu0 0
        %650 = vmatprep.mubr.bf16.mxu0 0
        %651 = vmatmul.mubr.bf16.gmra.mxu0 %v613
        %v652 = vpop.f32.mrf.mxu0
        %v653 = vadd.f32 0.0, %v652
        %v654 = vpop.f32.mrf.mxu0
        %v655 = vpop.f32.mrf.mxu0
        %v656 = vpop.f32.mrf.mxu0
        %657 = vdwg.mxu0
        %v658 = vsel %vm611, %v653, -inf
        %659 = vmax.xlane.f32.xlu0 %v658
        %v660 = vpop.xlane.xlu0 %659
        %v661 = vsub.f32 %v653, %v660
        %v662 = vmul.f32 %v661, 1.442695
        %v663 = vpow.pop %v662
        %v664 = vsel %vm611, %v663, 0.0
        %665 = vadd.xlane.f32.xlu0 %v664
        %v666 = vpop.xlane.xlu0 %665
        %v667 = vrcp.pop %v666
        %v668 = vmul.f32 %v663, %v667
        %v669 = vpack.c.bf16 %v668, %v668
        %v671 = vsel %vm611, %v669, 0
        %vm673 = vcmask 1043456
        %v675 = vsel %vm673, %v606, 0
        %677 = vmatprep.subr.bf16.mxu0 0
        %678 = vmatpush1.bf16.msra.mxu0 0
        %679 = vmatprep.subr.bf16.mxu0 0
        %680 = vmatpush1.bf16.msra.mxu0 0
        %681 = vmatprep.subr.bf16.mxu0 0
        %682 = vmatpush1.bf16.msra.mxu0 0
        %683 = vmatprep.subr.bf16.mxu0 0
        %684 = vmatpush1.bf16.msra.mxu0 0
        %685 = vmatprep.subr.bf16.mxu0 0
        %686 = vmatpush1.bf16.msra.mxu0 0
        %687 = vmatprep.subr.bf16.mxu0 0
        %688 = vmatpush1.bf16.msra.mxu0 0
        %689 = vmatprep.subr.bf16.mxu0 0
        %690 = vmatpush1.bf16.msra.mxu0 0
        %691 = vmatprep.subr.bf16.mxu0 0
        %692 = vmatpush1.bf16.msra.mxu0 %v675
        %693 = vmatprep.subr.bf16.mxu0 0
        %694 = vmatpush2.bf16.msra.mxu0 0
        %695 = vmatprep.subr.bf16.mxu0 0
        %696 = vmatpush2.bf16.msra.mxu0 0
        %697 = vmatprep.subr.bf16.mxu0 0
        %698 = vmatpush2.bf16.msra.mxu0 0
        %699 = vmatprep.subr.bf16.mxu0 0
        %700 = vmatpush2.bf16.msra.mxu0 0
        %701 = vmatprep.subr.bf16.mxu0 0
        %702 = vmatpush2.bf16.msra.mxu0 0
        %703 = vmatprep.subr.bf16.mxu0 0
        %704 = vmatpush2.bf16.msra.mxu0 0
        %705 = vmatprep.subr.bf16.mxu0 0
        %706 = vmatpush2.bf16.msra.mxu0 0
        %707 = vmatprep.subr.bf16.mxu0 0
        %708 = vmatpush2.bf16.msra.mxu0 0
        %709 = vmatprep.mubr.bf16.mxu0 0
        %710 = vmatmul.mubr.bf16.gmra.mxu0 %v671
        %v711 = vpop.f32.mrf.mxu0
        %v712 = vadd.f32 0.0, %v711
        %v713 = vpop.f32.mrf.mxu0
        %v714 = vpop.f32.mrf.mxu0
        %v715 = vpop.f32.mrf.mxu0
        %716 = vdwg.mxu0
        %v717 = vpack.c.bf16 %v712, %v712
        %719 = vrot.lane.b32.xlu0 %v464, 120
        %v720 = vpop.permute.xlu0 %719
        %722 = vrot.lane.b32.xlu0 %v535, 120
        %v723 = vpop.permute.xlu0 %722
        %v725 = vsel %vm611, %v720, 0
        %v728 = vsel %vm611, %v723, 0
        %730 = vmatprep.subr.bf16.mxu0 0
        %731 = vmatpush1.bf16.xpose.msra.mxu0 0
        %732 = vmatprep.subr.bf16.mxu0 0
        %733 = vmatpush1.bf16.xpose.msra.mxu0 0
        %734 = vmatprep.subr.bf16.mxu0 0
        %735 = vmatpush1.bf16.xpose.msra.mxu0 0
        %736 = vmatprep.subr.bf16.mxu0 0
        %737 = vmatpush1.bf16.xpose.msra.mxu0 0
        %738 = vmatprep.subr.bf16.mxu0 0
        %739 = vmatpush1.bf16.xpose.msra.mxu0 0
        %740 = vmatprep.subr.bf16.mxu0 0
        %741 = vmatpush1.bf16.xpose.msra.mxu0 0
        %742 = vmatprep.subr.bf16.mxu0 0
        %743 = vmatpush1.bf16.xpose.msra.mxu0 0
        %744 = vmatprep.subr.bf16.mxu0 0
        %745 = vmatpush1.bf16.xpose.msra.mxu0 %v728
        %746 = vmatprep.subr.bf16.mxu0 0
        %747 = vmatpush2.bf16.xpose.msra.mxu0 0
        %748 = vmatprep.subr.bf16.mxu0 0
        %749 = vmatpush2.bf16.xpose.msra.mxu0 0
        %750 = vmatprep.subr.bf16.mxu0 0
        %751 = vmatpush2.bf16.xpose.msra.mxu0 0
        %752 = vmatprep.subr.bf16.mxu0 0
        %753 = vmatpush2.bf16.xpose.msra.mxu0 0
        %754 = vmatprep.subr.bf16.mxu0 0
        %755 = vmatpush2.bf16.xpose.msra.mxu0 0
        %756 = vmatprep.subr.bf16.mxu0 0
        %757 = vmatpush2.bf16.xpose.msra.mxu0 0
        %758 = vmatprep.subr.bf16.mxu0 0
        %759 = vmatpush2.bf16.xpose.msra.mxu0 0
        %760 = vmatprep.subr.bf16.mxu0 0
        %761 = vmatpush2.bf16.xpose.msra.mxu0 0
        %762 = vmatprep.mubr.bf16.mxu0 0
        %763 = vmatmul.mubr.bf16.gmra.mxu0 %v725
        %v764 = vpop.f32.mrf.mxu0
        %v765 = vadd.f32 0.0, %v764
        %v766 = vpop.f32.mrf.mxu0
        %v767 = vpop.f32.mrf.mxu0
        %v768 = vpop.f32.mrf.mxu0
        %769 = vdwg.mxu0
        %v770 = vsel %vm611, %v765, -inf
        %771 = vmax.xlane.f32.xlu0 %v770
        %v772 = vpop.xlane.xlu0 %771
        %v773 = vsub.f32 %v765, %v772
        %v774 = vmul.f32 %v773, 1.442695
        %v775 = vpow.pop %v774
        %v776 = vsel %vm611, %v775, 0.0
        %777 = vadd.xlane.f32.xlu0 %v776
        %v778 = vpop.xlane.xlu0 %777
        %v779 = vrcp.pop %v778
        %v780 = vmul.f32 %v775, %v779
        %v781 = vpack.c.bf16 %v780, %v780
        %783 = vrot.lane.b32.xlu0 %v606, 120
        %v784 = vpop.permute.xlu0 %783
        %v786 = vsel %vm611, %v781, 0
        %v789 = vsel %vm673, %v784, 0
        %791 = vmatprep.subr.bf16.mxu0 0
        %792 = vmatpush1.bf16.msra.mxu0 0
        %793 = vmatprep.subr.bf16.mxu0 0
        %794 = vmatpush1.bf16.msra.mxu0 0
        %795 = vmatprep.subr.bf16.mxu0 0
        %796 = vmatpush1.bf16.msra.mxu0 0
        %797 = vmatprep.subr.bf16.mxu0 0
        %798 = vmatpush1.bf16.msra.mxu0 0
        %799 = vmatprep.subr.bf16.mxu0 0
        %800 = vmatpush1.bf16.msra.mxu0 0
        %801 = vmatprep.subr.bf16.mxu0 0
        %802 = vmatpush1.bf16.msra.mxu0 0
        %803 = vmatprep.subr.bf16.mxu0 0
        %804 = vmatpush1.bf16.msra.mxu0 0
        %805 = vmatprep.subr.bf16.mxu0 0
        %806 = vmatpush1.bf16.msra.mxu0 %v789
        %807 = vmatprep.subr.bf16.mxu0 0
        %808 = vmatpush2.bf16.msra.mxu0 0
        %809 = vmatprep.subr.bf16.mxu0 0
        %810 = vmatpush2.bf16.msra.mxu0 0
        %811 = vmatprep.subr.bf16.mxu0 0
        %812 = vmatpush2.bf16.msra.mxu0 0
        %813 = vmatprep.subr.bf16.mxu0 0
        %814 = vmatpush2.bf16.msra.mxu0 0
        %815 = vmatprep.subr.bf16.mxu0 0
        %816 = vmatpush2.bf16.msra.mxu0 0
        %817 = vmatprep.subr.bf16.mxu0 0
        %818 = vmatpush2.bf16.msra.mxu0 0
        %819 = vmatprep.subr.bf16.mxu0 0
        %820 = vmatpush2.bf16.msra.mxu0 0
        %821 = vmatprep.subr.bf16.mxu0 0
        %822 = vmatpush2.bf16.msra.mxu0 0
        %823 = vmatprep.mubr.bf16.mxu0 0
        %824 = vmatmul.mubr.bf16.gmra.mxu0 %v786
        %v825 = vpop.f32.mrf.mxu0
        %v826 = vadd.f32 0.0, %v825
        %v827 = vpop.f32.mrf.mxu0
        %v828 = vpop.f32.mrf.mxu0
        %v829 = vpop.f32.mrf.mxu0
        %830 = vdwg.mxu0
        %v831 = vpack.c.bf16 %v826, %v826
        %v833 = vsel %vm611, %v831, 0
        %v836 = vsel %vm673, %v608, 0
        %838 = vmatprep.subr.bf16.mxu0 0
        %839 = vmatpush1.bf16.msra.mxu0 0
        %840 = vmatprep.subr.bf16.mxu0 0
        %841 = vmatpush1.bf16.msra.mxu0 0
        %842 = vmatprep.subr.bf16.mxu0 0
        %843 = vmatpush1.bf16.msra.mxu0 0
        %844 = vmatprep.subr.bf16.mxu0 0
        %845 = vmatpush1.bf16.msra.mxu0 0
        %846 = vmatprep.subr.bf16.mxu0 0
        %847 = vmatpush1.bf16.msra.mxu0 0
        %848 = vmatprep.subr.bf16.mxu0 0
        %849 = vmatpush1.bf16.msra.mxu0 0
        %850 = vmatprep.subr.bf16.mxu0 0
        %851 = vmatpush1.bf16.msra.mxu0 0
        %852 = vmatprep.subr.bf16.mxu0 0
        %853 = vmatpush1.bf16.msra.mxu0 %v836
        %854 = vmatprep.subr.bf16.mxu0 0
        %855 = vmatpush2.bf16.msra.mxu0 0
        %856 = vmatprep.subr.bf16.mxu0 0
        %857 = vmatpush2.bf16.msra.mxu0 0
        %858 = vmatprep.subr.bf16.mxu0 0
        %859 = vmatpush2.bf16.msra.mxu0 0
        %860 = vmatprep.subr.bf16.mxu0 0
        %861 = vmatpush2.bf16.msra.mxu0 0
        %862 = vmatprep.subr.bf16.mxu0 0
        %863 = vmatpush2.bf16.msra.mxu0 0
        %864 = vmatprep.subr.bf16.mxu0 0
        %865 = vmatpush2.bf16.msra.mxu0 0
        %866 = vmatprep.subr.bf16.mxu0 0
        %867 = vmatpush2.bf16.msra.mxu0 0
        %868 = vmatprep.subr.bf16.mxu0 0
        %869 = vmatpush2.bf16.msra.mxu0 0
        %870 = vmatprep.mubr.bf16.mxu0 0
        %871 = vmatmul.mubr.bf16.gmra.mxu0 %v833
        %v872 = vpop.f32.mrf.mxu0
        %v873 = vadd.f32 0.0, %v872
        %v874 = vpop.f32.mrf.mxu0
        %v875 = vpop.f32.mrf.mxu0
        %v876 = vpop.f32.mrf.mxu0
        %877 = vdwg.mxu0
        %v879 = vsel %vm611, %v717, 0
        %v882 = vsel %vm673, %v607, 0
        %884 = vmatprep.subr.bf16.mxu0 0
        %885 = vmatpush1.bf16.msra.mxu0 0
        %886 = vmatprep.subr.bf16.mxu0 0
        %887 = vmatpush1.bf16.msra.mxu0 0
        %888 = vmatprep.subr.bf16.mxu0 0
        %889 = vmatpush1.bf16.msra.mxu0 0
        %890 = vmatprep.subr.bf16.mxu0 0
        %891 = vmatpush1.bf16.msra.mxu0 0
        %892 = vmatprep.subr.bf16.mxu0 0
        %893 = vmatpush1.bf16.msra.mxu0 0
        %894 = vmatprep.subr.bf16.mxu0 0
        %895 = vmatpush1.bf16.msra.mxu0 0
        %896 = vmatprep.subr.bf16.mxu0 0
        %897 = vmatpush1.bf16.msra.mxu0 0
        %898 = vmatprep.subr.bf16.mxu0 0
        %899 = vmatpush1.bf16.msra.mxu0 %v882
        %900 = vmatprep.subr.bf16.mxu0 0
        %901 = vmatpush2.bf16.msra.mxu0 0
        %902 = vmatprep.subr.bf16.mxu0 0
        %903 = vmatpush2.bf16.msra.mxu0 0
        %904 = vmatprep.subr.bf16.mxu0 0
        %905 = vmatpush2.bf16.msra.mxu0 0
        %906 = vmatprep.subr.bf16.mxu0 0
        %907 = vmatpush2.bf16.msra.mxu0 0
        %908 = vmatprep.subr.bf16.mxu0 0
        %909 = vmatpush2.bf16.msra.mxu0 0
        %910 = vmatprep.subr.bf16.mxu0 0
        %911 = vmatpush2.bf16.msra.mxu0 0
        %912 = vmatprep.subr.bf16.mxu0 0
        %913 = vmatpush2.bf16.msra.mxu0 0
        %914 = vmatprep.subr.bf16.mxu0 0
        %915 = vmatpush2.bf16.msra.mxu0 0
        %916 = vmatprep.mubr.bf16.mxu0 0
        %917 = vmatmul.mubr.bf16.gmra.mxu0 %v879
        %v918 = vpop.f32.mrf.mxu0
        %v919 = vadd.f32 %v873, %v918
        %v920 = vpop.f32.mrf.mxu0
        %v921 = vpop.f32.mrf.mxu0
        %v922 = vpop.f32.mrf.mxu0
        %923 = vdwg.mxu0
        %924 = vrot.lane.b32.xlu0 %v464, 112
        %v925 = vpop.permute.xlu0 %924
        %926 = vrot.lane.b32.xlu0 %v535, 112
        %v927 = vpop.permute.xlu0 %926
        %v929 = vsel %vm611, %v925, 0
        %v932 = vsel %vm611, %v927, 0
        %934 = vmatprep.subr.bf16.mxu0 0
        %935 = vmatpush1.bf16.xpose.msra.mxu0 0
        %936 = vmatprep.subr.bf16.mxu0 0
        %937 = vmatpush1.bf16.xpose.msra.mxu0 0
        %938 = vmatprep.subr.bf16.mxu0 0
        %939 = vmatpush1.bf16.xpose.msra.mxu0 0
        %940 = vmatprep.subr.bf16.mxu0 0
        %941 = vmatpush1.bf16.xpose.msra.mxu0 0
        %942 = vmatprep.subr.bf16.mxu0 0
        %943 = vmatpush1.bf16.xpose.msra.mxu0 0
        %944 = vmatprep.subr.bf16.mxu0 0
        %945 = vmatpush1.bf16.xpose.msra.mxu0 0
        %946 = vmatprep.subr.bf16.mxu0 0
        %947 = vmatpush1.bf16.xpose.msra.mxu0 0
        %948 = vmatprep.subr.bf16.mxu0 0
        %949 = vmatpush1.bf16.xpose.msra.mxu0 %v932
        %950 = vmatprep.subr.bf16.mxu0 0
        %951 = vmatpush2.bf16.xpose.msra.mxu0 0
        %952 = vmatprep.subr.bf16.mxu0 0
        %953 = vmatpush2.bf16.xpose.msra.mxu0 0
        %954 = vmatprep.subr.bf16.mxu0 0
        %955 = vmatpush2.bf16.xpose.msra.mxu0 0
        %956 = vmatprep.subr.bf16.mxu0 0
        %957 = vmatpush2.bf16.xpose.msra.mxu0 0
        %958 = vmatprep.subr.bf16.mxu0 0
        %959 = vmatpush2.bf16.xpose.msra.mxu0 0
        %960 = vmatprep.subr.bf16.mxu0 0
        %961 = vmatpush2.bf16.xpose.msra.mxu0 0
        %962 = vmatprep.subr.bf16.mxu0 0
        %963 = vmatpush2.bf16.xpose.msra.mxu0 0
        %964 = vmatprep.subr.bf16.mxu0 0
        %965 = vmatpush2.bf16.xpose.msra.mxu0 0
        %966 = vmatprep.mubr.bf16.mxu0 0
        %967 = vmatmul.mubr.bf16.gmra.mxu0 %v929
        %v968 = vpop.f32.mrf.mxu0
        %v969 = vadd.f32 0.0, %v968
        %v970 = vpop.f32.mrf.mxu0
        %v971 = vpop.f32.mrf.mxu0
        %v972 = vpop.f32.mrf.mxu0
        %973 = vdwg.mxu0
        %v974 = vsel %vm611, %v969, -inf
        %975 = vmax.xlane.f32.xlu0 %v974
        %v976 = vpop.xlane.xlu0 %975
        %v977 = vsub.f32 %v969, %v976
        %v978 = vmul.f32 %v977, 1.442695
        %v979 = vpow.pop %v978
        %v980 = vsel %vm611, %v979, 0.0
        %981 = vadd.xlane.f32.xlu0 %v980
        %v982 = vpop.xlane.xlu0 %981
        %v983 = vrcp.pop %v982
        %v984 = vmul.f32 %v979, %v983
        %v985 = vpack.c.bf16 %v984, %v984
        %986 = vrot.lane.b32.xlu0 %v606, 112
        %v987 = vpop.permute.xlu0 %986
        %v989 = vsel %vm611, %v985, 0
        %v992 = vsel %vm673, %v987, 0
        %994 = vmatprep.subr.bf16.mxu0 0
        %995 = vmatpush1.bf16.msra.mxu0 0
        %996 = vmatprep.subr.bf16.mxu0 0
        %997 = vmatpush1.bf16.msra.mxu0 0
        %998 = vmatprep.subr.bf16.mxu0 0
        %999 = vmatpush1.bf16.msra.mxu0 0
        %1000 = vmatprep.subr.bf16.mxu0 0
        %1001 = vmatpush1.bf16.msra.mxu0 0
        %1002 = vmatprep.subr.bf16.mxu0 0
        %1003 = vmatpush1.bf16.msra.mxu0 0
        %1004 = vmatprep.subr.bf16.mxu0 0
        %1005 = vmatpush1.bf16.msra.mxu0 0
        %1006 = vmatprep.subr.bf16.mxu0 0
        %1007 = vmatpush1.bf16.msra.mxu0 0
        %1008 = vmatprep.subr.bf16.mxu0 0
        %1009 = vmatpush1.bf16.msra.mxu0 %v992
        %1010 = vmatprep.subr.bf16.mxu0 0
        %1011 = vmatpush2.bf16.msra.mxu0 0
        %1012 = vmatprep.subr.bf16.mxu0 0
        %1013 = vmatpush2.bf16.msra.mxu0 0
        %1014 = vmatprep.subr.bf16.mxu0 0
        %1015 = vmatpush2.bf16.msra.mxu0 0
        %1016 = vmatprep.subr.bf16.mxu0 0
        %1017 = vmatpush2.bf16.msra.mxu0 0
        %1018 = vmatprep.subr.bf16.mxu0 0
        %1019 = vmatpush2.bf16.msra.mxu0 0
        %1020 = vmatprep.subr.bf16.mxu0 0
        %1021 = vmatpush2.bf16.msra.mxu0 0
        %1022 = vmatprep.subr.bf16.mxu0 0
        %1023 = vmatpush2.bf16.msra.mxu0 0
        %1024 = vmatprep.subr.bf16.mxu0 0
        %1025 = vmatpush2.bf16.msra.mxu0 0
        %1026 = vmatprep.mubr.bf16.mxu0 0
        %1027 = vmatmul.mubr.bf16.gmra.mxu0 %v989
        %v1028 = vpop.f32.mrf.mxu0
        %v1029 = vadd.f32 0.0, %v1028
        %v1030 = vpop.f32.mrf.mxu0
        %v1031 = vpop.f32.mrf.mxu0
        %v1032 = vpop.f32.mrf.mxu0
        %1033 = vdwg.mxu0
        %v1034 = vpack.c.bf16 %v1029, %v1029
        %v1036 = vsel %vm611, %v1034, 0
        %v1039 = vsel %vm673, %v609, 0
        %1041 = vmatprep.subr.bf16.mxu0 0
        %1042 = vmatpush1.bf16.msra.mxu0 0
        %1043 = vmatprep.subr.bf16.mxu0 0
        %1044 = vmatpush1.bf16.msra.mxu0 0
        %1045 = vmatprep.subr.bf16.mxu0 0
        %1046 = vmatpush1.bf16.msra.mxu0 0
        %1047 = vmatprep.subr.bf16.mxu0 0
        %1048 = vmatpush1.bf16.msra.mxu0 0
        %1049 = vmatprep.subr.bf16.mxu0 0
        %1050 = vmatpush1.bf16.msra.mxu0 0
        %1051 = vmatprep.subr.bf16.mxu0 0
        %1052 = vmatpush1.bf16.msra.mxu0 0
        %1053 = vmatprep.subr.bf16.mxu0 0
        %1054 = vmatpush1.bf16.msra.mxu0 0
        %1055 = vmatprep.subr.bf16.mxu0 0
        %1056 = vmatpush1.bf16.msra.mxu0 %v1039
        %1057 = vmatprep.subr.bf16.mxu0 0
        %1058 = vmatpush2.bf16.msra.mxu0 0
        %1059 = vmatprep.subr.bf16.mxu0 0
        %1060 = vmatpush2.bf16.msra.mxu0 0
        %1061 = vmatprep.subr.bf16.mxu0 0
        %1062 = vmatpush2.bf16.msra.mxu0 0
        %1063 = vmatprep.subr.bf16.mxu0 0
        %1064 = vmatpush2.bf16.msra.mxu0 0
        %1065 = vmatprep.subr.bf16.mxu0 0
        %1066 = vmatpush2.bf16.msra.mxu0 0
        %1067 = vmatprep.subr.bf16.mxu0 0
        %1068 = vmatpush2.bf16.msra.mxu0 0
        %1069 = vmatprep.subr.bf16.mxu0 0
        %1070 = vmatpush2.bf16.msra.mxu0 0
        %1071 = vmatprep.subr.bf16.mxu0 0
        %1072 = vmatpush2.bf16.msra.mxu0 0
        %1073 = vmatprep.mubr.bf16.mxu0 0
        %1074 = vmatmul.mubr.bf16.gmra.mxu0 %v1036
        %v1075 = vpop.f32.mrf.mxu0
        %v1076 = vadd.f32 0.0, %v1075
        %v1077 = vpop.f32.mrf.mxu0
        %v1078 = vpop.f32.mrf.mxu0
        %v1079 = vpop.f32.mrf.mxu0
        %1080 = vdwg.mxu0
        %v1081 = vadd.f32 %v919, %v1076
        %1082 = vrot.lane.b32.xlu0 %v464, 104
        %v1083 = vpop.permute.xlu0 %1082
        %1084 = vrot.lane.b32.xlu0 %v535, 104
        %v1085 = vpop.permute.xlu0 %1084
        %v1087 = vsel %vm611, %v1083, 0
        %v1090 = vsel %vm611, %v1085, 0
        %1092 = vmatprep.subr.bf16.mxu0 0
        %1093 = vmatpush1.bf16.xpose.msra.mxu0 0
        %1094 = vmatprep.subr.bf16.mxu0 0
        %1095 = vmatpush1.bf16.xpose.msra.mxu0 0
        %1096 = vmatprep.subr.bf16.mxu0 0
        %1097 = vmatpush1.bf16.xpose.msra.mxu0 0
        %1098 = vmatprep.subr.bf16.mxu0 0
        %1099 = vmatpush1.bf16.xpose.msra.mxu0 0
        %1100 = vmatprep.subr.bf16.mxu0 0
        %1101 = vmatpush1.bf16.xpose.msra.mxu0 0
        %1102 = vmatprep.subr.bf16.mxu0 0
        %1103 = vmatpush1.bf16.xpose.msra.mxu0 0
        %1104 = vmatprep.subr.bf16.mxu0 0
        %1105 = vmatpush1.bf16.xpose.msra.mxu0 0
        %1106 = vmatprep.subr.bf16.mxu0 0
        %1107 = vmatpush1.bf16.xpose.msra.mxu0 %v1090
        %1108 = vmatprep.subr.bf16.mxu0 0
        %1109 = vmatpush2.bf16.xpose.msra.mxu0 0
        %1110 = vmatprep.subr.bf16.mxu0 0
        %1111 = vmatpush2.bf16.xpose.msra.mxu0 0
        %1112 = vmatprep.subr.bf16.mxu0 0
        %1113 = vmatpush2.bf16.xpose.msra.mxu0 0
        %1114 = vmatprep.subr.bf16.mxu0 0
        %1115 = vmatpush2.bf16.xpose.msra.mxu0 0
        %1116 = vmatprep.subr.bf16.mxu0 0
        %1117 = vmatpush2.bf16.xpose.msra.mxu0 0
        %1118 = vmatprep.subr.bf16.mxu0 0
        %1119 = vmatpush2.bf16.xpose.msra.mxu0 0
        %1120 = vmatprep.subr.bf16.mxu0 0
        %1121 = vmatpush2.bf16.xpose.msra.mxu0 0
        %1122 = vmatprep.subr.bf16.mxu0 0
        %1123 = vmatpush2.bf16.xpose.msra.mxu0 0
        %1124 = vmatprep.mubr.bf16.mxu0 0
        %1125 = vmatmul.mubr.bf16.gmra.mxu0 %v1087
        %v1126 = vpop.f32.mrf.mxu0
        %v1127 = vadd.f32 0.0, %v1126
        %v1128 = vpop.f32.mrf.mxu0
        %v1129 = vpop.f32.mrf.mxu0
        %v1130 = vpop.f32.mrf.mxu0
        %1131 = vdwg.mxu0
        %v1132 = vsel %vm611, %v1127, -inf
        %1133 = vmax.xlane.f32.xlu0 %v1132
        %v1134 = vpop.xlane.xlu0 %1133
        %v1135 = vsub.f32 %v1127, %v1134
        %v1136 = vmul.f32 %v1135, 1.442695
        %v1137 = vpow.pop %v1136
        %v1138 = vsel %vm611, %v1137, 0.0
        %1139 = vadd.xlane.f32.xlu0 %v1138
        %v1140 = vpop.xlane.xlu0 %1139
        %v1141 = vrcp.pop %v1140
        %v1142 = vmul.f32 %v1137, %v1141
        %v1143 = vpack.c.bf16 %v1142, %v1142
        %1144 = vrot.lane.b32.xlu0 %v606, 104
        %v1145 = vpop.permute.xlu0 %1144
        %v1147 = vsel %vm611, %v1143, 0
        %v1150 = vsel %vm673, %v1145, 0
        %1152 = vmatprep.subr.bf16.mxu0 0
        %1153 = vmatpush1.bf16.msra.mxu0 0
        %1154 = vmatprep.subr.bf16.mxu0 0
        %1155 = vmatpush1.bf16.msra.mxu0 0
        %1156 = vmatprep.subr.bf16.mxu0 0
        %1157 = vmatpush1.bf16.msra.mxu0 0
        %1158 = vmatprep.subr.bf16.mxu0 0
        %1159 = vmatpush1.bf16.msra.mxu0 0
        %1160 = vmatprep.subr.bf16.mxu0 0
        %1161 = vmatpush1.bf16.msra.mxu0 0
        %1162 = vmatprep.subr.bf16.mxu0 0
        %1163 = vmatpush1.bf16.msra.mxu0 0
        %1164 = vmatprep.subr.bf16.mxu0 0
        %1165 = vmatpush1.bf16.msra.mxu0 0
        %1166 = vmatprep.subr.bf16.mxu0 0
        %1167 = vmatpush1.bf16.msra.mxu0 %v1150
        %1168 = vmatprep.subr.bf16.mxu0 0
        %1169 = vmatpush2.bf16.msra.mxu0 0
        %1170 = vmatprep.subr.bf16.mxu0 0
        %1171 = vmatpush2.bf16.msra.mxu0 0
        %1172 = vmatprep.subr.bf16.mxu0 0
        %1173 = vmatpush2.bf16.msra.mxu0 0
        %1174 = vmatprep.subr.bf16.mxu0 0
        %1175 = vmatpush2.bf16.msra.mxu0 0
        %1176 = vmatprep.subr.bf16.mxu0 0
        %1177 = vmatpush2.bf16.msra.mxu0 0
        %1178 = vmatprep.subr.bf16.mxu0 0
        %1179 = vmatpush2.bf16.msra.mxu0 0
        %1180 = vmatprep.subr.bf16.mxu0 0
        %1181 = vmatpush2.bf16.msra.mxu0 0
        %1182 = vmatprep.subr.bf16.mxu0 0
        %1183 = vmatpush2.bf16.msra.mxu0 0
        %1184 = vmatprep.mubr.bf16.mxu0 0
        %1185 = vmatmul.mubr.bf16.gmra.mxu0 %v1147
        %v1186 = vpop.f32.mrf.mxu0
        %v1187 = vadd.f32 0.0, %v1186
        %v1188 = vpop.f32.mrf.mxu0
        %v1189 = vpop.f32.mrf.mxu0
        %v1190 = vpop.f32.mrf.mxu0
        %1191 = vdwg.mxu0
        %v1192 = vpack.c.bf16 %v1187, %v1187
        %v1194 = vsel %vm611, %v1192, 0
        %v1197 = vsel %vm673, %v610, 0
        %1199 = vmatprep.subr.bf16.mxu0 0
        %1200 = vmatpush1.bf16.msra.mxu0 0
        %1201 = vmatprep.subr.bf16.mxu0 0
        %1202 = vmatpush1.bf16.msra.mxu0 0
        %1203 = vmatprep.subr.bf16.mxu0 0
        %1204 = vmatpush1.bf16.msra.mxu0 0
        %1205 = vmatprep.subr.bf16.mxu0 0
        %1206 = vmatpush1.bf16.msra.mxu0 0
        %1207 = vmatprep.subr.bf16.mxu0 0
        %1208 = vmatpush1.bf16.msra.mxu0 0
        %1209 = vmatprep.subr.bf16.mxu0 0
        %1210 = vmatpush1.bf16.msra.mxu0 0
        %1211 = vmatprep.subr.bf16.mxu0 0
        %1212 = vmatpush1.bf16.msra.mxu0 0
        %1213 = vmatprep.subr.bf16.mxu0 0
        %1214 = vmatpush1.bf16.msra.mxu0 %v1197
        %1215 = vmatprep.subr.bf16.mxu0 0
        %1216 = vmatpush2.bf16.msra.mxu0 0
        %1217 = vmatprep.subr.bf16.mxu0 0
        %1218 = vmatpush2.bf16.msra.mxu0 0
        %1219 = vmatprep.subr.bf16.mxu0 0
        %1220 = vmatpush2.bf16.msra.mxu0 0
        %1221 = vmatprep.subr.bf16.mxu0 0
        %1222 = vmatpush2.bf16.msra.mxu0 0
        %1223 = vmatprep.subr.bf16.mxu0 0
        %1224 = vmatpush2.bf16.msra.mxu0 0
        %1225 = vmatprep.subr.bf16.mxu0 0
        %1226 = vmatpush2.bf16.msra.mxu0 0
        %1227 = vmatprep.subr.bf16.mxu0 0
        %1228 = vmatpush2.bf16.msra.mxu0 0
        %1229 = vmatprep.subr.bf16.mxu0 0
        %1230 = vmatpush2.bf16.msra.mxu0 0
        %1231 = vmatprep.mubr.bf16.mxu0 0
        %1232 = vmatmul.mubr.bf16.gmra.mxu0 %v1194
        %v1233 = vpop.f32.mrf.mxu0
        %v1234 = vadd.f32 0.0, %v1233
        %v1235 = vpop.f32.mrf.mxu0
        %v1236 = vpop.f32.mrf.mxu0
        %v1237 = vpop.f32.mrf.mxu0
        %1238 = vdwg.mxu0
        %v1239 = vadd.f32 %v1081, %v1234
        %v1240 = vld [vmem:[%s6] sm:$0x1]
        %v1242 = vlaneseq
        %v1243 = vshrl.u32 %v1242, 7
        %v1244 = vsub.s32 0, %v1243
        %v1245 = vrot.slane %v1240, %v1244
        %v1247 = vadd.f32 %v1239, %v1245
        %1248 = vst.msk [vmem:[%s393] sm:$0xff] %vm420, %v1247
        %s1249 = sand.u32 %s198, 1
        %s1250 = scalar_lea.sflag [#allocation4], %s1249
        %s1251 = sand.u32 %s198, 1
        %s1252 = smul.addr %s1251, 8
        %s1253 = scalar_lea.vmem [#allocation11], %s1252
        // Predicated region
        $region69: #{tpu_custom_call.1} parent=47 // pred_check
          %p1254 = pneg %p208
        $region70: #{tpu_custom_call.1} parent=47 // pred_check_branch
          %1256 = sbr.rel (%p1254) target = $region72
        $region71: #{tpu_custom_call.1} parent=47 // pred_region
          %s1258 = ssub.s32 128, 128
          %1259 = vsyncadd %s1250, %s1258
          %s1260 = smul.addr %s28, 128
          %s1261 = scalar_lea.hbm %s7, %s1260
          %s1263 = sshll.u32 %s1253, 4
          %s1264 = int_to_ptr.vmem [resolvable:$true] %s1263
          %1266 = dma.vmem_to_hbm [thread:$0]  %s1264, 128, %s1261, %s1250
        $region72: #{tpu_custom_call.1} parent=47 // pred_fallthru
          _
      $region48: #{tpu_custom_call.1} parent=5 // pred_fallthru
        _
      %p1267 = scmp.le.s32.totalorder 2, %s23
      // Predicated region
      $region73: #{tpu_custom_call.1} parent=5 // pred_check
        %p1268 = pneg %p1267
      $region74: #{tpu_custom_call.1} parent=5 // pred_check_branch
        %1270 = sbr.rel (%p1268) target = $region76
      $region75: #{tpu_custom_call.1} parent=5 // pred_region
        %s1271 = ssub.s32 %s23, 2
        // Predicated region
        $region77: #{tpu_custom_call.1} parent=75 // pred_check
          %p1272 = pneg %p214
        $region78: #{tpu_custom_call.1} parent=75 // pred_check_branch
          %1274 = sbr.rel (%p1272) target = $region80
        $region79: #{tpu_custom_call.1} parent=75 // pred_region
          %s1275 = sand.u32 %s199, 1
          %s1276 = scalar_lea.sflag [#allocation4], %s1275
          %s1277 = sand.u32 %s199, 1
          %s1278 = smul.addr %s1277, 8
          %s1279 = scalar_lea.vmem [#allocation11], %s1278
          %1280 = dma.done %s1276, 128
        $region80: #{tpu_custom_call.1} parent=75 // pred_fallthru
          _
      $region76: #{tpu_custom_call.1} parent=5 // pred_fallthru
        _
    $region6: #{tpu_custom_call.1} parent=1 // loop_footer
      %s27 = sadd.s32 1, %s23
    $region7: #{tpu_custom_call.1} parent=1 // loop_footer_branch
      %22 = sbr.rel target = $region3
    $region8: #{tpu_custom_call.1} parent=1 // loop_exit
      _
    %1281 = vsyncpa [#allocation3], 1
    %s1282 = scalar_lea.sflag [#allocation3], 1
    %1283 = vsyncpa %s1282, 1
    %1284 = vsyncpa [#allocation6], 1
    %s1285 = scalar_lea.sflag [#allocation6], 1
    %1286 = vsyncpa %s1285, 1
    %1287 = vsyncpa [#allocation9], 1
    %1288 = vsyncpa [#allocation4], 1
    %s1289 = scalar_lea.sflag [#allocation4], 1
    %1290 = vsyncpa %s1289, 1

// kernel: tpu_custom_call.1
$region0: #{tpu_custom_call.1}
  #allocation0 [shape = 'u32[]', space=smem, size = 0x4, offset = 0x4, fixed_abs, tag = 'smem constant byte address 0x4 - core index']
  #allocation1 [shape = 'u32[144,128]{1,0:T(1,128)}', space=vmem, size = 0x12000, scoped, tag = 'internal scratch']
  %s0 = inlined_call_operand.hbm [shape: f32[2,8,32], index: 0, kind: input, shape index: {}]
  %s1 = inlined_call_operand.hbm [shape: f32[2,8,32], index: 1, kind: input, shape index: {}]
  %s2 = inlined_call_operand.hbm [shape: f32[2,8,32], index: 2, kind: input, shape index: {}]
  %s3 = inlined_call_operand.hbm [shape: bf16[3,32,32], index: 3, kind: input, shape index: {}]
  %s4 = inlined_call_operand.vmem [shape: f32[3,1,32], index: 4, kind: input, shape index: {}]
  %s5 = inlined_call_operand.hbm [shape: bf16[32,32], index: 5, kind: input, shape index: {}]
  %s6 = inlined_call_operand.vmem [shape: f32[1,32], index: 6, kind: input, shape index: {}]
  %s7 = inlined_call_operand.hbm [shape: f32[2,8,32], index: 7, kind: output, shape index: {}]
  %s8 = sld [smem:[#allocation0]]
  $region81: #{tpu_custom_call.1} parent=0
    _
  %s10 = ssub.s32 1, %s8
  %s11 = scalar_select 0, %s10, %s8
  $region1: #{tpu_custom_call.1} parent=0
    #allocation2 [shape = 'u8[8192]{0}', space=vmem, size = 0x2000, scoped, tag = 'input window, operand 0']
    #allocation3 [shape = 's32[2]{0}', space=sflag, size = 0x8, scoped, tag = 'scoped memory for tpu_custom_call.1']
    #allocation4 [shape = 's32[2]{0}', space=sflag, size = 0x8, scoped, tag = 'scoped memory for tpu_custom_call.1']
    #allocation5 [shape = 'u8[8192]{0}', space=vmem, size = 0x2000, scoped, tag = 'input window, operand 1']
    #allocation6 [shape = 's32[2]{0}', space=sflag, size = 0x8, scoped, tag = 'scoped memory for tpu_custom_call.1']
    #allocation7 [shape = 'u8[8192]{0}', space=vmem, size = 0x2000, scoped, tag = 'input window, operand 2']
    #allocation8 [shape = 'u8[24576]{0}', space=vmem, size = 0x6000, scoped, tag = 'input window, operand 3, single buffered']
    #allocation9 [shape = 's32[1]{0}', space=sflag, size = 0x4, scoped, tag = 'scoped memory for tpu_custom_call.1']
    #allocation10 [shape = 'u8[8192]{0}', space=vmem, size = 0x2000, scoped, tag = 'input window, operand 5, single buffered']
    #allocation11 [shape = 'u8[8192]{0}', space=vmem, size = 0x2000, scoped, tag = 'output window, operand 0']
    %12 = vsyncpa [#allocation3], 0
    %s13 = scalar_lea.sflag [#allocation3], 1
    %14 = vsyncpa %s13, 0
    %15 = vsyncpa [#allocation6], 0
    %s16 = scalar_lea.sflag [#allocation6], 1
    %17 = vsyncpa %s16, 0
    %18 = vsyncpa [#allocation9], 0
    %19 = vsyncpa [#allocation4], 0
    %s20 = scalar_lea.sflag [#allocation4], 1
    %21 = vsyncpa %s20, 0
    loop: start=0, step=1, limit=4
    $region2: #{tpu_custom_call.1} parent=1 // loop_pre_header
      _
    $region3: #{tpu_custom_call.1} parent=1 // loop_header
      %s23 = sphi 0, %s27
      %p24 = scmp.ge.s32.totalorder %s23, 4
      %s33 = sphi 0, %s35
      %s36 = sphi 0, %s33
      %s37 = sphi 0, %s36
      %s53 = sphi 0, %s37
      %s59 = sphi 0, %s61
      %s62 = sphi 0, %s59
      %s63 = sphi 0, %s62
      %s79 = sphi 0, %s63
      %s85 = sphi 0, %s87
      %s88 = sphi 0, %s85
      %s89 = sphi 0, %s88
      %s105 = sphi 0, %s89
      %s109 = sphi 0, %s109
      %s111 = sphi 0, %s109
      %s112 = sphi 0, %s111
      %s126 = sphi 0, %s112
      %s130 = sphi 0, %s130
      %s132 = sphi 0, %s130
      %s133 = sphi 0, %s132
      %s147 = sphi 0, %s133
      %s151 = sphi 0, %s151
      %s153 = sphi 0, %s151
      %s154 = sphi 0, %s153
      %s168 = sphi 0, %s154
      %s172 = sphi 0, %s172
      %s174 = sphi 0, %s172
      %s175 = sphi 0, %s174
      %s189 = sphi 0, %s175
      %s195 = sphi 0, %s197
      %s198 = sphi 0, %s195
      %s199 = sphi 0, %s198
      %s215 = sphi 0, %s199
    $region4: #{tpu_custom_call.1} parent=1 // loop_header_branch
      %26 = sbr.rel (%p24) target = $region8
    $region5: #{tpu_custom_call.1} parent=1 // loop_body
      %s28 = ssub.s32 %s23, 1
      %s29 = ssub.s32 %s23, 2
      %s30 = sadd.s32 %s23, 1
      %s31 = ssub.s32 %s23, %s30
      %p32 = scmp.eq.s32.totalorder %s31, 0
      %s34 = sadd.s32 %s33, 1
      %s35 = scalar_select %p32, %s33, %s34
      %p38 = pneg %p32
      %p39 = scmp.eq.s32.totalorder %s23, 1
      %p40 = por %p38, %p39
      %p41 = scmp.ne.s32.totalorder %s33, %s36
      %p42 = scmp.eq.s32.totalorder %s23, 0
      %p43 = por %p41, %p42
      %p44 = scmp.ne.s32.totalorder %s33, %s36
      %p45 = scmp.eq.s32.totalorder %s28, 1
      %p46 = por %p44, %p45
      %p47 = scmp.ne.s32.totalorder %s36, %s37
      %p48 = scmp.eq.s32.totalorder %s28, 0
      %p49 = por %p47, %p48
      %p50 = scmp.ne.s32.totalorder %s36, %s37
      %p51 = scmp.eq.s32.totalorder %s29, 1
      %p52 = por %p50, %p51
      %p54 = scmp.ne.s32.totalorder %s37, %s53
      %p55 = scmp.eq.s32.totalorder %s29, 0
      %p56 = por %p54, %p55
      %s57 = ssub.s32 %s23, %s30
      %p58 = scmp.eq.s32.totalorder %s57, 0
      %s60 = sadd.s32 %s59, 1
      %s61 = scalar_select %p58, %s59, %s60
      %p64 = pneg %p58
      %p65 = scmp.eq.s32.totalorder %s23, 1
      %p66 = por %p64, %p65
      %p67 = scmp.ne.s32.totalorder %s59, %s62
      %p68 = scmp.eq.s32.totalorder %s23, 0
      %p69 = por %p67, %p68
      %p70 = scmp.ne.s32.totalorder %s59, %s62
      %p71 = scmp.eq.s32.totalorder %s28, 1
      %p72 = por %p70, %p71
      %p73 = scmp.ne.s32.totalorder %s62, %s63
      %p74 = scmp.eq.s32.totalorder %s28, 0
      %p75 = por %p73, %p74
      %p76 = scmp.ne.s32.totalorder %s62, %s63
      %p77 = scmp.eq.s32.totalorder %s29, 1
      %p78 = por %p76, %p77
      %p80 = scmp.ne.s32.totalorder %s63, %s79
      %p81 = scmp.eq.s32.totalorder %s29, 0
      %p82 = por %p80, %p81
      %s83 = ssub.s32 %s23, %s30
      %p84 = scmp.eq.s32.totalorder %s83, 0
      %s86 = sadd.s32 %s85, 1
      %s87 = scalar_select %p84, %s85, %s86
      %p90 = pneg %p84
      %p91 = scmp.eq.s32.totalorder %s23, 1
      %p92 = por %p90, %p91
      %p93 = scmp.ne.s32.totalorder %s85, %s88
      %p94 = scmp.eq.s32.totalorder %s23, 0
      %p95 = por %p93, %p94
      %p96 = scmp.ne.s32.totalorder %s85, %s88
      %p97 = scmp.eq.s32.totalorder %s28, 1
      %p98 = por %p96, %p97
      %p99 = scmp.ne.s32.totalorder %s88, %s89
      %p100 = scmp.eq.s32.totalorder %s28, 0
      %p101 = por %p99, %p100
      %p102 = scmp.ne.s32.totalorder %s88, %s89
      %p103 = scmp.eq.s32.totalorder %s29, 1
      %p104 = por %p102, %p103
      %p106 = scmp.ne.s32.totalorder %s89, %s105
      %p107 = scmp.eq.s32.totalorder %s29, 0
      %p108 = por %p106, %p107
      %s110 = sadd.s32 %s109, 1
      %p113 = scmp.eq.s32.totalorder %s23, 1
      %p114 = scmp.ne.s32.totalorder %s109, %s111
      %p115 = scmp.eq.s32.totalorder %s23, 0
      %p116 = por %p114, %p115
      %p117 = scmp.ne.s32.totalorder %s109, %s111
      %p118 = scmp.eq.s32.totalorder %s28, 1
      %p119 = por %p117, %p118
      %p120 = scmp.ne.s32.totalorder %s111, %s112
      %p121 = scmp.eq.s32.totalorder %s28, 0
      %p122 = por %p120, %p121
      %p123 = scmp.ne.s32.totalorder %s111, %s112
      %p124 = scmp.eq.s32.totalorder %s29, 1
      %p125 = por %p123, %p124
      %p127 = scmp.ne.s32.totalorder %s112, %s126
      %p128 = scmp.eq.s32.totalorder %s29, 0
      %p129 = por %p127, %p128
      %s131 = sadd.s32 %s130, 1
      %p134 = scmp.eq.s32.totalorder %s23, 1
      %p135 = scmp.ne.s32.totalorder %s130, %s132
      %p136 = scmp.eq.s32.totalorder %s23, 0
      %p137 = por %p135, %p136
      %p138 = scmp.ne.s32.totalorder %s130, %s132
      %p139 = scmp.eq.s32.totalorder %s28, 1
      %p140 = por %p138, %p139
      %p141 = scmp.ne.s32.totalorder %s132, %s133
      %p142 = scmp.eq.s32.totalorder %s28, 0
      %p143 = por %p141, %p142
      %p144 = scmp.ne.s32.totalorder %s132, %s133
      %p145 = scmp.eq.s32.totalorder %s29, 1
      %p146 = por %p144, %p145
      %p148 = scmp.ne.s32.totalorder %s133, %s147
      %p149 = scmp.eq.s32.totalorder %s29, 0
      %p150 = por %p148, %p149
      %s152 = sadd.s32 %s151, 1
      %p155 = scmp.eq.s32.totalorder %s23, 1
      %p156 = scmp.ne.s32.totalorder %s151, %s153
      %p157 = scmp.eq.s32.totalorder %s23, 0
      %p158 = por %p156, %p157
      %p159 = scmp.ne.s32.totalorder %s151, %s153
      %p160 = scmp.eq.s32.totalorder %s28, 1
      %p161 = por %p159, %p160
      %p162 = scmp.ne.s32.totalorder %s153, %s154
      %p163 = scmp.eq.s32.totalorder %s28, 0
      %p164 = por %p162, %p163
      %p165 = scmp.ne.s32.totalorder %s153, %s154
      %p166 = scmp.eq.s32.totalorder %s29, 1
      %p167 = por %p165, %p166
      %p169 = scmp.ne.s32.totalorder %s154, %s168
      %p170 = scmp.eq.s32.totalorder %s29, 0
      %p171 = por %p169, %p170
      %s173 = sadd.s32 %s172, 1
      %p176 = scmp.eq.s32.totalorder %s23, 1
      %p177 = scmp.ne.s32.totalorder %s172, %s174
      %p178 = scmp.eq.s32.totalorder %s23, 0
      %p179 = por %p177, %p178
      %p180 = scmp.ne.s32.totalorder %s172, %s174
      %p181 = scmp.eq.s32.totalorder %s28, 1
      %p182 = por %p180, %p181
      %p183 = scmp.ne.s32.totalorder %s174, %s175
      %p184 = scmp.eq.s32.totalorder %s28, 0
      %p185 = por %p183, %p184
      %p186 = scmp.ne.s32.totalorder %s174, %s175
      %p187 = scmp.eq.s32.totalorder %s29, 1
      %p188 = por %p186, %p187
      %p190 = scmp.ne.s32.totalorder %s175, %s189
      %p191 = scmp.eq.s32.totalorder %s29, 0
      %p192 = por %p190, %p191
      %s193 = ssub.s32 %s23, %s30
      %p194 = scmp.eq.s32.totalorder %s193, 0
      %s196 = sadd.s32 %s195, 1
      %s197 = scalar_select %p194, %s195, %s196
      %p200 = pneg %p194
      %p201 = scmp.eq.s32.totalorder %s23, 1
      %p202 = por %p200, %p201
      %p203 = scmp.ne.s32.totalorder %s195, %s198
      %p204 = scmp.eq.s32.totalorder %s23, 0
      %p205 = por %p203, %p204
      %p206 = scmp.ne.s32.totalorder %s195, %s198
      %p207 = scmp.eq.s32.totalorder %s28, 1
      %p208 = por %p206, %p207
      %p209 = scmp.ne.s32.totalorder %s198, %s199
      %p210 = scmp.eq.s32.totalorder %s28, 0
      %p211 = por %p209, %p210
      %p212 = scmp.ne.s32.totalorder %s198, %s199
      %p213 = scmp.eq.s32.totalorder %s29, 1
      %p214 = por %p212, %p213
      %p216 = scmp.ne.s32.totalorder %s199, %s215
      %p217 = scmp.eq.s32.totalorder %s29, 0
      %p218 = por %p216, %p217
      %p219 = scmp.le.s32.totalorder 1, %s23
      %p220 = scmp.lt.s32.totalorder %s23, 3
      %p221 = pnand %p219, %p220
      %p222 = pneg %p221
      // Predicated region
      $region9: #{tpu_custom_call.1} parent=5 // pred_check
        _
      $region10: #{tpu_custom_call.1} parent=5 // pred_check_branch
        %224 = sbr.rel (%p221) target = $region12
      $region11: #{tpu_custom_call.1} parent=5 // pred_region
        %s225 = ssub.s32 %s23, 1
        // Predicated region
        $region13: #{tpu_custom_call.1} parent=11 // pred_check
          %p226 = pneg %p122
        $region14: #{tpu_custom_call.1} parent=11 // pred_check_branch
          %228 = sbr.rel (%p226) target = $region16
        $region15: #{tpu_custom_call.1} parent=11 // pred_region
          %s230 = ssub.s32 768, 768
          %231 = vsyncadd [#allocation9], %s230
          %s232 = sshll.u32 [#allocation8], 4
          %s233 = int_to_ptr.vmem [resolvable:$true] %s232
          %238 = dma.hbm_to_vmem [thread:$0]  %s3, 768, %s233, [#allocation9], 64, 64, 4
        $region16: #{tpu_custom_call.1} parent=11 // pred_fallthru
          _
        // Predicated region
        $region17: #{tpu_custom_call.1} parent=11 // pred_check
          %p239 = pneg %p143
        $region18: #{tpu_custom_call.1} parent=11 // pred_check_branch
          %241 = sbr.rel (%p239) target = $region20
        $region19: #{tpu_custom_call.1} parent=11 // pred_region
          _
        $region20: #{tpu_custom_call.1} parent=11 // pred_fallthru
          _
        // Predicated region
        $region21: #{tpu_custom_call.1} parent=11 // pred_check
          %p242 = pneg %p164
        $region22: #{tpu_custom_call.1} parent=11 // pred_check_branch
          %244 = sbr.rel (%p242) target = $region24
        $region23: #{tpu_custom_call.1} parent=11 // pred_region
          %s246 = ssub.s32 256, 256
          %247 = vsyncadd [#allocation9], %s246
          %s248 = sshll.u32 [#allocation10], 4
          %s249 = int_to_ptr.vmem [resolvable:$true] %s248
          %254 = dma.hbm_to_vmem [thread:$0]  %s5, 256, %s249, [#allocation9], 64, 64, 4
        $region24: #{tpu_custom_call.1} parent=11 // pred_fallthru
          _
        // Predicated region
        $region25: #{tpu_custom_call.1} parent=11 // pred_check
          %p255 = pneg %p185
        $region26: #{tpu_custom_call.1} parent=11 // pred_check_branch
          %257 = sbr.rel (%p255) target = $region28
        $region27: #{tpu_custom_call.1} parent=11 // pred_region
          _
        $region28: #{tpu_custom_call.1} parent=11 // pred_fallthru
          _
      $region12: #{tpu_custom_call.1} parent=5 // pred_fallthru
        _
      %p258 = scmp.lt.s32.totalorder %s23, 2
      // Predicated region
      $region29: #{tpu_custom_call.1} parent=5 // pred_check
        %p259 = pneg %p258
      $region30: #{tpu_custom_call.1} parent=5 // pred_check_branch
        %261 = sbr.rel (%p259) target = $region32
      $region31: #{tpu_custom_call.1} parent=5 // pred_region
        // Predicated region
        $region33: #{tpu_custom_call.1} parent=31 // pred_check
          %p262 = pneg %p43
        $region34: #{tpu_custom_call.1} parent=31 // pred_check_branch
          %264 = sbr.rel (%p262) target = $region36
        $region35: #{tpu_custom_call.1} parent=31 // pred_region
          %s265 = sand.u32 %s33, 1
          %s266 = scalar_lea.sflag [#allocation3], %s265
          %s267 = sand.u32 %s33, 1
          %s268 = smul.addr %s267, 8
          %s269 = scalar_lea.vmem [#allocation2], %s268
          %s271 = ssub.s32 128, 128
          %272 = vsyncadd %s266, %s271
          %s273 = smul.addr %s23, 128
          %s274 = scalar_lea.hbm %s0, %s273
          %s276 = sshll.u32 %s269, 4
          %s277 = int_to_ptr.vmem [resolvable:$true] %s276
          %279 = dma.hbm_to_vmem [thread:$0]  %s274, 128, %s277, %s266
        $region36: #{tpu_custom_call.1} parent=31 // pred_fallthru
          _
        // Predicated region
        $region37: #{tpu_custom_call.1} parent=31 // pred_check
          %p280 = pneg %p69
        $region38: #{tpu_custom_call.1} parent=31 // pred_check_branch
          %282 = sbr.rel (%p280) target = $region40
        $region39: #{tpu_custom_call.1} parent=31 // pred_region
          %s283 = sand.u32 %s23, 1
          %s284 = scalar_lea.sflag [#allocation6], %s283
          %s285 = sand.u32 %s59, 1
          %s286 = smul.addr %s285, 8
          %s287 = scalar_lea.vmem [#allocation5], %s286
          %s289 = ssub.s32 128, 128
          %290 = vsyncadd %s284, %s289
          %s291 = smul.addr %s23, 128
          %s292 = scalar_lea.hbm %s1, %s291
          %s294 = sshll.u32 %s287, 4
          %s295 = int_to_ptr.vmem [resolvable:$true] %s294
          %297 = dma.hbm_to_vmem [thread:$0]  %s292, 128, %s295, %s284
        $region40: #{tpu_custom_call.1} parent=31 // pred_fallthru
          _
        // Predicated region
        $region41: #{tpu_custom_call.1} parent=31 // pred_check
          %p298 = pneg %p95
        $region42: #{tpu_custom_call.1} parent=31 // pred_check_branch
          %300 = sbr.rel (%p298) target = $region44
        $region43: #{tpu_custom_call.1} parent=31 // pred_region
          %s301 = sand.u32 %s23, 1
          %s302 = scalar_lea.sflag [#allocation6], %s301
          %s303 = sand.u32 %s85, 1
          %s304 = smul.addr %s303, 8
          %s305 = scalar_lea.vmem [#allocation7], %s304
          %s307 = ssub.s32 128, 128
          %308 = vsyncadd %s302, %s307
          %s309 = smul.addr %s23, 128
          %s310 = scalar_lea.hbm %s2, %s309
          %s312 = sshll.u32 %s305, 4
          %s313 = int_to_ptr.vmem [resolvable:$true] %s312
          %315 = dma.hbm_to_vmem [thread:$0]  %s310, 128, %s313, %s302
        $region44: #{tpu_custom_call.1} parent=31 // pred_fallthru
          _
      $region32: #{tpu_custom_call.1} parent=5 // pred_fallthru
        _
      %p316 = scmp.le.s32.totalorder 1, %s23
      %p317 = scmp.lt.s32.totalorder %s23, 3
      %p318 = pnand %p316, %p317
      %p319 = pneg %p318
      // Predicated region
      $region45: #{tpu_custom_call.1} parent=5 // pred_check
        _
      $region46: #{tpu_custom_call.1} parent=5 // pred_check_branch
        %321 = sbr.rel (%p318) target = $region48
      $region47: #{tpu_custom_call.1} parent=5 // pred_region
        %s322 = ssub.s32 %s23, 1
        %s323 = sand.u32 %s36, 1
        %s324 = scalar_lea.sflag [#allocation3], %s323
        %s325 = sand.u32 %s36, 1
        %s326 = smul.addr %s325, 8
        %s327 = scalar_lea.vmem [#allocation2], %s326
        // Predicated region
        $region49: #{tpu_custom_call.1} parent=47 // pred_check
          %p328 = pneg %p49
        $region50: #{tpu_custom_call.1} parent=47 // pred_check_branch
          %330 = sbr.rel (%p328) target = $region52
        $region51: #{tpu_custom_call.1} parent=47 // pred_region
          %331 = dma.done %s324, 128
        $region52: #{tpu_custom_call.1} parent=47 // pred_fallthru
          _
        %s332 = sand.u32 %s28, 1
        %s333 = scalar_lea.sflag [#allocation6], %s332
        %s334 = sand.u32 %s62, 1
        %s335 = smul.addr %s334, 8
        %s336 = scalar_lea.vmem [#allocation5], %s335
        // Predicated region
        $region53: #{tpu_custom_call.1} parent=47 // pred_check
          %p337 = pneg %p75
        $region54: #{tpu_custom_call.1} parent=47 // pred_check_branch
          %339 = sbr.rel (%p337) target = $region56
        $region55: #{tpu_custom_call.1} parent=47 // pred_region
          %340 = dma.done %s333, 128
        $region56: #{tpu_custom_call.1} parent=47 // pred_fallthru
          _
        %s341 = sand.u32 %s28, 1
        %s342 = scalar_lea.sflag [#allocation6], %s341
        %s343 = sand.u32 %s88, 1
        %s344 = smul.addr %s343, 8
        %s345 = scalar_lea.vmem [#allocation7], %s344
        // Predicated region
        $region57: #{tpu_custom_call.1} parent=47 // pred_check
          %p346 = pneg %p101
        $region58: #{tpu_custom_call.1} parent=47 // pred_check_branch
          %348 = sbr.rel (%p346) target = $region60
        $region59: #{tpu_custom_call.1} parent=47 // pred_region
          %349 = dma.done %s342, 128
        $region60: #{tpu_custom_call.1} parent=47 // pred_fallthru
          _
        // Predicated region
        $region61: #{tpu_custom_call.1} parent=47 // pred_check
          %p350 = pneg %p122
        $region62: #{tpu_custom_call.1} parent=47 // pred_check_branch
          %352 = sbr.rel (%p350) target = $region64
        $region63: #{tpu_custom_call.1} parent=47 // pred_region
          %353 = dma.done [#allocation9], 768
        $region64: #{tpu_custom_call.1} parent=47 // pred_fallthru
          _
        // Predicated region
        $region65: #{tpu_custom_call.1} parent=47 // pred_check
          %p354 = pneg %p164
        $region66: #{tpu_custom_call.1} parent=47 // pred_check_branch
          %356 = sbr.rel (%p354) target = $region68
        $region67: #{tpu_custom_call.1} parent=47 // pred_region
          %357 = dma.done [#allocation9], 256
        $region68: #{tpu_custom_call.1} parent=47 // pred_fallthru
          _
        %s358 = sand.u32 %s36, 1
        %s359 = scalar_lea.sflag [#allocation3], %s358
        %s360 = sand.u32 %s36, 1
        %s361 = smul.addr %s360, 8
        %s362 = scalar_lea.vmem [#allocation2], %s361
        %p363 = pneg %p49
        %p364 = pneg %p46
        %s365 = sand.u32 %s28, 1
        %s366 = scalar_lea.sflag [#allocation6], %s365
        %s367 = sand.u32 %s62, 1
        %s368 = smul.addr %s367, 8
        %s369 = scalar_lea.vmem [#allocation5], %s368
        %p370 = pneg %p75
        %p371 = pneg %p72
        %s372 = sand.u32 %s28, 1
        %s373 = scalar_lea.sflag [#allocation6], %s372
        %s374 = sand.u32 %s88, 1
        %s375 = smul.addr %s374, 8
        %s376 = scalar_lea.vmem [#allocation7], %s375
        %p377 = pneg %p101
        %p378 = pneg %p98
        %p379 = pneg %p122
        %p380 = pneg %p119
        %p381 = pneg %p143
        %p382 = pneg %p140
        %p383 = pneg %p164
        %p384 = pneg %p161
        %p385 = pneg %p185
        %p386 = pneg %p182
        %p387 = pneg %p211
        %p388 = pneg %p208
        %s389 = sand.u32 %s198, 1
        %s390 = scalar_lea.sflag [#allocation4], %s389
        %s391 = sand.u32 %s198, 1
        %s392 = smul.addr %s391, 8
        %s393 = scalar_lea.vmem [#allocation11], %s392
        %v395 = vld [vmem:[%s327] sm:$0xff]
        %v396 = vpack.c.bf16 %v395, %v395
        %v397 = vld [vmem:[#allocation8] sm:$0xf]
        %v398 = vld [vmem:[#allocation8 + $0x4] sm:$0xf]
        %v399 = vld [vmem:[#allocation8 + $0x8] sm:$0xf]
        %v400 = vld [vmem:[#allocation8 + $0xc] sm:$0xf]
        %v401 = vld [vmem:[%s4] sm:$0x1]
        %v403 = vlaneseq
        %v404 = vshrl.u32 %v403, 7
        %v405 = vsub.s32 0, %v404
        %v406 = vrot.slane %v401, %v405
        %v412 = vunpack.c.l.b16 %v397
        %v413 = vunpack.c.l.b16 %v398
        %v414 = vunpack.c.l.b16 %v399
        %v415 = vunpack.c.l.b16 %v400
        %v416 = vpack.c.b16 %v413, %v412
        %v417 = vpack.c.b16 %v415, %v414
        %vm420 = vcmask 261120
        %v422 = vsel %vm420, %v396, 0
        %424 = vmatprep.subr.bf16.mxu0 0
        %425 = vmatpush1.bf16.msra.mxu0 0
        %426 = vmatprep.subr.bf16.mxu0 0
        %427 = vmatpush1.bf16.msra.mxu0 0
        %428 = vmatprep.subr.bf16.mxu0 0
        %429 = vmatpush1.bf16.msra.mxu0 0
        %430 = vmatprep.subr.bf16.mxu0 0
        %431 = vmatpush1.bf16.msra.mxu0 0
        %432 = vmatprep.subr.bf16.mxu0 0
        %433 = vmatpush1.bf16.msra.mxu0 0
        %434 = vmatprep.subr.bf16.mxu0 0
        %435 = vmatpush1.bf16.msra.mxu0 0
        %436 = vmatprep.subr.bf16.mxu0 0
        %437 = vmatpush1.bf16.msra.mxu0 %v417
        %438 = vmatprep.subr.bf16.mxu0 0
        %439 = vmatpush1.bf16.msra.mxu0 %v416
        %440 = vmatprep.subr.bf16.mxu0 0
        %441 = vmatpush2.bf16.msra.mxu0 0
        %442 = vmatprep.subr.bf16.mxu0 0
        %443 = vmatpush2.bf16.msra.mxu0 0
        %444 = vmatprep.subr.bf16.mxu0 0
        %445 = vmatpush2.bf16.msra.mxu0 0
        %446 = vmatprep.subr.bf16.mxu0 0
        %447 = vmatpush2.bf16.msra.mxu0 0
        %448 = vmatprep.subr.bf16.mxu0 0
        %449 = vmatpush2.bf16.msra.mxu0 0
        %450 = vmatprep.subr.bf16.mxu0 0
        %451 = vmatpush2.bf16.msra.mxu0 0
        %452 = vmatprep.subr.bf16.mxu0 0
        %453 = vmatpush2.bf16.msra.mxu0 0
        %454 = vmatprep.subr.bf16.mxu0 0
        %455 = vmatpush2.bf16.msra.mxu0 0
        %456 = vmatprep.mubr.bf16.mxu0 0
        %457 = vmatmul.mubr.bf16.gmra.mxu0 %v422
        %v458 = vpop.f32.mrf.mxu0
        %v459 = vadd.f32 %v406, %v458
        %v460 = vpop.f32.mrf.mxu0
        %v461 = vpop.f32.mrf.mxu0
        %v462 = vpop.f32.mrf.mxu0
        %463 = vdwg.mxu0
        %v464 = vpack.c.bf16 %v459, %v459
        %v465 = vld [vmem:[%s336] sm:$0xff]
        %v466 = vpack.c.bf16 %v465, %v465
        %s467 = scalar_lea.vmem [#allocation8], 16
        %v468 = vld [vmem:[%s467] sm:$0xf]
        %v469 = vld [vmem:[%s467 + $0x4] sm:$0xf]
        %v470 = vld [vmem:[%s467 + $0x8] sm:$0xf]
        %v471 = vld [vmem:[%s467 + $0xc] sm:$0xf]
        %s472 = scalar_lea.vmem %s4, 1
        %v473 = vld [vmem:[%s472] sm:$0x1]
        %v475 = vlaneseq
        %v476 = vshrl.u32 %v475, 7
        %v477 = vsub.s32 0, %v476
        %v478 = vrot.slane %v473, %v477
        %v484 = vunpack.c.l.b16 %v468
        %v485 = vunpack.c.l.b16 %v469
        %v486 = vunpack.c.l.b16 %v470
        %v487 = vunpack.c.l.b16 %v471
        %v488 = vpack.c.b16 %v485, %v484
        %v489 = vpack.c.b16 %v487, %v486
        %v493 = vsel %vm420, %v466, 0
        %495 = vmatprep.subr.bf16.mxu0 0
        %496 = vmatpush1.bf16.msra.mxu0 0
        %497 = vmatprep.subr.bf16.mxu0 0
        %498 = vmatpush1.bf16.msra.mxu0 0
        %499 = vmatprep.subr.bf16.mxu0 0
        %500 = vmatpush1.bf16.msra.mxu0 0
        %501 = vmatprep.subr.bf16.mxu0 0
        %502 = vmatpush1.bf16.msra.mxu0 0
        %503 = vmatprep.subr.bf16.mxu0 0
        %504 = vmatpush1.bf16.msra.mxu0 0
        %505 = vmatprep.subr.bf16.mxu0 0
        %506 = vmatpush1.bf16.msra.mxu0 0
        %507 = vmatprep.subr.bf16.mxu0 0
        %508 = vmatpush1.bf16.msra.mxu0 %v489
        %509 = vmatprep.subr.bf16.mxu0 0
        %510 = vmatpush1.bf16.msra.mxu0 %v488
        %511 = vmatprep.subr.bf16.mxu0 0
        %512 = vmatpush2.bf16.msra.mxu0 0
        %513 = vmatprep.subr.bf16.mxu0 0
        %514 = vmatpush2.bf16.msra.mxu0 0
        %515 = vmatprep.subr.bf16.mxu0 0
        %516 = vmatpush2.bf16.msra.mxu0 0
        %517 = vmatprep.subr.bf16.mxu0 0
        %518 = vmatpush2.bf16.msra.mxu0 0
        %519 = vmatprep.subr.bf16.mxu0 0
        %520 = vmatpush2.bf16.msra.mxu0 0
        %521 = vmatprep.subr.bf16.mxu0 0
        %522 = vmatpush2.bf16.msra.mxu0 0
        %523 = vmatprep.subr.bf16.mxu0 0
        %524 = vmatpush2.bf16.msra.mxu0 0
        %525 = vmatprep.subr.bf16.mxu0 0
        %526 = vmatpush2.bf16.msra.mxu0 0
        %527 = vmatprep.mubr.bf16.mxu0 0
        %528 = vmatmul.mubr.bf16.gmra.mxu0 %v493
        %v529 = vpop.f32.mrf.mxu0
        %v530 = vadd.f32 %v478, %v529
        %v531 = vpop.f32.mrf.mxu0
        %v532 = vpop.f32.mrf.mxu0
        %v533 = vpop.f32.mrf.mxu0
        %534 = vdwg.mxu0
        %v535 = vpack.c.bf16 %v530, %v530
        %v536 = vld [vmem:[%s345] sm:$0xff]
        %v537 = vpack.c.bf16 %v536, %v536
        %s538 = scalar_lea.vmem [#allocation8], 32
        %v539 = vld [vmem:[%s538] sm:$0xf]
        %v540 = vld [vmem:[%s538 + $0x4] sm:$0xf]
        %v541 = vld [vmem:[%s538 + $0x8] sm:$0xf]
        %v542 = vld [vmem:[%s538 + $0xc] sm:$0xf]
        %s543 = scalar_lea.vmem %s4, 2
        %v544 = vld [vmem:[%s543] sm:$0x1]
        %v546 = vlaneseq
        %v547 = vshrl.u32 %v546, 7
        %v548 = vsub.s32 0, %v547
        %v549 = vrot.slane %v544, %v548
        %v555 = vunpack.c.l.b16 %v539
        %v556 = vunpack.c.l.b16 %v540
        %v557 = vunpack.c.l.b16 %v541
        %v558 = vunpack.c.l.b16 %v542
        %v559 = vpack.c.b16 %v556, %v555
        %v560 = vpack.c.b16 %v558, %v557
        %v564 = vsel %vm420, %v537, 0
        %566 = vmatprep.subr.bf16.mxu0 0
        %567 = vmatpush1.bf16.msra.mxu0 0
        %568 = vmatprep.subr.bf16.mxu0 0
        %569 = vmatpush1.bf16.msra.mxu0 0
        %570 = vmatprep.subr.bf16.mxu0 0
        %571 = vmatpush1.bf16.msra.mxu0 0
        %572 = vmatprep.subr.bf16.mxu0 0
        %573 = vmatpush1.bf16.msra.mxu0 0
        %574 = vmatprep.subr.bf16.mxu0 0
        %575 = vmatpush1.bf16.msra.mxu0 0
        %576 = vmatprep.subr.bf16.mxu0 0
        %577 = vmatpush1.bf16.msra.mxu0 0
        %578 = vmatprep.subr.bf16.mxu0 0
        %579 = vmatpush1.bf16.msra.mxu0 %v560
        %580 = vmatprep.subr.bf16.mxu0 0
        %581 = vmatpush1.bf16.msra.mxu0 %v559
        %582 = vmatprep.subr.bf16.mxu0 0
        %583 = vmatpush2.bf16.msra.mxu0 0
        %584 = vmatprep.subr.bf16.mxu0 0
        %585 = vmatpush2.bf16.msra.mxu0 0
        %586 = vmatprep.subr.bf16.mxu0 0
        %587 = vmatpush2.bf16.msra.mxu0 0
        %588 = vmatprep.subr.bf16.mxu0 0
        %589 = vmatpush2.bf16.msra.mxu0 0
        %590 = vmatprep.subr.bf16.mxu0 0
        %591 = vmatpush2.bf16.msra.mxu0 0
        %592 = vmatprep.subr.bf16.mxu0 0
        %593 = vmatpush2.bf16.msra.mxu0 0
        %594 = vmatprep.subr.bf16.mxu0 0
        %595 = vmatpush2.bf16.msra.mxu0 0
        %596 = vmatprep.subr.bf16.mxu0 0
        %597 = vmatpush2.bf16.msra.mxu0 0
        %598 = vmatprep.mubr.bf16.mxu0 0
        %599 = vmatmul.mubr.bf16.gmra.mxu0 %v564
        %v600 = vpop.f32.mrf.mxu0
        %v601 = vadd.f32 %v549, %v600
        %v602 = vpop.f32.mrf.mxu0
        %v603 = vpop.f32.mrf.mxu0
        %v604 = vpop.f32.mrf.mxu0
        %605 = vdwg.mxu0
        %v606 = vpack.c.bf16 %v601, %v601
        %v607 = vld [vmem:[#allocation10] sm:$0xf]
        %v608 = vld [vmem:[#allocation10 + $0x4] sm:$0xf]
        %v609 = vld [vmem:[#allocation10 + $0x8] sm:$0xf]
        %v610 = vld [vmem:[#allocation10 + $0xc] sm:$0xf]
        %vm611 = vcmask 64512
        %v613 = vsel %vm611, %v464, 0
        %v616 = vsel %vm611, %v535, 0
        %618 = vmatprep.subr.bf16.mxu0 0
        %619 = vmatpush1.bf16.xpose.msra.mxu0 0
        %620 = vmatprep.subr.bf16.mxu0 0
        %621 = vmatpush1.bf16.xpose.msra.mxu0 0
        %622 = vmatprep.subr.bf16.mxu0 0
        %623 = vmatpush1.bf16.xpose.msra.mxu0 0
        %624 = vmatprep.subr.bf16.mxu0 0
        %625 = vmatpush1.bf16.xpose.msra.mxu0 0
        %626 = vmatprep.subr.bf16.mxu0 0
        %627 = vmatpush1.bf16.xpose.msra.mxu0 0
        %628 = vmatprep.subr.bf16.mxu0 0
        %629 = vmatpush1.bf16.xpose.msra.mxu0 0
        %630 = vmatprep.subr.bf16.mxu0 0
        %631 = vmatpush1.bf16.xpose.msra.mxu0 0
        %632 = vmatprep.subr.bf16.mxu0 0
        %633 = vmatpush1.bf16.xpose.msra.mxu0 %v616
        %634 = vmatprep.subr.bf16.mxu0 0
        %635 = vmatpush2.bf16.xpose.msra.mxu0 0
        %636 = vmatprep.subr.bf16.mxu0 0
        %637 = vmatpush2.bf16.xpose.msra.mxu0 0
        %638 = vmatprep.subr.bf16.mxu0 0
        %639 = vmatpush2.bf16.xpose.msra.mxu0 0
        %640 = vmatprep.subr.bf16.mxu0 0
        %641 = vmatpush2.bf16.xpose.msra.mxu0 0
        %642 = vmatprep.subr.bf16.mxu0 0
        %643 = vmatpush2.bf16.xpose.msra.mxu0 0
        %644 = vmatprep.subr.bf16.mxu0 0
        %645 = vmatpush2.bf16.xpose.msra.mxu0 0
        %646 = vmatprep.subr.bf16.mxu0 0
        %647 = vmatpush2.bf16.xpose.msra.mxu0 0
        %648 = vmatprep.subr.bf16.mxu0 0
        %649 = vmatpush2.bf16.xpose.msra.mxu0 0
        %650 = vmatprep.mubr.bf16.mxu0 0
        %651 = vmatmul.mubr.bf16.gmra.mxu0 %v613
        %v652 = vpop.f32.mrf.mxu0
        %v653 = vadd.f32 0.0, %v652
        %v654 = vpop.f32.mrf.mxu0
        %v655 = vpop.f32.mrf.mxu0
        %v656 = vpop.f32.mrf.mxu0
        %657 = vdwg.mxu0
        %v658 = vsel %vm611, %v653, -inf
        %659 = vmax.xlane.f32.xlu0 %v658
        %v660 = vpop.xlane.xlu0 %659
        %v661 = vsub.f32 %v653, %v660
        %v662 = vmul.f32 %v661, 1.442695
        %v663 = vpow.pop %v662
        %v664 = vsel %vm611, %v663, 0.0
        %665 = vadd.xlane.f32.xlu0 %v664
        %v666 = vpop.xlane.xlu0 %665
        %v667 = vrcp.pop %v666
        %v668 = vmul.f32 %v663, %v667
        %v669 = vpack.c.bf16 %v668, %v668
        %v671 = vsel %vm611, %v669, 0
        %vm673 = vcmask 1043456
        %v675 = vsel %vm673, %v606, 0
        %677 = vmatprep.subr.bf16.mxu0 0
        %678 = vmatpush1.bf16.msra.mxu0 0
        %679 = vmatprep.subr.bf16.mxu0 0
        %680 = vmatpush1.bf16.msra.mxu0 0
        %681 = vmatprep.subr.bf16.mxu0 0
        %682 = vmatpush1.bf16.msra.mxu0 0
        %683 = vmatprep.subr.bf16.mxu0 0
        %684 = vmatpush1.bf16.msra.mxu0 0
        %685 = vmatprep.subr.bf16.mxu0 0
        %686 = vmatpush1.bf16.msra.mxu0 0
        %687 = vmatprep.subr.bf16.mxu0 0
        %688 = vmatpush1.bf16.msra.mxu0 0
        %689 = vmatprep.subr.bf16.mxu0 0
        %690 = vmatpush1.bf16.msra.mxu0 0
        %691 = vmatprep.subr.bf16.mxu0 0
        %692 = vmatpush1.bf16.msra.mxu0 %v675
        %693 = vmatprep.subr.bf16.mxu0 0
        %694 = vmatpush2.bf16.msra.mxu0 0
        %695 = vmatprep.subr.bf16.mxu0 0
        %696 = vmatpush2.bf16.msra.mxu0 0
        %697 = vmatprep.subr.bf16.mxu0 0
        %698 = vmatpush2.bf16.msra.mxu0 0
        %699 = vmatprep.subr.bf16.mxu0 0
        %700 = vmatpush2.bf16.msra.mxu0 0
        %701 = vmatprep.subr.bf16.mxu0 0
        %702 = vmatpush2.bf16.msra.mxu0 0
        %703 = vmatprep.subr.bf16.mxu0 0
        %704 = vmatpush2.bf16.msra.mxu0 0
        %705 = vmatprep.subr.bf16.mxu0 0
        %706 = vmatpush2.bf16.msra.mxu0 0
        %707 = vmatprep.subr.bf16.mxu0 0
        %708 = vmatpush2.bf16.msra.mxu0 0
        %709 = vmatprep.mubr.bf16.mxu0 0
        %710 = vmatmul.mubr.bf16.gmra.mxu0 %v671
        %v711 = vpop.f32.mrf.mxu0
        %v712 = vadd.f32 0.0, %v711
        %v713 = vpop.f32.mrf.mxu0
        %v714 = vpop.f32.mrf.mxu0
        %v715 = vpop.f32.mrf.mxu0
        %716 = vdwg.mxu0
        %v717 = vpack.c.bf16 %v712, %v712
        %719 = vrot.lane.b32.xlu0 %v464, 120
        %v720 = vpop.permute.xlu0 %719
        %722 = vrot.lane.b32.xlu0 %v535, 120
        %v723 = vpop.permute.xlu0 %722
        %v725 = vsel %vm611, %v720, 0
        %v728 = vsel %vm611, %v723, 0
        %730 = vmatprep.subr.bf16.mxu0 0
        %731 = vmatpush1.bf16.xpose.msra.mxu0 0
        %732 = vmatprep.subr.bf16.mxu0 0
        %733 = vmatpush1.bf16.xpose.msra.mxu0 0
        %734 = vmatprep.subr.bf16.mxu0 0
        %735 = vmatpush1.bf16.xpose.msra.mxu0 0
        %736 = vmatprep.subr.bf16.mxu0 0
        %737 = vmatpush1.bf16.xpose.msra.mxu0 0
        %738 = vmatprep.subr.bf16.mxu0 0
        %739 = vmatpush1.bf16.xpose.msra.mxu0 0
        %740 = vmatprep.subr.bf16.mxu0 0
        %741 = vmatpush1.bf16.xpose.msra.mxu0 0
        %742 = vmatprep.subr.bf16.mxu0 0
        %743 = vmatpush1.bf16.xpose.msra.mxu0 0
        %744 = vmatprep.subr.bf16.mxu0 0
        %745 = vmatpush1.bf16.xpose.msra.mxu0 %v728
        %746 = vmatprep.subr.bf16.mxu0 0
        %747 = vmatpush2.bf16.xpose.msra.mxu0 0
        %748 = vmatprep.subr.bf16.mxu0 0
        %749 = vmatpush2.bf16.xpose.msra.mxu0 0
        %750 = vmatprep.subr.bf16.mxu0 0
        %751 = vmatpush2.bf16.xpose.msra.mxu0 0
        %752 = vmatprep.subr.bf16.mxu0 0
        %753 = vmatpush2.bf16.xpose.msra.mxu0 0
        %754 = vmatprep.subr.bf16.mxu0 0
        %755 = vmatpush2.bf16.xpose.msra.mxu0 0
        %756 = vmatprep.subr.bf16.mxu0 0
        %757 = vmatpush2.bf16.xpose.msra.mxu0 0
        %758 = vmatprep.subr.bf16.mxu0 0
        %759 = vmatpush2.bf16.xpose.msra.mxu0 0
        %760 = vmatprep.subr.bf16.mxu0 0
        %761 = vmatpush2.bf16.xpose.msra.mxu0 0
        %762 = vmatprep.mubr.bf16.mxu0 0
        %763 = vmatmul.mubr.bf16.gmra.mxu0 %v725
        %v764 = vpop.f32.mrf.mxu0
        %v765 = vadd.f32 0.0, %v764
        %v766 = vpop.f32.mrf.mxu0
        %v767 = vpop.f32.mrf.mxu0
        %v768 = vpop.f32.mrf.mxu0
        %769 = vdwg.mxu0
        %v770 = vsel %vm611, %v765, -inf
        %771 = vmax.xlane.f32.xlu0 %v770
        %v772 = vpop.xlane.xlu0 %771
        %v773 = vsub.f32 %v765, %v772
        %v774 = vmul.f32 %v773, 1.442695
        %v775 = vpow.pop %v774
        %v776 = vsel %vm611, %v775, 0.0
        %777 = vadd.xlane.f32.xlu0 %v776
        %v778 = vpop.xlane.xlu0 %777
        %v779 = vrcp.pop %v778
        %v780 = vmul.f32 %v775, %v779
        %v781 = vpack.c.bf16 %v780, %v780
        %783 = vrot.lane.b32.xlu0 %v606, 120
        %v784 = vpop.permute.xlu0 %783
        %v786 = vsel %vm611, %v781, 0
        %v789 = vsel %vm673, %v784, 0
        %791 = vmatprep.subr.bf16.mxu0 0
        %792 = vmatpush1.bf16.msra.mxu0 0
        %793 = vmatprep.subr.bf16.mxu0 0
        %794 = vmatpush1.bf16.msra.mxu0 0
        %795 = vmatprep.subr.bf16.mxu0 0
        %796 = vmatpush1.bf16.msra.mxu0 0
        %797 = vmatprep.subr.bf16.mxu0 0
        %798 = vmatpush1.bf16.msra.mxu0 0
        %799 = vmatprep.subr.bf16.mxu0 0
        %800 = vmatpush1.bf16.msra.mxu0 0
        %801 = vmatprep.subr.bf16.mxu0 0
        %802 = vmatpush1.bf16.msra.mxu0 0
        %803 = vmatprep.subr.bf16.mxu0 0
        %804 = vmatpush1.bf16.msra.mxu0 0
        %805 = vmatprep.subr.bf16.mxu0 0
        %806 = vmatpush1.bf16.msra.mxu0 %v789
        %807 = vmatprep.subr.bf16.mxu0 0
        %808 = vmatpush2.bf16.msra.mxu0 0
        %809 = vmatprep.subr.bf16.mxu0 0
        %810 = vmatpush2.bf16.msra.mxu0 0
        %811 = vmatprep.subr.bf16.mxu0 0
        %812 = vmatpush2.bf16.msra.mxu0 0
        %813 = vmatprep.subr.bf16.mxu0 0
        %814 = vmatpush2.bf16.msra.mxu0 0
        %815 = vmatprep.subr.bf16.mxu0 0
        %816 = vmatpush2.bf16.msra.mxu0 0
        %817 = vmatprep.subr.bf16.mxu0 0
        %818 = vmatpush2.bf16.msra.mxu0 0
        %819 = vmatprep.subr.bf16.mxu0 0
        %820 = vmatpush2.bf16.msra.mxu0 0
        %821 = vmatprep.subr.bf16.mxu0 0
        %822 = vmatpush2.bf16.msra.mxu0 0
        %823 = vmatprep.mubr.bf16.mxu0 0
        %824 = vmatmul.mubr.bf16.gmra.mxu0 %v786
        %v825 = vpop.f32.mrf.mxu0
        %v826 = vadd.f32 0.0, %v825
        %v827 = vpop.f32.mrf.mxu0
        %v828 = vpop.f32.mrf.mxu0
        %v829 = vpop.f32.mrf.mxu0
        %830 = vdwg.mxu0
        %v831 = vpack.c.bf16 %v826, %v826
        %v833 = vsel %vm611, %v831, 0
        %v836 = vsel %vm673, %v608, 0
        %838 = vmatprep.subr.bf16.mxu0 0
        %839 = vmatpush1.bf16.msra.mxu0 0
        %840 = vmatprep.subr.bf16.mxu0 0
        %841 = vmatpush1.bf16.msra.mxu0 0
        %842 = vmatprep.subr.bf16.mxu0 0
        %843 = vmatpush1.bf16.msra.mxu0 0
        %844 = vmatprep.subr.bf16.mxu0 0
        %845 = vmatpush1.bf16.msra.mxu0 0
        %846 = vmatprep.subr.bf16.mxu0 0
        %847 = vmatpush1.bf16.msra.mxu0 0
        %848 = vmatprep.subr.bf16.mxu0 0
        %849 = vmatpush1.bf16.msra.mxu0 0
        %850 = vmatprep.subr.bf16.mxu0 0
        %851 = vmatpush1.bf16.msra.mxu0 0
        %852 = vmatprep.subr.bf16.mxu0 0
        %853 = vmatpush1.bf16.msra.mxu0 %v836
        %854 = vmatprep.subr.bf16.mxu0 0
        %855 = vmatpush2.bf16.msra.mxu0 0
        %856 = vmatprep.subr.bf16.mxu0 0
        %857 = vmatpush2.bf16.msra.mxu0 0
        %858 = vmatprep.subr.bf16.mxu0 0
        %859 = vmatpush2.bf16.msra.mxu0 0
        %860 = vmatprep.subr.bf16.mxu0 0
        %861 = vmatpush2.bf16.msra.mxu0 0
        %862 = vmatprep.subr.bf16.mxu0 0
        %863 = vmatpush2.bf16.msra.mxu0 0
        %864 = vmatprep.subr.bf16.mxu0 0
        %865 = vmatpush2.bf16.msra.mxu0 0
        %866 = vmatprep.subr.bf16.mxu0 0
        %867 = vmatpush2.bf16.msra.mxu0 0
        %868 = vmatprep.subr.bf16.mxu0 0
        %869 = vmatpush2.bf16.msra.mxu0 0
        %870 = vmatprep.mubr.bf16.mxu0 0
        %871 = vmatmul.mubr.bf16.gmra.mxu0 %v833
        %v872 = vpop.f32.mrf.mxu0
        %v873 = vadd.f32 0.0, %v872
        %v874 = vpop.f32.mrf.mxu0
        %v875 = vpop.f32.mrf.mxu0
        %v876 = vpop.f32.mrf.mxu0
        %877 = vdwg.mxu0
        %v879 = vsel %vm611, %v717, 0
        %v882 = vsel %vm673, %v607, 0
        %884 = vmatprep.subr.bf16.mxu0 0
        %885 = vmatpush1.bf16.msra.mxu0 0
        %886 = vmatprep.subr.bf16.mxu0 0
        %887 = vmatpush1.bf16.msra.mxu0 0
        %888 = vmatprep.subr.bf16.mxu0 0
        %889 = vmatpush1.bf16.msra.mxu0 0
        %890 = vmatprep.subr.bf16.mxu0 0
        %891 = vmatpush1.bf16.msra.mxu0 0
        %892 = vmatprep.subr.bf16.mxu0 0
        %893 = vmatpush1.bf16.msra.mxu0 0
        %894 = vmatprep.subr.bf16.mxu0 0
        %895 = vmatpush1.bf16.msra.mxu0 0
        %896 = vmatprep.subr.bf16.mxu0 0
        %897 = vmatpush1.bf16.msra.mxu0 0
        %898 = vmatprep.subr.bf16.mxu0 0
        %899 = vmatpush1.bf16.msra.mxu0 %v882
        %900 = vmatprep.subr.bf16.mxu0 0
        %901 = vmatpush2.bf16.msra.mxu0 0
        %902 = vmatprep.subr.bf16.mxu0 0
        %903 = vmatpush2.bf16.msra.mxu0 0
        %904 = vmatprep.subr.bf16.mxu0 0
        %905 = vmatpush2.bf16.msra.mxu0 0
        %906 = vmatprep.subr.bf16.mxu0 0
        %907 = vmatpush2.bf16.msra.mxu0 0
        %908 = vmatprep.subr.bf16.mxu0 0
        %909 = vmatpush2.bf16.msra.mxu0 0
        %910 = vmatprep.subr.bf16.mxu0 0
        %911 = vmatpush2.bf16.msra.mxu0 0
        %912 = vmatprep.subr.bf16.mxu0 0
        %913 = vmatpush2.bf16.msra.mxu0 0
        %914 = vmatprep.subr.bf16.mxu0 0
        %915 = vmatpush2.bf16.msra.mxu0 0
        %916 = vmatprep.mubr.bf16.mxu0 0
        %917 = vmatmul.mubr.bf16.gmra.mxu0 %v879
        %v918 = vpop.f32.mrf.mxu0
        %v919 = vadd.f32 %v873, %v918
        %v920 = vpop.f32.mrf.mxu0
        %v921 = vpop.f32.mrf.mxu0
        %v922 = vpop.f32.mrf.mxu0
        %923 = vdwg.mxu0
        %924 = vrot.lane.b32.xlu0 %v464, 112
        %v925 = vpop.permute.xlu0 %924
        %926 = vrot.lane.b32.xlu0 %v535, 112
        %v927 = vpop.permute.xlu0 %926
        %v929 = vsel %vm611, %v925, 0
        %v932 = vsel %vm611, %v927, 0
        %934 = vmatprep.subr.bf16.mxu0 0
        %935 = vmatpush1.bf16.xpose.msra.mxu0 0
        %936 = vmatprep.subr.bf16.mxu0 0
        %937 = vmatpush1.bf16.xpose.msra.mxu0 0
        %938 = vmatprep.subr.bf16.mxu0 0
        %939 = vmatpush1.bf16.xpose.msra.mxu0 0
        %940 = vmatprep.subr.bf16.mxu0 0
        %941 = vmatpush1.bf16.xpose.msra.mxu0 0
        %942 = vmatprep.subr.bf16.mxu0 0
        %943 = vmatpush1.bf16.xpose.msra.mxu0 0
        %944 = vmatprep.subr.bf16.mxu0 0
        %945 = vmatpush1.bf16.xpose.msra.mxu0 0
        %946 = vmatprep.subr.bf16.mxu0 0
        %947 = vmatpush1.bf16.xpose.msra.mxu0 0
        %948 = vmatprep.subr.bf16.mxu0 0
        %949 = vmatpush1.bf16.xpose.msra.mxu0 %v932
        %950 = vmatprep.subr.bf16.mxu0 0
        %951 = vmatpush2.bf16.xpose.msra.mxu0 0
        %952 = vmatprep.subr.bf16.mxu0 0
        %953 = vmatpush2.bf16.xpose.msra.mxu0 0
        %954 = vmatprep.subr.bf16.mxu0 0
        %955 = vmatpush2.bf16.xpose.msra.mxu0 0
        %956 = vmatprep.subr.bf16.mxu0 0
        %957 = vmatpush2.bf16.xpose.msra.mxu0 0
        %958 = vmatprep.subr.bf16.mxu0 0
        %959 = vmatpush2.bf16.xpose.msra.mxu0 0
        %960 = vmatprep.subr.bf16.mxu0 0
        %961 = vmatpush2.bf16.xpose.msra.mxu0 0
        %962 = vmatprep.subr.bf16.mxu0 0
        %963 = vmatpush2.bf16.xpose.msra.mxu0 0
        %964 = vmatprep.subr.bf16.mxu0 0
        %965 = vmatpush2.bf16.xpose.msra.mxu0 0
        %966 = vmatprep.mubr.bf16.mxu0 0
        %967 = vmatmul.mubr.bf16.gmra.mxu0 %v929
        %v968 = vpop.f32.mrf.mxu0
        %v969 = vadd.f32 0.0, %v968
        %v970 = vpop.f32.mrf.mxu0
        %v971 = vpop.f32.mrf.mxu0
        %v972 = vpop.f32.mrf.mxu0
        %973 = vdwg.mxu0
        %v974 = vsel %vm611, %v969, -inf
        %975 = vmax.xlane.f32.xlu0 %v974
        %v976 = vpop.xlane.xlu0 %975
        %v977 = vsub.f32 %v969, %v976
        %v978 = vmul.f32 %v977, 1.442695
        %v979 = vpow.pop %v978
        %v980 = vsel %vm611, %v979, 0.0
        %981 = vadd.xlane.f32.xlu0 %v980
        %v982 = vpop.xlane.xlu0 %981
        %v983 = vrcp.pop %v982
        %v984 = vmul.f32 %v979, %v983
        %v985 = vpack.c.bf16 %v984, %v984
        %986 = vrot.lane.b32.xlu0 %v606, 112
        %v987 = vpop.permute.xlu0 %986
        %v989 = vsel %vm611, %v985, 0
        %v992 = vsel %vm673, %v987, 0
        %994 = vmatprep.subr.bf16.mxu0 0
        %995 = vmatpush1.bf16.msra.mxu0 0
        %996 = vmatprep.subr.bf16.mxu0 0
        %997 = vmatpush1.bf16.msra.mxu0 0
        %998 = vmatprep.subr.bf16.mxu0 0
        %999 = vmatpush1.bf16.msra.mxu0 0
        %1000 = vmatprep.subr.bf16.mxu0 0
        %1001 = vmatpush1.bf16.msra.mxu0 0
        %1002 = vmatprep.subr.bf16.mxu0 0
        %1003 = vmatpush1.bf16.msra.mxu0 0
        %1004 = vmatprep.subr.bf16.mxu0 0
        %1005 = vmatpush1.bf16.msra.mxu0 0
        %1006 = vmatprep.subr.bf16.mxu0 0
        %1007 = vmatpush1.bf16.msra.mxu0 0
        %1008 = vmatprep.subr.bf16.mxu0 0
        %1009 = vmatpush1.bf16.msra.mxu0 %v992
        %1010 = vmatprep.subr.bf16.mxu0 0
        %1011 = vmatpush2.bf16.msra.mxu0 0
        %1012 = vmatprep.subr.bf16.mxu0 0
        %1013 = vmatpush2.bf16.msra.mxu0 0
        %1014 = vmatprep.subr.bf16.mxu0 0
        %1015 = vmatpush2.bf16.msra.mxu0 0
        %1016 = vmatprep.subr.bf16.mxu0 0
        %1017 = vmatpush2.bf16.msra.mxu0 0
        %1018 = vmatprep.subr.bf16.mxu0 0
        %1019 = vmatpush2.bf16.msra.mxu0 0
        %1020 = vmatprep.subr.bf16.mxu0 0
        %1021 = vmatpush2.bf16.msra.mxu0 0
        %1022 = vmatprep.subr.bf16.mxu0 0
        %1023 = vmatpush2.bf16.msra.mxu0 0
        %1024 = vmatprep.subr.bf16.mxu0 0
        %1025 = vmatpush2.bf16.msra.mxu0 0
        %1026 = vmatprep.mubr.bf16.mxu0 0
        %1027 = vmatmul.mubr.bf16.gmra.mxu0 %v989
        %v1028 = vpop.f32.mrf.mxu0
        %v1029 = vadd.f32 0.0, %v1028
        %v1030 = vpop.f32.mrf.mxu0
        %v1031 = vpop.f32.mrf.mxu0
        %v1032 = vpop.f32.mrf.mxu0
        %1033 = vdwg.mxu0
        %v1034 = vpack.c.bf16 %v1029, %v1029
        %v1036 = vsel %vm611, %v1034, 0
        %v1039 = vsel %vm673, %v609, 0
        %1041 = vmatprep.subr.bf16.mxu0 0
        %1042 = vmatpush1.bf16.msra.mxu0 0
        %1043 = vmatprep.subr.bf16.mxu0 0
        %1044 = vmatpush1.bf16.msra.mxu0 0
        %1045 = vmatprep.subr.bf16.mxu0 0
        %1046 = vmatpush1.bf16.msra.mxu0 0
        %1047 = vmatprep.subr.bf16.mxu0 0
        %1048 = vmatpush1.bf16.msra.mxu0 0
        %1049 = vmatprep.subr.bf16.mxu0 0
        %1050 = vmatpush1.bf16.msra.mxu0 0
        %1051 = vmatprep.subr.bf16.mxu0 0
        %1052 = vmatpush1.bf16.msra.mxu0 0
        %1053 = vmatprep.subr.bf16.mxu0 0
        %1054 = vmatpush1.bf16.msra.mxu0 0
        %1055 = vmatprep.subr.bf16.mxu0 0
        %1056 = vmatpush1.bf16.msra.mxu0 %v1039
        %1057 = vmatprep.subr.bf16.mxu0 0
        %1058 = vmatpush2.bf16.msra.mxu0 0
        %1059 = vmatprep.subr.bf16.mxu0 0
        %1060 = vmatpush2.bf16.msra.mxu0 0
        %1061 = vmatprep.subr.bf16.mxu0 0
        %1062 = vmatpush2.bf16.msra.mxu0 0
        %1063 = vmatprep.subr.bf16.mxu0 0
        %1064 = vmatpush2.bf16.msra.mxu0 0
        %1065 = vmatprep.subr.bf16.mxu0 0
        %1066 = vmatpush2.bf16.msra.mxu0 0
        %1067 = vmatprep.subr.bf16.mxu0 0
        %1068 = vmatpush2.bf16.msra.mxu0 0
        %1069 = vmatprep.subr.bf16.mxu0 0
        %1070 = vmatpush2.bf16.msra.mxu0 0
        %1071 = vmatprep.subr.bf16.mxu0 0
        %1072 = vmatpush2.bf16.msra.mxu0 0
        %1073 = vmatprep.mubr.bf16.mxu0 0
        %1074 = vmatmul.mubr.bf16.gmra.mxu0 %v1036
        %v1075 = vpop.f32.mrf.mxu0
        %v1076 = vadd.f32 0.0, %v1075
        %v1077 = vpop.f32.mrf.mxu0
        %v1078 = vpop.f32.mrf.mxu0
        %v1079 = vpop.f32.mrf.mxu0
        %1080 = vdwg.mxu0
        %v1081 = vadd.f32 %v919, %v1076
        %1082 = vrot.lane.b32.xlu0 %v464, 104
        %v1083 = vpop.permute.xlu0 %1082
        %1084 = vrot.lane.b32.xlu0 %v535, 104
        %v1085 = vpop.permute.xlu0 %1084
        %v1087 = vsel %vm611, %v1083, 0
        %v1090 = vsel %vm611, %v1085, 0
        %1092 = vmatprep.subr.bf16.mxu0 0
        %1093 = vmatpush1.bf16.xpose.msra.mxu0 0
        %1094 = vmatprep.subr.bf16.mxu0 0
        %1095 = vmatpush1.bf16.xpose.msra.mxu0 0
        %1096 = vmatprep.subr.bf16.mxu0 0
        %1097 = vmatpush1.bf16.xpose.msra.mxu0 0
        %1098 = vmatprep.subr.bf16.mxu0 0
        %1099 = vmatpush1.bf16.xpose.msra.mxu0 0
        %1100 = vmatprep.subr.bf16.mxu0 0
        %1101 = vmatpush1.bf16.xpose.msra.mxu0 0
        %1102 = vmatprep.subr.bf16.mxu0 0
        %1103 = vmatpush1.bf16.xpose.msra.mxu0 0
        %1104 = vmatprep.subr.bf16.mxu0 0
        %1105 = vmatpush1.bf16.xpose.msra.mxu0 0
        %1106 = vmatprep.subr.bf16.mxu0 0
        %1107 = vmatpush1.bf16.xpose.msra.mxu0 %v1090
        %1108 = vmatprep.subr.bf16.mxu0 0
        %1109 = vmatpush2.bf16.xpose.msra.mxu0 0
        %1110 = vmatprep.subr.bf16.mxu0 0
        %1111 = vmatpush2.bf16.xpose.msra.mxu0 0
        %1112 = vmatprep.subr.bf16.mxu0 0
        %1113 = vmatpush2.bf16.xpose.msra.mxu0 0
        %1114 = vmatprep.subr.bf16.mxu0 0
        %1115 = vmatpush2.bf16.xpose.msra.mxu0 0
        %1116 = vmatprep.subr.bf16.mxu0 0
        %1117 = vmatpush2.bf16.xpose.msra.mxu0 0
        %1118 = vmatprep.subr.bf16.mxu0 0
        %1119 = vmatpush2.bf16.xpose.msra.mxu0 0
        %1120 = vmatprep.subr.bf16.mxu0 0
        %1121 = vmatpush2.bf16.xpose.msra.mxu0 0
        %1122 = vmatprep.subr.bf16.mxu0 0
        %1123 = vmatpush2.bf16.xpose.msra.mxu0 0
        %1124 = vmatprep.mubr.bf16.mxu0 0
        %1125 = vmatmul.mubr.bf16.gmra.mxu0 %v1087
        %v1126 = vpop.f32.mrf.mxu0
        %v1127 = vadd.f32 0.0, %v1126
        %v1128 = vpop.f32.mrf.mxu0
        %v1129 = vpop.f32.mrf.mxu0
        %v1130 = vpop.f32.mrf.mxu0
        %1131 = vdwg.mxu0
        %v1132 = vsel %vm611, %v1127, -inf
        %1133 = vmax.xlane.f32.xlu0 %v1132
        %v1134 = vpop.xlane.xlu0 %1133
        %v1135 = vsub.f32 %v1127, %v1134
        %v1136 = vmul.f32 %v1135, 1.442695
        %v1137 = vpow.pop %v1136
        %v1138 = vsel %vm611, %v1137, 0.0
        %1139 = vadd.xlane.f32.xlu0 %v1138
        %v1140 = vpop.xlane.xlu0 %1139
        %v1141 = vrcp.pop %v1140
        %v1142 = vmul.f32 %v1137, %v1141
        %v1143 = vpack.c.bf16 %v1142, %v1142
        %1144 = vrot.lane.b32.xlu0 %v606, 104
        %v1145 = vpop.permute.xlu0 %1144
        %v1147 = vsel %vm611, %v1143, 0
        %v1150 = vsel %vm673, %v1145, 0
        %1152 = vmatprep.subr.bf16.mxu0 0
        %1153 = vmatpush1.bf16.msra.mxu0 0
        %1154 = vmatprep.subr.bf16.mxu0 0
        %1155 = vmatpush1.bf16.msra.mxu0 0
        %1156 = vmatprep.subr.bf16.mxu0 0
        %1157 = vmatpush1.bf16.msra.mxu0 0
        %1158 = vmatprep.subr.bf16.mxu0 0
        %1159 = vmatpush1.bf16.msra.mxu0 0
        %1160 = vmatprep.subr.bf16.mxu0 0
        %1161 = vmatpush1.bf16.msra.mxu0 0
        %1162 = vmatprep.subr.bf16.mxu0 0
        %1163 = vmatpush1.bf16.msra.mxu0 0
        %1164 = vmatprep.subr.bf16.mxu0 0
        %1165 = vmatpush1.bf16.msra.mxu0 0
        %1166 = vmatprep.subr.bf16.mxu0 0
        %1167 = vmatpush1.bf16.msra.mxu0 %v1150
        %1168 = vmatprep.subr.bf16.mxu0 0
        %1169 = vmatpush2.bf16.msra.mxu0 0
        %1170 = vmatprep.subr.bf16.mxu0 0
        %1171 = vmatpush2.bf16.msra.mxu0 0
        %1172 = vmatprep.subr.bf16.mxu0 0
        %1173 = vmatpush2.bf16.msra.mxu0 0
        %1174 = vmatprep.subr.bf16.mxu0 0
        %1175 = vmatpush2.bf16.msra.mxu0 0
        %1176 = vmatprep.subr.bf16.mxu0 0
        %1177 = vmatpush2.bf16.msra.mxu0 0
        %1178 = vmatprep.subr.bf16.mxu0 0
        %1179 = vmatpush2.bf16.msra.mxu0 0
        %1180 = vmatprep.subr.bf16.mxu0 0
        %1181 = vmatpush2.bf16.msra.mxu0 0
        %1182 = vmatprep.subr.bf16.mxu0 0
        %1183 = vmatpush2.bf16.msra.mxu0 0
        %1184 = vmatprep.mubr.bf16.mxu0 0
        %1185 = vmatmul.mubr.bf16.gmra.mxu0 %v1147
        %v1186 = vpop.f32.mrf.mxu0
        %v1187 = vadd.f32 0.0, %v1186
        %v1188 = vpop.f32.mrf.mxu0
        %v1189 = vpop.f32.mrf.mxu0
        %v1190 = vpop.f32.mrf.mxu0
        %1191 = vdwg.mxu0
        %v1192 = vpack.c.bf16 %v1187, %v1187
        %v1194 = vsel %vm611, %v1192, 0
        %v1197 = vsel %vm673, %v610, 0
        %1199 = vmatprep.subr.bf16.mxu0 0
        %1200 = vmatpush1.bf16.msra.mxu0 0
        %1201 = vmatprep.subr.bf16.mxu0 0
        %1202 = vmatpush1.bf16.msra.mxu0 0
        %1203 = vmatprep.subr.bf16.mxu0 0
        %1204 = vmatpush1.bf16.msra.mxu0 0
        %1205 = vmatprep.subr.bf16.mxu0 0
        %1206 = vmatpush1.bf16.msra.mxu0 0
        %1207 = vmatprep.subr.bf16.mxu0 0
        %1208 = vmatpush1.bf16.msra.mxu0 0
        %1209 = vmatprep.subr.bf16.mxu0 0
        %1210 = vmatpush1.bf16.msra.mxu0 0
        %1211 = vmatprep.subr.bf16.mxu0 0
        %1212 = vmatpush1.bf16.msra.mxu0 0
        %1213 = vmatprep.subr.bf16.mxu0 0
        %1214 = vmatpush1.bf16.msra.mxu0 %v1197
        %1215 = vmatprep.subr.bf16.mxu0 0
        %1216 = vmatpush2.bf16.msra.mxu0 0
        %1217 = vmatprep.subr.bf16.mxu0 0
        %1218 = vmatpush2.bf16.msra.mxu0 0
        %1219 = vmatprep.subr.bf16.mxu0 0
        %1220 = vmatpush2.bf16.msra.mxu0 0
        %1221 = vmatprep.subr.bf16.mxu0 0
        %1222 = vmatpush2.bf16.msra.mxu0 0
        %1223 = vmatprep.subr.bf16.mxu0 0
        %1224 = vmatpush2.bf16.msra.mxu0 0
        %1225 = vmatprep.subr.bf16.mxu0 0
        %1226 = vmatpush2.bf16.msra.mxu0 0
        %1227 = vmatprep.subr.bf16.mxu0 0
        %1228 = vmatpush2.bf16.msra.mxu0 0
        %1229 = vmatprep.subr.bf16.mxu0 0
        %1230 = vmatpush2.bf16.msra.mxu0 0
        %1231 = vmatprep.mubr.bf16.mxu0 0
        %1232 = vmatmul.mubr.bf16.gmra.mxu0 %v1194
        %v1233 = vpop.f32.mrf.mxu0
        %v1234 = vadd.f32 0.0, %v1233
        %v1235 = vpop.f32.mrf.mxu0
        %v1236 = vpop.f32.mrf.mxu0
        %v1237 = vpop.f32.mrf.mxu0
        %1238 = vdwg.mxu0
        %v1239 = vadd.f32 %v1081, %v1234
        %v1240 = vld [vmem:[%s6] sm:$0x1]
        %v1242 = vlaneseq
        %v1243 = vshrl.u32 %v1242, 7
        %v1244 = vsub.s32 0, %v1243
        %v1245 = vrot.slane %v1240, %v1244
        %v1247 = vadd.f32 %v1239, %v1245
        %1248 = vst.msk [vmem:[%s393] sm:$0xff] %vm420, %v1247
        %s1249 = sand.u32 %s198, 1
        %s1250 = scalar_lea.sflag [#allocation4], %s1249
        %s1251 = sand.u32 %s198, 1
        %s1252 = smul.addr %s1251, 8
        %s1253 = scalar_lea.vmem [#allocation11], %s1252
        // Predicated region
        $region69: #{tpu_custom_call.1} parent=47 // pred_check
          %p1254 = pneg %p208
        $region70: #{tpu_custom_call.1} parent=47 // pred_check_branch
          %1256 = sbr.rel (%p1254) target = $region72
        $region71: #{tpu_custom_call.1} parent=47 // pred_region
          %s1258 = ssub.s32 128, 128
          %1259 = vsyncadd %s1250, %s1258
          %s1260 = smul.addr %s28, 128
          %s1261 = scalar_lea.hbm %s7, %s1260
          %s1263 = sshll.u32 %s1253, 4
          %s1264 = int_to_ptr.vmem [resolvable:$true] %s1263
          %1266 = dma.vmem_to_hbm [thread:$0]  %s1264, 128, %s1261, %s1250
        $region72: #{tpu_custom_call.1} parent=47 // pred_fallthru
          _
      $region48: #{tpu_custom_call.1} parent=5 // pred_fallthru
        _
      %p1267 = scmp.le.s32.totalorder 2, %s23
      // Predicated region
      $region73: #{tpu_custom_call.1} parent=5 // pred_check
        %p1268 = pneg %p1267
      $region74: #{tpu_custom_call.1} parent=5 // pred_check_branch
        %1270 = sbr.rel (%p1268) target = $region76
      $region75: #{tpu_custom_call.1} parent=5 // pred_region
        %s1271 = ssub.s32 %s23, 2
        // Predicated region
        $region77: #{tpu_custom_call.1} parent=75 // pred_check
          %p1272 = pneg %p214
        $region78: #{tpu_custom_call.1} parent=75 // pred_check_branch
          %1274 = sbr.rel (%p1272) target = $region80
        $region79: #{tpu_custom_call.1} parent=75 // pred_region
          %s1275 = sand.u32 %s199, 1
          %s1276 = scalar_lea.sflag [#allocation4], %s1275
          %s1277 = sand.u32 %s199, 1
          %s1278 = smul.addr %s1277, 8
          %s1279 = scalar_lea.vmem [#allocation11], %s1278
          %1280 = dma.done %s1276, 128
        $region80: #{tpu_custom_call.1} parent=75 // pred_fallthru
          _
      $region76: #{tpu_custom_call.1} parent=5 // pred_fallthru
        _
    $region6: #{tpu_custom_call.1} parent=1 // loop_footer
      %s27 = sadd.s32 1, %s23
    $region7: #{tpu_custom_call.1} parent=1 // loop_footer_branch
      %22 = sbr.rel target = $region3
    $region8: #{tpu_custom_call.1} parent=1 // loop_exit
      _
    %1281 = vsyncpa [#allocation3], 1
    %s1282 = scalar_lea.sflag [#allocation3], 1
    %1283 = vsyncpa %s1282, 1
    %1284 = vsyncpa [#allocation6], 1
    %s1285 = scalar_lea.sflag [#allocation6], 1
    %1286 = vsyncpa %s1285, 1
    %1287 = vsyncpa [#allocation9], 1
    %1288 = vsyncpa [#allocation4], 1
    %s1289 = scalar_lea.sflag [#allocation4], 1
    %1290 = vsyncpa %s1289, 1

</llo_original>
